<compile_context>
chip_gen: v7x
topology: tpu7x:2x2x1
jax: 0.10.0
libtpu: 0.0.40
codegen_flags: <defaults>
</compile_context>

<pallas_src>
import functools

import jax
import jax.numpy as jnp
from jax.experimental import pallas as pl
from jax.experimental.pallas import tpu as pltpu


def _drnn_kernel(n, bp, t,
                 x_ref,        # (T*Bp, 2N) bf16  time-major stacked-real frames
                 a_ih_ref,     # (2N, 2N)   bf16  (1-fuse) * ReadIn @ HiddenForward
                 a_ihro_ref,   # (2N, 2N)   bf16  A_ih @ ReadOut  (last frame only)
                 a_mh_ref,     # (2N, 2N)   bf16  fuse * Memory @ HiddenForward
                 a_mhro_ref,   # (2N, 2N)   bf16  A_mh @ ReadOut  (last step only)
                 out_ref):     # (Bp, N)    f32   detector intensity |o|^2
    f32 = jnp.float32
    bf16 = jnp.bfloat16
    x = x_ref[...]                                           # (T*Bp, 2N) bf16

    # Prologue (throughput work): read-in projection of all frames.
    # Frames 0..T-2 go through A_ih; the last frame goes straight through
    # A_ih @ A_ro, which removes one dependent matmul from the chain below.
    i_last = jnp.dot(x[(t - 1) * bp:, :], a_ihro_ref[...],
                     preferred_element_type=f32)             # (Bp, 2N) f32

    if t >= 2:
        i_head = jnp.dot(x[:(t - 1) * bp, :], a_ih_ref[...],
                         preferred_element_type=f32)         # ((T-1)*Bp, 2N) f32
        i_head = i_head.reshape(t - 1, bp, 2 * n)            # tile-aligned [f] index
        a_mh = a_mh_ref[...]                                 # hoisted, VMEM resident

        # Serial recurrence (latency-bound): h_f = h_{f-1} @ A_mh + i'_f, h_{-1}=0.
        # T is a small compile-time constant -> fully unrolled static loop.
        h = i_head[0]                                        # (Bp, 2N) f32
        for f in range(1, t - 1):
            h = (jnp.dot(h.astype(bf16), a_mh, preferred_element_type=f32)
                 + i_head[f])
        # Final step with the read-out operator folded in.
        o = (jnp.dot(h.astype(bf16), a_mhro_ref[...], preferred_element_type=f32)
             + i_last)
    else:
        o = i_last                                           # T == 1: o = x_0 @ A_ih_ro

    # Detector: per-pixel intensity |o|^2 (f32 epilogue).
    o_r = o[:, :n]
    o_i = o[:, n:]
    # TODO(synk): Detector modeled as per-pixel intensity |field|^2; detector
    # region-integration / segmentation heads of svetlanna are not modeled.
    out_ref[...] = o_r * o_r + o_i * o_i


def _stacked_real(w):
    # complex (N, N) -> real (2N, 2N) block operator for row-vector apply:
    #   [yr | yi] = [xr | xi] @ [[Wr, Wi], [-Wi, Wr]]
    wr = jnp.real(w).astype(jnp.float32)
    wi = jnp.imag(w).astype(jnp.float32)
    return jnp.concatenate(
        [jnp.concatenate([wr, wi], axis=1),
         jnp.concatenate([-wi, wr], axis=1)], axis=0)


def prepare_operators(weights, fusing_coeff):
    """Fuse + stack the optical operators; run once per weight set and reuse."""
    (w_in_r, w_in_i, w_mem_r, w_mem_i,
     w_hf_r, w_hf_i, w_ro_r, w_ro_i) = weights
    w_in = (w_in_r + 1j * w_in_i).astype(jnp.complex64)
    w_mem = (w_mem_r + 1j * w_mem_i).astype(jnp.complex64)
    w_hf = (w_hf_r + 1j * w_hf_i).astype(jnp.complex64)
    w_ro = (w_ro_r + 1j * w_ro_i).astype(jnp.complex64)

    w_ih = (1.0 - fusing_coeff) * (w_in @ w_hf)   # read-in folded through hidden-forward
    w_mh = fusing_coeff * (w_mem @ w_hf)          # memory  folded through hidden-forward
    w_ihro = w_ih @ w_ro                          # last-frame read-in + read-out
    w_mhro = w_mh @ w_ro                          # last-step memory + read-out

    # bf16 MXU operands; f32 accumulation happens inside the kernel's dots.
    return tuple(_stacked_real(w).astype(jnp.bfloat16)
                 for w in (w_ih, w_ihro, w_mh, w_mhro))


@jax.jit
def diffractive_rnn_forward(x_complex, operators):
    """x_complex: (B, T, H, W) complex64 wavefront subsequence."""
    a_ih, a_ihro, a_mh, a_mhro = operators
    B, T, H, W = x_complex.shape
    N = H * W
    # TODO(synk): for H*W not divisible by 128, pad N up to a lane multiple
    # before the detector split; not needed for the 16x16 demo (N = 256).
    assert (2 * N) % 128 == 0 and a_ih.shape == (2 * N, 2 * N)

    Bp = ((B + 7) // 8) * 8        # pad batch to a full sublane tile (8 rows)

    # (B,T,H,W) complex -> time-major stacked-real (T*Bp, 2N), bf16.
    xr = jnp.real(x_complex).reshape(B, T, N)
    xi = jnp.imag(x_complex).reshape(B, T, N)
    x_stack = jnp.concatenate([xr, xi], axis=-1)               # (B, T, 2N)
    x_stack = jnp.transpose(x_stack, (1, 0, 2))                # (T, B, 2N)
    x_stack = jnp.pad(x_stack, ((0, 0), (0, Bp - B), (0, 0)))  # (T, Bp, 2N)
    x_stack = x_stack.reshape(T * Bp, 2 * N).astype(jnp.bfloat16)

    # Single-buffered VMEM footprint (no grid -> nothing is double-buffered).
    op_bytes = 4 * (2 * N) * (2 * N) * 2                 # four bf16 operators
    act_bytes = T * Bp * 2 * N * (2 + 4 + 4)             # frames (bf16) + f32 temps
    vmem_limit = min(2 * (op_bytes + act_bytes) + (8 << 20), 64 << 20)

    kernel = functools.partial(_drnn_kernel, N, Bp, T)
    vmem_spec = pl.BlockSpec(memory_space=pltpu.MemorySpace.VMEM)

    out = pl.pallas_call(
        kernel,
        out_shape=jax.ShapeDtypeStruct((Bp, N), jnp.float32),
        in_specs=[vmem_spec] * 5,
        out_specs=vmem_spec,
        compiler_params=pltpu.CompilerParams(vmem_limit_bytes=vmem_limit),
    )(x_stack, a_ih, a_ihro, a_mh, a_mhro)
    # TODO(synk): for B >= 16 on v7x, add a leading 'parallel' batch-tile grid
    # axis so both TensorCores each run an independent recurrence.

    return out[:B].reshape(B, H, W)


def reference_forward(x_complex, weights, fusing_coeff):
    """Plain-JAX reference with the ORIGINAL (unfused) module semantics."""
    B, T, H, W = x_complex.shape
    N = H * W
    (w_in_r, w_in_i, w_mem_r, w_mem_i,
     w_hf_r, w_hf_i, w_ro_r, w_ro_i) = weights
    w_in = (w_in_r + 1j * w_in_i).astype(jnp.complex64)
    w_mem = (w_mem_r + 1j * w_mem_i).astype(jnp.complex64)
    w_hf = (w_hf_r + 1j * w_hf_i).astype(jnp.complex64)
    w_ro = (w_ro_r + 1j * w_ro_i).astype(jnp.complex64)

    x = x_complex.reshape(B, T, N)
    h = jnp.zeros((B, N), dtype=jnp.complex64)
    for t in range(T):
        i_t = x[:, t, :] @ w_in
        m_t = h @ w_mem
        h = fusing_coeff * m_t + (1.0 - fusing_coeff) * i_t
        h = h @ w_hf
    o = h @ w_ro
    return (jnp.abs(o) ** 2).reshape(B, H, W)


def make_weights(key, n):
    """Deterministic complex operators standing in for the optical stacks."""
    keys = jax.random.split(key, 8)
    scale = 1.0 / jnp.sqrt(jnp.float32(2 * n))   # roughly norm-preserving ops
    return tuple(
        (jax.random.normal(k, (n, n), dtype=jnp.float32) * scale)
        for k in keys
    )


if __name__ == "__main__":
    B, T, H, W = 2, 8, 16, 16       # batch, sequence_len, H, W
    N = H * W
    fusing_coeff = 0.4

    key = jax.random.PRNGKey(0)
    k_x_r, k_x_i, k_w = jax.random.split(key, 3)

    x = (jax.random.normal(k_x_r, (B, T, H, W), dtype=jnp.float32)
         + 1j * jax.random.normal(k_x_i, (B, T, H, W), dtype=jnp.float32)
         ).astype(jnp.complex64)

    weights = make_weights(k_w, N)

    operators = prepare_operators(weights, fusing_coeff)   # once per weight set
    out = diffractive_rnn_forward(x, operators)
    out = jax.block_until_ready(out)

    ref = reference_forward(x, weights, fusing_coeff)
    assert out.shape == (B, H, W)
    # Operator pre-fusion + bf16 MXU operands (f32 accumulation) reorder and
    # round float ops vs. the unfused complex64 reference -> relaxed tolerance.
    assert jnp.allclose(out, ref, rtol=5e-2, atol=5e-2), "mismatch vs reference"

    print("KERNEL_OK")
</pallas_src>

<mosaic_0001>
module attributes {stable_mosaic.version = 11 : i64} {
  func.func @_drnn_kernel(%arg0: memref<64x512xbf16, #tpu.memory_space<vmem>>, %arg1: memref<512x512xbf16, #tpu.memory_space<vmem>>, %arg2: memref<512x512xbf16, #tpu.memory_space<vmem>>, %arg3: memref<512x512xbf16, #tpu.memory_space<vmem>>, %arg4: memref<512x512xbf16, #tpu.memory_space<vmem>>, %arg5: memref<8x256xf32, #tpu.memory_space<vmem>>) attributes {dimension_semantics = [], scalar_prefetch = 0 : i64, scratch_operands = 0 : i64, tpu.core_type = #tpu.core_type<tc>} {
    %c0 = arith.constant 0 : index
    %c0_0 = arith.constant 0 : index
    %0 = vector.load %arg0[%c0, %c0_0] : memref<64x512xbf16, #tpu.memory_space<vmem>>, vector<64x512xbf16>
    %1 = vector.extract_strided_slice %0 {offsets = [56, 0], sizes = [8, 512], strides = [1, 1]} : vector<64x512xbf16> to vector<8x512xbf16>
    %c0_1 = arith.constant 0 : index
    %c0_2 = arith.constant 0 : index
    %2 = vector.load %arg2[%c0_1, %c0_2] : memref<512x512xbf16, #tpu.memory_space<vmem>>, vector<512x512xbf16>
    %cst = arith.constant dense<0.000000e+00> : vector<8x512xf32>
    %3 = tpu.matmul %1, %2, %cst {dimension_numbers = #tpu.dot_dimension_numbers<[1], [0], [0], [1], [0, 0, 1, 1], [], []>} : vector<8x512xbf16>, vector<512x512xbf16>, vector<8x512xf32> -> vector<8x512xf32>
    %4 = vector.extract_strided_slice %0 {offsets = [0, 0], sizes = [56, 512], strides = [1, 1]} : vector<64x512xbf16> to vector<56x512xbf16>
    %c0_3 = arith.constant 0 : index
    %c0_4 = arith.constant 0 : index
    %5 = vector.load %arg1[%c0_3, %c0_4] : memref<512x512xbf16, #tpu.memory_space<vmem>>, vector<512x512xbf16>
    %cst_5 = arith.constant dense<0.000000e+00> : vector<56x512xf32>
    %6 = tpu.matmul %4, %5, %cst_5 {dimension_numbers = #tpu.dot_dimension_numbers<[1], [0], [0], [1], [0, 0, 1, 1], [], []>} : vector<56x512xbf16>, vector<512x512xbf16>, vector<56x512xf32> -> vector<56x512xf32>
    %7 = vector.shape_cast %6 : vector<56x512xf32> to vector<7x8x512xf32>
    %c0_6 = arith.constant 0 : index
    %c0_7 = arith.constant 0 : index
    %8 = vector.load %arg3[%c0_6, %c0_7] : memref<512x512xbf16, #tpu.memory_space<vmem>>, vector<512x512xbf16>
    %9 = vector.extract_strided_slice %7 {offsets = [0, 0, 0], sizes = [1, 8, 512], strides = [1, 1, 1]} : vector<7x8x512xf32> to vector<1x8x512xf32>
    %10 = vector.shape_cast %9 : vector<1x8x512xf32> to vector<8x512xf32>
    %11 = arith.truncf %10 : vector<8x512xf32> to vector<8x512xbf16>
    %cst_8 = arith.constant dense<0.000000e+00> : vector<8x512xf32>
    %12 = tpu.matmul %11, %8, %cst_8 {dimension_numbers = #tpu.dot_dimension_numbers<[1], [0], [0], [1], [0, 0, 1, 1], [], []>} : vector<8x512xbf16>, vector<512x512xbf16>, vector<8x512xf32> -> vector<8x512xf32>
    %13 = vector.extract_strided_slice %7 {offsets = [1, 0, 0], sizes = [1, 8, 512], strides = [1, 1, 1]} : vector<7x8x512xf32> to vector<1x8x512xf32>
    %14 = vector.shape_cast %13 : vector<1x8x512xf32> to vector<8x512xf32>
    %15 = arith.addf %12, %14 : vector<8x512xf32>
    %16 = arith.truncf %15 : vector<8x512xf32> to vector<8x512xbf16>
    %cst_9 = arith.constant dense<0.000000e+00> : vector<8x512xf32>
    %17 = tpu.matmul %16, %8, %cst_9 {dimension_numbers = #tpu.dot_dimension_numbers<[1], [0], [0], [1], [0, 0, 1, 1], [], []>} : vector<8x512xbf16>, vector<512x512xbf16>, vector<8x512xf32> -> vector<8x512xf32>
    %18 = vector.extract_strided_slice %7 {offsets = [2, 0, 0], sizes = [1, 8, 512], strides = [1, 1, 1]} : vector<7x8x512xf32> to vector<1x8x512xf32>
    %19 = vector.shape_cast %18 : vector<1x8x512xf32> to vector<8x512xf32>
    %20 = arith.addf %17, %19 : vector<8x512xf32>
    %21 = arith.truncf %20 : vector<8x512xf32> to vector<8x512xbf16>
    %cst_10 = arith.constant dense<0.000000e+00> : vector<8x512xf32>
    %22 = tpu.matmul %21, %8, %cst_10 {dimension_numbers = #tpu.dot_dimension_numbers<[1], [0], [0], [1], [0, 0, 1, 1], [], []>} : vector<8x512xbf16>, vector<512x512xbf16>, vector<8x512xf32> -> vector<8x512xf32>
    %23 = vector.extract_strided_slice %7 {offsets = [3, 0, 0], sizes = [1, 8, 512], strides = [1, 1, 1]} : vector<7x8x512xf32> to vector<1x8x512xf32>
    %24 = vector.shape_cast %23 : vector<1x8x512xf32> to vector<8x512xf32>
    %25 = arith.addf %22, %24 : vector<8x512xf32>
    %26 = arith.truncf %25 : vector<8x512xf32> to vector<8x512xbf16>
    %cst_11 = arith.constant dense<0.000000e+00> : vector<8x512xf32>
    %27 = tpu.matmul %26, %8, %cst_11 {dimension_numbers = #tpu.dot_dimension_numbers<[1], [0], [0], [1], [0, 0, 1, 1], [], []>} : vector<8x512xbf16>, vector<512x512xbf16>, vector<8x512xf32> -> vector<8x512xf32>
    %28 = vector.extract_strided_slice %7 {offsets = [4, 0, 0], sizes = [1, 8, 512], strides = [1, 1, 1]} : vector<7x8x512xf32> to vector<1x8x512xf32>
    %29 = vector.shape_cast %28 : vector<1x8x512xf32> to vector<8x512xf32>
    %30 = arith.addf %27, %29 : vector<8x512xf32>
    %31 = arith.truncf %30 : vector<8x512xf32> to vector<8x512xbf16>
    %cst_12 = arith.constant dense<0.000000e+00> : vector<8x512xf32>
    %32 = tpu.matmul %31, %8, %cst_12 {dimension_numbers = #tpu.dot_dimension_numbers<[1], [0], [0], [1], [0, 0, 1, 1], [], []>} : vector<8x512xbf16>, vector<512x512xbf16>, vector<8x512xf32> -> vector<8x512xf32>
    %33 = vector.extract_strided_slice %7 {offsets = [5, 0, 0], sizes = [1, 8, 512], strides = [1, 1, 1]} : vector<7x8x512xf32> to vector<1x8x512xf32>
    %34 = vector.shape_cast %33 : vector<1x8x512xf32> to vector<8x512xf32>
    %35 = arith.addf %32, %34 : vector<8x512xf32>
    %36 = arith.truncf %35 : vector<8x512xf32> to vector<8x512xbf16>
    %cst_13 = arith.constant dense<0.000000e+00> : vector<8x512xf32>
    %37 = tpu.matmul %36, %8, %cst_13 {dimension_numbers = #tpu.dot_dimension_numbers<[1], [0], [0], [1], [0, 0, 1, 1], [], []>} : vector<8x512xbf16>, vector<512x512xbf16>, vector<8x512xf32> -> vector<8x512xf32>
    %38 = vector.extract_strided_slice %7 {offsets = [6, 0, 0], sizes = [1, 8, 512], strides = [1, 1, 1]} : vector<7x8x512xf32> to vector<1x8x512xf32>
    %39 = vector.shape_cast %38 : vector<1x8x512xf32> to vector<8x512xf32>
    %40 = arith.addf %37, %39 : vector<8x512xf32>
    %41 = arith.truncf %40 : vector<8x512xf32> to vector<8x512xbf16>
    %c0_14 = arith.constant 0 : index
    %c0_15 = arith.constant 0 : index
    %42 = vector.load %arg4[%c0_14, %c0_15] : memref<512x512xbf16, #tpu.memory_space<vmem>>, vector<512x512xbf16>
    %cst_16 = arith.constant dense<0.000000e+00> : vector<8x512xf32>
    %43 = tpu.matmul %41, %42, %cst_16 {dimension_numbers = #tpu.dot_dimension_numbers<[1], [0], [0], [1], [0, 0, 1, 1], [], []>} : vector<8x512xbf16>, vector<512x512xbf16>, vector<8x512xf32> -> vector<8x512xf32>
    %44 = arith.addf %43, %3 : vector<8x512xf32>
    %45 = vector.extract_strided_slice %44 {offsets = [0, 0], sizes = [8, 256], strides = [1, 1]} : vector<8x512xf32> to vector<8x256xf32>
    %46 = vector.extract_strided_slice %44 {offsets = [0, 256], sizes = [8, 256], strides = [1, 1]} : vector<8x512xf32> to vector<8x256xf32>
    %47 = arith.mulf %45, %45 : vector<8x256xf32>
    %48 = arith.mulf %46, %46 : vector<8x256xf32>
    %49 = arith.addf %47, %48 : vector<8x256xf32>
    %c0_17 = arith.constant 0 : index
    %c0_18 = arith.constant 0 : index
    %50 = vector.load %arg5[%c0_17, %c0_18] : memref<8x256xf32, #tpu.memory_space<vmem>>, vector<8x256xf32>
    tpu.vector_store %arg5[%c0_17, %c0_18], %49 {strides = array<i32>} : memref<8x256xf32, #tpu.memory_space<vmem>>, vector<8x256xf32>,
    return
  }
}

</mosaic_0001>

<llo_original>
// kernel: custom-call.1
$region0: #{custom-call.1}
  %s0 = inlined_call_operand.hbm [shape: c64[2,8,16,16], index: 0, kind: input, shape index: {}]
  %s1 = inlined_call_operand.vmem [shape: f32[2,8,16,16], index: 1, kind: output, shape index: {}]
  %s2 = scalar_lea.hbm %s0, 4096
  $region1: #{custom-call.1} parent=0
    #allocation0 [shape = 's32[1]{0}', space=sflag, size = 0x4, scoped, tag = 'scoped memory for custom-call.1']
    %3 = vsyncpa [#allocation0], 0
    %s4 = sshll.u32 %s1, 4
    %s5 = int_to_ptr.vmem [resolvable:$true] %s4
    %7 = dma.hbm_to_vmem [thread:$0]  %s2, 4096, %s5, [#allocation0]
    %8 = dma.done [#allocation0], 4096
    %9 = vsyncpa [#allocation0], 1

// kernel: custom-call
$region0: #{custom-call}
  %s0 = inlined_call_operand.hbm [shape: c64[2,8,16,16], index: 0, kind: input, shape index: {}]
  %s1 = inlined_call_operand.vmem [shape: f32[2,8,16,16], index: 1, kind: output, shape index: {}]
  $region1: #{custom-call} parent=0
    #allocation0 [shape = 's32[1]{0}', space=sflag, size = 0x4, scoped, tag = 'scoped memory for custom-call']
    %2 = vsyncpa [#allocation0], 0
    %s3 = sshll.u32 %s1, 4
    %s4 = int_to_ptr.vmem [resolvable:$true] %s3
    %6 = dma.hbm_to_vmem [thread:$0]  %s0, 4096, %s4, [#allocation0]
    %7 = dma.done [#allocation0], 4096
    %8 = vsyncpa [#allocation0], 1

// kernel: diffractive_rnn_forward.1
$region0: #{diffractive_rnn_forward.1}
  #allocation0 [shape = 'u32[]', space=smem, size = 0x4, offset = 0x4, fixed_abs, tag = 'smem constant byte address 0x4 - core index']
  #allocation1 [shape = 'u32[144,128]{1,0:T(1,128)}', space=vmem, size = 0x12000, scoped, tag = 'internal scratch']
  %s0 = inlined_call_operand.vmem [shape: bf16[64,512], index: 0, kind: input, shape index: {}]
  %s1 = inlined_call_operand.vmem [shape: bf16[512,512], index: 1, kind: input, shape index: {}]
  %s2 = inlined_call_operand.hbm [shape: bf16[512,512], index: 2, kind: input, shape index: {}]
  %s3 = inlined_call_operand.hbm [shape: bf16[512,512], index: 3, kind: input, shape index: {}]
  %s4 = inlined_call_operand.hbm [shape: bf16[512,512], index: 4, kind: input, shape index: {}]
  %s5 = inlined_call_operand.vmem [shape: f32[8,256], index: 5, kind: output, shape index: {}]
  %s6 = sld [smem:[#allocation0]]
  $region42: #{diffractive_rnn_forward.1} parent=0
    _
  %s8 = ssub.s32 1, %s6
  %s9 = scalar_select 0, %s8, %s6
  $region1: #{diffractive_rnn_forward.1} parent=0
    #allocation2 [shape = 'u8[524288]{0}', space=vmem, size = 0x80000, scoped, tag = 'input window, operand 2, single buffered']
    #allocation3 [shape = 's32[1]{0}', space=sflag, size = 0x4, scoped, tag = 'scoped memory for diffractive_rnn_forward.1']
    #allocation4 [shape = 'u8[524288]{0}', space=vmem, size = 0x80000, scoped, tag = 'input window, operand 3, single buffered']
    #allocation5 [shape = 's32[1]{0}', space=sflag, size = 0x4, scoped, tag = 'scoped memory for diffractive_rnn_forward.1']
    #allocation6 [shape = 'u8[524288]{0}', space=vmem, size = 0x80000, scoped, tag = 'input window, operand 4, single buffered']
    %10 = vsyncpa [#allocation3], 0
    %11 = vsyncpa [#allocation5], 0
    // Predicated region
    $region2: #{diffractive_rnn_forward.1} parent=1 // pred_check
      _
    $region3: #{diffractive_rnn_forward.1} parent=1 // pred_check_branch
      %13 = sbr.rel (0) target = $region5
    $region4: #{diffractive_rnn_forward.1} parent=1 // pred_region
      _
    $region5: #{diffractive_rnn_forward.1} parent=1 // pred_fallthru
      _
    // Predicated region
    $region6: #{diffractive_rnn_forward.1} parent=1 // pred_check
      _
    $region7: #{diffractive_rnn_forward.1} parent=1 // pred_check_branch
      %15 = sbr.rel (0) target = $region9
    $region8: #{diffractive_rnn_forward.1} parent=1 // pred_region
      _
    $region9: #{diffractive_rnn_forward.1} parent=1 // pred_fallthru
      _
    // Predicated region
    $region10: #{diffractive_rnn_forward.1} parent=1 // pred_check
      _
    $region11: #{diffractive_rnn_forward.1} parent=1 // pred_check_branch
      %17 = sbr.rel (0) target = $region13
    $region12: #{diffractive_rnn_forward.1} parent=1 // pred_region
      %s19 = ssub.s32 16384, 16384
      %20 = vsyncadd [#allocation3], %s19
      %s21 = sshll.u32 [#allocation2], 4
      %s22 = int_to_ptr.vmem [resolvable:$true] %s21
      %27 = dma.hbm_to_vmem [thread:$0]  %s2, 16384, %s22, [#allocation3], 256, 256, 16
    $region13: #{diffractive_rnn_forward.1} parent=1 // pred_fallthru
      _
    // Predicated region
    $region14: #{diffractive_rnn_forward.1} parent=1 // pred_check
      _
    $region15: #{diffractive_rnn_forward.1} parent=1 // pred_check_branch
      %29 = sbr.rel (0) target = $region17
    $region16: #{diffractive_rnn_forward.1} parent=1 // pred_region
      %s31 = ssub.s32 16384, 16384
      %32 = vsyncadd [#allocation5], %s31
      %s33 = sshll.u32 [#allocation4], 4
      %s34 = int_to_ptr.vmem [resolvable:$true] %s33
      %39 = dma.hbm_to_vmem [thread:$0]  %s3, 16384, %s34, [#allocation5], 256, 256, 16
    $region17: #{diffractive_rnn_forward.1} parent=1 // pred_fallthru
      _
    // Predicated region
    $region18: #{diffractive_rnn_forward.1} parent=1 // pred_check
      _
    $region19: #{diffractive_rnn_forward.1} parent=1 // pred_check_branch
      %41 = sbr.rel (0) target = $region21
    $region20: #{diffractive_rnn_forward.1} parent=1 // pred_region
      %s43 = ssub.s32 16384, 16384
      %44 = vsyncadd [#allocation5], %s43
      %s45 = sshll.u32 [#allocation6], 4
      %s46 = int_to_ptr.vmem [resolvable:$true] %s45
      %51 = dma.hbm_to_vmem [thread:$0]  %s4, 16384, %s46, [#allocation5], 256, 256, 16
    $region21: #{diffractive_rnn_forward.1} parent=1 // pred_fallthru
      _
    // Predicated region
    $region22: #{diffractive_rnn_forward.1} parent=1 // pred_check
      _
    $region23: #{diffractive_rnn_forward.1} parent=1 // pred_check_branch
      %53 = sbr.rel (0) target = $region25
    $region24: #{diffractive_rnn_forward.1} parent=1 // pred_region
      %54 = dma.done [#allocation3], 16384
    $region25: #{diffractive_rnn_forward.1} parent=1 // pred_fallthru
      _
    // Predicated region
    $region26: #{diffractive_rnn_forward.1} parent=1 // pred_check
      _
    $region27: #{diffractive_rnn_forward.1} parent=1 // pred_check_branch
      %56 = sbr.rel (0) target = $region29
    $region28: #{diffractive_rnn_forward.1} parent=1 // pred_region
      %57 = dma.done [#allocation5], 16384
    $region29: #{diffractive_rnn_forward.1} parent=1 // pred_fallthru
      _
    // Predicated region
    $region30: #{diffractive_rnn_forward.1} parent=1 // pred_check
      _
    $region31: #{diffractive_rnn_forward.1} parent=1 // pred_check_branch
      %59 = sbr.rel (0) target = $region33
    $region32: #{diffractive_rnn_forward.1} parent=1 // pred_region
      %60 = dma.done [#allocation5], 16384
    $region33: #{diffractive_rnn_forward.1} parent=1 // pred_fallthru
      _
    %v61 = vld [vmem:[%s0] sm:$0xff]
    %v62 = vld [vmem:[%s0 + $0x8] sm:$0xff]
    %v63 = vld [vmem:[%s0 + $0x10] sm:$0xff]
    %v64 = vld [vmem:[%s0 + $0x18] sm:$0xff]
    %v65 = vld [vmem:[%s0 + $0x20] sm:$0xff]
    %v66 = vld [vmem:[%s0 + $0x28] sm:$0xff]
    %v67 = vld [vmem:[%s0 + $0x30] sm:$0xff]
    %v68 = vld [vmem:[%s0 + $0x38] sm:$0xff]
    %v69 = vld [vmem:[%s0 + $0x40] sm:$0xff]
    %v70 = vld [vmem:[%s0 + $0x48] sm:$0xff]
    %v71 = vld [vmem:[%s0 + $0x50] sm:$0xff]
    %v72 = vld [vmem:[%s0 + $0x58] sm:$0xff]
    %v73 = vld [vmem:[%s0 + $0x60] sm:$0xff]
    %v74 = vld [vmem:[%s0 + $0x68] sm:$0xff]
    %v75 = vld [vmem:[%s0 + $0x70] sm:$0xff]
    %v76 = vld [vmem:[%s0 + $0x78] sm:$0xff]
    %v77 = vld [vmem:[#allocation2] sm:$0xff]
    %v78 = vld [vmem:[#allocation2 + $0x8] sm:$0xff]
    %v79 = vld [vmem:[#allocation2 + $0x10] sm:$0xff]
    %v80 = vld [vmem:[#allocation2 + $0x18] sm:$0xff]
    %v81 = vld [vmem:[#allocation2 + $0x20] sm:$0xff]
    %v82 = vld [vmem:[#allocation2 + $0x28] sm:$0xff]
    %v83 = vld [vmem:[#allocation2 + $0x30] sm:$0xff]
    %v84 = vld [vmem:[#allocation2 + $0x38] sm:$0xff]
    %v85 = vld [vmem:[#allocation2 + $0x40] sm:$0xff]
    %v86 = vld [vmem:[#allocation2 + $0x48] sm:$0xff]
    %v87 = vld [vmem:[#allocation2 + $0x50] sm:$0xff]
    %v88 = vld [vmem:[#allocation2 + $0x58] sm:$0xff]
    %v89 = vld [vmem:[#allocation2 + $0x60] sm:$0xff]
    %v90 = vld [vmem:[#allocation2 + $0x68] sm:$0xff]
    %v91 = vld [vmem:[#allocation2 + $0x70] sm:$0xff]
    %v92 = vld [vmem:[#allocation2 + $0x78] sm:$0xff]
    %v93 = vld [vmem:[#allocation2 + $0x80] sm:$0xff]
    %v94 = vld [vmem:[#allocation2 + $0x88] sm:$0xff]
    %v95 = vld [vmem:[#allocation2 + $0x90] sm:$0xff]
    %v96 = vld [vmem:[#allocation2 + $0x98] sm:$0xff]
    %v97 = vld [vmem:[#allocation2 + $0xa0] sm:$0xff]
    %v98 = vld [vmem:[#allocation2 + $0xa8] sm:$0xff]
    %v99 = vld [vmem:[#allocation2 + $0xb0] sm:$0xff]
    %v100 = vld [vmem:[#allocation2 + $0xb8] sm:$0xff]
    %v101 = vld [vmem:[#allocation2 + $0xc0] sm:$0xff]
    %v102 = vld [vmem:[#allocation2 + $0xc8] sm:$0xff]
    %v103 = vld [vmem:[#allocation2 + $0xd0] sm:$0xff]
    %v104 = vld [vmem:[#allocation2 + $0xd8] sm:$0xff]
    %v105 = vld [vmem:[#allocation2 + $0xe0] sm:$0xff]
    %v106 = vld [vmem:[#allocation2 + $0xe8] sm:$0xff]
    %v107 = vld [vmem:[#allocation2 + $0xf0] sm:$0xff]
    %v108 = vld [vmem:[#allocation2 + $0xf8] sm:$0xff]
    %v109 = vld [vmem:[#allocation2 + $0x100] sm:$0xff]
    %v110 = vld [vmem:[#allocation2 + $0x108] sm:$0xff]
    %v111 = vld [vmem:[#allocation2 + $0x110] sm:$0xff]
    %v112 = vld [vmem:[#allocation2 + $0x118] sm:$0xff]
    %v113 = vld [vmem:[#allocation2 + $0x120] sm:$0xff]
    %v114 = vld [vmem:[#allocation2 + $0x128] sm:$0xff]
    %v115 = vld [vmem:[#allocation2 + $0x130] sm:$0xff]
    %v116 = vld [vmem:[#allocation2 + $0x138] sm:$0xff]
    %v117 = vld [vmem:[#allocation2 + $0x140] sm:$0xff]
    %v118 = vld [vmem:[#allocation2 + $0x148] sm:$0xff]
    %v119 = vld [vmem:[#allocation2 + $0x150] sm:$0xff]
    %v120 = vld [vmem:[#allocation2 + $0x158] sm:$0xff]
    %v121 = vld [vmem:[#allocation2 + $0x160] sm:$0xff]
    %v122 = vld [vmem:[#allocation2 + $0x168] sm:$0xff]
    %v123 = vld [vmem:[#allocation2 + $0x170] sm:$0xff]
    %v124 = vld [vmem:[#allocation2 + $0x178] sm:$0xff]
    %v125 = vld [vmem:[#allocation2 + $0x180] sm:$0xff]
    %v126 = vld [vmem:[#allocation2 + $0x188] sm:$0xff]
    %v127 = vld [vmem:[#allocation2 + $0x190] sm:$0xff]
    %v128 = vld [vmem:[#allocation2 + $0x198] sm:$0xff]
    %v129 = vld [vmem:[#allocation2 + $0x1a0] sm:$0xff]
    %v130 = vld [vmem:[#allocation2 + $0x1a8] sm:$0xff]
    %v131 = vld [vmem:[#allocation2 + $0x1b0] sm:$0xff]
    %v132 = vld [vmem:[#allocation2 + $0x1b8] sm:$0xff]
    %v133 = vld [vmem:[#allocation2 + $0x1c0] sm:$0xff]
    %v134 = vld [vmem:[#allocation2 + $0x1c8] sm:$0xff]
    %v135 = vld [vmem:[#allocation2 + $0x1d0] sm:$0xff]
    %v136 = vld [vmem:[#allocation2 + $0x1d8] sm:$0xff]
    %v137 = vld [vmem:[#allocation2 + $0x1e0] sm:$0xff]
    %v138 = vld [vmem:[#allocation2 + $0x1e8] sm:$0xff]
    %v139 = vld [vmem:[#allocation2 + $0x1f0] sm:$0xff]
    %v140 = vld [vmem:[#allocation2 + $0x1f8] sm:$0xff]
    %v141 = vld [vmem:[#allocation2 + $0x200] sm:$0xff]
    %v142 = vld [vmem:[#allocation2 + $0x208] sm:$0xff]
    %v143 = vld [vmem:[#allocation2 + $0x210] sm:$0xff]
    %v144 = vld [vmem:[#allocation2 + $0x218] sm:$0xff]
    %v145 = vld [vmem:[#allocation2 + $0x220] sm:$0xff]
    %v146 = vld [vmem:[#allocation2 + $0x228] sm:$0xff]
    %v147 = vld [vmem:[#allocation2 + $0x230] sm:$0xff]
    %v148 = vld [vmem:[#allocation2 + $0x238] sm:$0xff]
    %v149 = vld [vmem:[#allocation2 + $0x240] sm:$0xff]
    %v150 = vld [vmem:[#allocation2 + $0x248] sm:$0xff]
    %v151 = vld [vmem:[#allocation2 + $0x250] sm:$0xff]
    %v152 = vld [vmem:[#allocation2 + $0x258] sm:$0xff]
    %v153 = vld [vmem:[#allocation2 + $0x260] sm:$0xff]
    %v154 = vld [vmem:[#allocation2 + $0x268] sm:$0xff]
    %v155 = vld [vmem:[#allocation2 + $0x270] sm:$0xff]
    %v156 = vld [vmem:[#allocation2 + $0x278] sm:$0xff]
    %v157 = vld [vmem:[#allocation2 + $0x280] sm:$0xff]
    %v158 = vld [vmem:[#allocation2 + $0x288] sm:$0xff]
    %v159 = vld [vmem:[#allocation2 + $0x290] sm:$0xff]
    %v160 = vld [vmem:[#allocation2 + $0x298] sm:$0xff]
    %v161 = vld [vmem:[#allocation2 + $0x2a0] sm:$0xff]
    %v162 = vld [vmem:[#allocation2 + $0x2a8] sm:$0xff]
    %v163 = vld [vmem:[#allocation2 + $0x2b0] sm:$0xff]
    %v164 = vld [vmem:[#allocation2 + $0x2b8] sm:$0xff]
    %v165 = vld [vmem:[#allocation2 + $0x2c0] sm:$0xff]
    %v166 = vld [vmem:[#allocation2 + $0x2c8] sm:$0xff]
    %v167 = vld [vmem:[#allocation2 + $0x2d0] sm:$0xff]
    %v168 = vld [vmem:[#allocation2 + $0x2d8] sm:$0xff]
    %v169 = vld [vmem:[#allocation2 + $0x2e0] sm:$0xff]
    %v170 = vld [vmem:[#allocation2 + $0x2e8] sm:$0xff]
    %v171 = vld [vmem:[#allocation2 + $0x2f0] sm:$0xff]
    %v172 = vld [vmem:[#allocation2 + $0x2f8] sm:$0xff]
    %v173 = vld [vmem:[#allocation2 + $0x300] sm:$0xff]
    %v174 = vld [vmem:[#allocation2 + $0x308] sm:$0xff]
    %v175 = vld [vmem:[#allocation2 + $0x310] sm:$0xff]
    %v176 = vld [vmem:[#allocation2 + $0x318] sm:$0xff]
    %v177 = vld [vmem:[#allocation2 + $0x320] sm:$0xff]
    %v178 = vld [vmem:[#allocation2 + $0x328] sm:$0xff]
    %v179 = vld [vmem:[#allocation2 + $0x330] sm:$0xff]
    %v180 = vld [vmem:[#allocation2 + $0x338] sm:$0xff]
    %v181 = vld [vmem:[#allocation2 + $0x340] sm:$0xff]
    %v182 = vld [vmem:[#allocation2 + $0x348] sm:$0xff]
    %v183 = vld [vmem:[#allocation2 + $0x350] sm:$0xff]
    %v184 = vld [vmem:[#allocation2 + $0x358] sm:$0xff]
    %v185 = vld [vmem:[#allocation2 + $0x360] sm:$0xff]
    %v186 = vld [vmem:[#allocation2 + $0x368] sm:$0xff]
    %v187 = vld [vmem:[#allocation2 + $0x370] sm:$0xff]
    %v188 = vld [vmem:[#allocation2 + $0x378] sm:$0xff]
    %v189 = vld [vmem:[#allocation2 + $0x380] sm:$0xff]
    %v190 = vld [vmem:[#allocation2 + $0x388] sm:$0xff]
    %v191 = vld [vmem:[#allocation2 + $0x390] sm:$0xff]
    %v192 = vld [vmem:[#allocation2 + $0x398] sm:$0xff]
    %v193 = vld [vmem:[#allocation2 + $0x3a0] sm:$0xff]
    %v194 = vld [vmem:[#allocation2 + $0x3a8] sm:$0xff]
    %v195 = vld [vmem:[#allocation2 + $0x3b0] sm:$0xff]
    %v196 = vld [vmem:[#allocation2 + $0x3b8] sm:$0xff]
    %v197 = vld [vmem:[#allocation2 + $0x3c0] sm:$0xff]
    %v198 = vld [vmem:[#allocation2 + $0x3c8] sm:$0xff]
    %v199 = vld [vmem:[#allocation2 + $0x3d0] sm:$0xff]
    %v200 = vld [vmem:[#allocation2 + $0x3d8] sm:$0xff]
    %v201 = vld [vmem:[#allocation2 + $0x3e0] sm:$0xff]
    %v202 = vld [vmem:[#allocation2 + $0x3e8] sm:$0xff]
    %v203 = vld [vmem:[#allocation2 + $0x3f0] sm:$0xff]
    %v204 = vld [vmem:[#allocation2 + $0x3f8] sm:$0xff]
    %v207 = vunpack.c.l.b16 %v75
    %v208 = vunpack.c.h.b16 %v75
    %v209 = vunpack.c.l.b16 %v76
    %v210 = vunpack.c.h.b16 %v76
    %v211 = vpack.c.b16 %v207, %v207
    %v212 = vpack.c.b16 %v208, %v208
    %v213 = vpack.c.b16 %v209, %v209
    %v214 = vpack.c.b16 %v210, %v210
    %v347 = vunpack.c.l.b16 %v77
    %v348 = vunpack.c.h.b16 %v77
    %v349 = vunpack.c.l.b16 %v78
    %v350 = vunpack.c.h.b16 %v78
    %v351 = vunpack.c.l.b16 %v79
    %v352 = vunpack.c.h.b16 %v79
    %v353 = vunpack.c.l.b16 %v80
    %v354 = vunpack.c.h.b16 %v80
    %v355 = vunpack.c.l.b16 %v81
    %v356 = vunpack.c.h.b16 %v81
    %v357 = vunpack.c.l.b16 %v82
    %v358 = vunpack.c.h.b16 %v82
    %v359 = vunpack.c.l.b16 %v83
    %v360 = vunpack.c.h.b16 %v83
    %v361 = vunpack.c.l.b16 %v84
    %v362 = vunpack.c.h.b16 %v84
    %v363 = vunpack.c.l.b16 %v85
    %v364 = vunpack.c.h.b16 %v85
    %v365 = vunpack.c.l.b16 %v86
    %v366 = vunpack.c.h.b16 %v86
    %v367 = vunpack.c.l.b16 %v87
    %v368 = vunpack.c.h.b16 %v87
    %v369 = vunpack.c.l.b16 %v88
    %v370 = vunpack.c.h.b16 %v88
    %v371 = vunpack.c.l.b16 %v89
    %v372 = vunpack.c.h.b16 %v89
    %v373 = vunpack.c.l.b16 %v90
    %v374 = vunpack.c.h.b16 %v90
    %v375 = vunpack.c.l.b16 %v91
    %v376 = vunpack.c.h.b16 %v91
    %v377 = vunpack.c.l.b16 %v92
    %v378 = vunpack.c.h.b16 %v92
    %v379 = vunpack.c.l.b16 %v93
    %v380 = vunpack.c.h.b16 %v93
    %v381 = vunpack.c.l.b16 %v94
    %v382 = vunpack.c.h.b16 %v94
    %v383 = vunpack.c.l.b16 %v95
    %v384 = vunpack.c.h.b16 %v95
    %v385 = vunpack.c.l.b16 %v96
    %v386 = vunpack.c.h.b16 %v96
    %v387 = vunpack.c.l.b16 %v97
    %v388 = vunpack.c.h.b16 %v97
    %v389 = vunpack.c.l.b16 %v98
    %v390 = vunpack.c.h.b16 %v98
    %v391 = vunpack.c.l.b16 %v99
    %v392 = vunpack.c.h.b16 %v99
    %v393 = vunpack.c.l.b16 %v100
    %v394 = vunpack.c.h.b16 %v100
    %v395 = vunpack.c.l.b16 %v101
    %v396 = vunpack.c.h.b16 %v101
    %v397 = vunpack.c.l.b16 %v102
    %v398 = vunpack.c.h.b16 %v102
    %v399 = vunpack.c.l.b16 %v103
    %v400 = vunpack.c.h.b16 %v103
    %v401 = vunpack.c.l.b16 %v104
    %v402 = vunpack.c.h.b16 %v104
    %v403 = vunpack.c.l.b16 %v105
    %v404 = vunpack.c.h.b16 %v105
    %v405 = vunpack.c.l.b16 %v106
    %v406 = vunpack.c.h.b16 %v106
    %v407 = vunpack.c.l.b16 %v107
    %v408 = vunpack.c.h.b16 %v107
    %v409 = vunpack.c.l.b16 %v108
    %v410 = vunpack.c.h.b16 %v108
    %v411 = vunpack.c.l.b16 %v109
    %v412 = vunpack.c.h.b16 %v109
    %v413 = vunpack.c.l.b16 %v110
    %v414 = vunpack.c.h.b16 %v110
    %v415 = vunpack.c.l.b16 %v111
    %v416 = vunpack.c.h.b16 %v111
    %v417 = vunpack.c.l.b16 %v112
    %v418 = vunpack.c.h.b16 %v112
    %v419 = vunpack.c.l.b16 %v113
    %v420 = vunpack.c.h.b16 %v113
    %v421 = vunpack.c.l.b16 %v114
    %v422 = vunpack.c.h.b16 %v114
    %v423 = vunpack.c.l.b16 %v115
    %v424 = vunpack.c.h.b16 %v115
    %v425 = vunpack.c.l.b16 %v116
    %v426 = vunpack.c.h.b16 %v116
    %v427 = vunpack.c.l.b16 %v117
    %v428 = vunpack.c.h.b16 %v117
    %v429 = vunpack.c.l.b16 %v118
    %v430 = vunpack.c.h.b16 %v118
    %v431 = vunpack.c.l.b16 %v119
    %v432 = vunpack.c.h.b16 %v119
    %v433 = vunpack.c.l.b16 %v120
    %v434 = vunpack.c.h.b16 %v120
    %v435 = vunpack.c.l.b16 %v121
    %v436 = vunpack.c.h.b16 %v121
    %v437 = vunpack.c.l.b16 %v122
    %v438 = vunpack.c.h.b16 %v122
    %v439 = vunpack.c.l.b16 %v123
    %v440 = vunpack.c.h.b16 %v123
    %v441 = vunpack.c.l.b16 %v124
    %v442 = vunpack.c.h.b16 %v124
    %v443 = vunpack.c.l.b16 %v125
    %v444 = vunpack.c.h.b16 %v125
    %v445 = vunpack.c.l.b16 %v126
    %v446 = vunpack.c.h.b16 %v126
    %v447 = vunpack.c.l.b16 %v127
    %v448 = vunpack.c.h.b16 %v127
    %v449 = vunpack.c.l.b16 %v128
    %v450 = vunpack.c.h.b16 %v128
    %v451 = vunpack.c.l.b16 %v129
    %v452 = vunpack.c.h.b16 %v129
    %v453 = vunpack.c.l.b16 %v130
    %v454 = vunpack.c.h.b16 %v130
    %v455 = vunpack.c.l.b16 %v131
    %v456 = vunpack.c.h.b16 %v131
    %v457 = vunpack.c.l.b16 %v132
    %v458 = vunpack.c.h.b16 %v132
    %v459 = vunpack.c.l.b16 %v133
    %v460 = vunpack.c.h.b16 %v133
    %v461 = vunpack.c.l.b16 %v134
    %v462 = vunpack.c.h.b16 %v134
    %v463 = vunpack.c.l.b16 %v135
    %v464 = vunpack.c.h.b16 %v135
    %v465 = vunpack.c.l.b16 %v136
    %v466 = vunpack.c.h.b16 %v136
    %v467 = vunpack.c.l.b16 %v137
    %v468 = vunpack.c.h.b16 %v137
    %v469 = vunpack.c.l.b16 %v138
    %v470 = vunpack.c.h.b16 %v138
    %v471 = vunpack.c.l.b16 %v139
    %v472 = vunpack.c.h.b16 %v139
    %v473 = vunpack.c.l.b16 %v140
    %v474 = vunpack.c.h.b16 %v140
    %v475 = vunpack.c.l.b16 %v141
    %v476 = vunpack.c.h.b16 %v141
    %v477 = vunpack.c.l.b16 %v142
    %v478 = vunpack.c.h.b16 %v142
    %v479 = vunpack.c.l.b16 %v143
    %v480 = vunpack.c.h.b16 %v143
    %v481 = vunpack.c.l.b16 %v144
    %v482 = vunpack.c.h.b16 %v144
    %v483 = vunpack.c.l.b16 %v145
    %v484 = vunpack.c.h.b16 %v145
    %v485 = vunpack.c.l.b16 %v146
    %v486 = vunpack.c.h.b16 %v146
    %v487 = vunpack.c.l.b16 %v147
    %v488 = vunpack.c.h.b16 %v147
    %v489 = vunpack.c.l.b16 %v148
    %v490 = vunpack.c.h.b16 %v148
    %v491 = vunpack.c.l.b16 %v149
    %v492 = vunpack.c.h.b16 %v149
    %v493 = vunpack.c.l.b16 %v150
    %v494 = vunpack.c.h.b16 %v150
    %v495 = vunpack.c.l.b16 %v151
    %v496 = vunpack.c.h.b16 %v151
    %v497 = vunpack.c.l.b16 %v152
    %v498 = vunpack.c.h.b16 %v152
    %v499 = vunpack.c.l.b16 %v153
    %v500 = vunpack.c.h.b16 %v153
    %v501 = vunpack.c.l.b16 %v154
    %v502 = vunpack.c.h.b16 %v154
    %v503 = vunpack.c.l.b16 %v155
    %v504 = vunpack.c.h.b16 %v155
    %v505 = vunpack.c.l.b16 %v156
    %v506 = vunpack.c.h.b16 %v156
    %v507 = vunpack.c.l.b16 %v157
    %v508 = vunpack.c.h.b16 %v157
    %v509 = vunpack.c.l.b16 %v158
    %v510 = vunpack.c.h.b16 %v158
    %v511 = vunpack.c.l.b16 %v159
    %v512 = vunpack.c.h.b16 %v159
    %v513 = vunpack.c.l.b16 %v160
    %v514 = vunpack.c.h.b16 %v160
    %v515 = vunpack.c.l.b16 %v161
    %v516 = vunpack.c.h.b16 %v161
    %v517 = vunpack.c.l.b16 %v162
    %v518 = vunpack.c.h.b16 %v162
    %v519 = vunpack.c.l.b16 %v163
    %v520 = vunpack.c.h.b16 %v163
    %v521 = vunpack.c.l.b16 %v164
    %v522 = vunpack.c.h.b16 %v164
    %v523 = vunpack.c.l.b16 %v165
    %v524 = vunpack.c.h.b16 %v165
    %v525 = vunpack.c.l.b16 %v166
    %v526 = vunpack.c.h.b16 %v166
    %v527 = vunpack.c.l.b16 %v167
    %v528 = vunpack.c.h.b16 %v167
    %v529 = vunpack.c.l.b16 %v168
    %v530 = vunpack.c.h.b16 %v168
    %v531 = vunpack.c.l.b16 %v169
    %v532 = vunpack.c.h.b16 %v169
    %v533 = vunpack.c.l.b16 %v170
    %v534 = vunpack.c.h.b16 %v170
    %v535 = vunpack.c.l.b16 %v171
    %v536 = vunpack.c.h.b16 %v171
    %v537 = vunpack.c.l.b16 %v172
    %v538 = vunpack.c.h.b16 %v172
    %v539 = vunpack.c.l.b16 %v173
    %v540 = vunpack.c.h.b16 %v173
    %v541 = vunpack.c.l.b16 %v174
    %v542 = vunpack.c.h.b16 %v174
    %v543 = vunpack.c.l.b16 %v175
    %v544 = vunpack.c.h.b16 %v175
    %v545 = vunpack.c.l.b16 %v176
    %v546 = vunpack.c.h.b16 %v176
    %v547 = vunpack.c.l.b16 %v177
    %v548 = vunpack.c.h.b16 %v177
    %v549 = vunpack.c.l.b16 %v178
    %v550 = vunpack.c.h.b16 %v178
    %v551 = vunpack.c.l.b16 %v179
    %v552 = vunpack.c.h.b16 %v179
    %v553 = vunpack.c.l.b16 %v180
    %v554 = vunpack.c.h.b16 %v180
    %v555 = vunpack.c.l.b16 %v181
    %v556 = vunpack.c.h.b16 %v181
    %v557 = vunpack.c.l.b16 %v182
    %v558 = vunpack.c.h.b16 %v182
    %v559 = vunpack.c.l.b16 %v183
    %v560 = vunpack.c.h.b16 %v183
    %v561 = vunpack.c.l.b16 %v184
    %v562 = vunpack.c.h.b16 %v184
    %v563 = vunpack.c.l.b16 %v185
    %v564 = vunpack.c.h.b16 %v185
    %v565 = vunpack.c.l.b16 %v186
    %v566 = vunpack.c.h.b16 %v186
    %v567 = vunpack.c.l.b16 %v187
    %v568 = vunpack.c.h.b16 %v187
    %v569 = vunpack.c.l.b16 %v188
    %v570 = vunpack.c.h.b16 %v188
    %v571 = vunpack.c.l.b16 %v189
    %v572 = vunpack.c.h.b16 %v189
    %v573 = vunpack.c.l.b16 %v190
    %v574 = vunpack.c.h.b16 %v190
    %v575 = vunpack.c.l.b16 %v191
    %v576 = vunpack.c.h.b16 %v191
    %v577 = vunpack.c.l.b16 %v192
    %v578 = vunpack.c.h.b16 %v192
    %v579 = vunpack.c.l.b16 %v193
    %v580 = vunpack.c.h.b16 %v193
    %v581 = vunpack.c.l.b16 %v194
    %v582 = vunpack.c.h.b16 %v194
    %v583 = vunpack.c.l.b16 %v195
    %v584 = vunpack.c.h.b16 %v195
    %v585 = vunpack.c.l.b16 %v196
    %v586 = vunpack.c.h.b16 %v196
    %v587 = vunpack.c.l.b16 %v197
    %v588 = vunpack.c.h.b16 %v197
    %v589 = vunpack.c.l.b16 %v198
    %v590 = vunpack.c.h.b16 %v198
    %v591 = vunpack.c.l.b16 %v199
    %v592 = vunpack.c.h.b16 %v199
    %v593 = vunpack.c.l.b16 %v200
    %v594 = vunpack.c.h.b16 %v200
    %v595 = vunpack.c.l.b16 %v201
    %v596 = vunpack.c.h.b16 %v201
    %v597 = vunpack.c.l.b16 %v202
    %v598 = vunpack.c.h.b16 %v202
    %v599 = vunpack.c.l.b16 %v203
    %v600 = vunpack.c.h.b16 %v203
    %v601 = vunpack.c.l.b16 %v204
    %v602 = vunpack.c.h.b16 %v204
    %v603 = vpack.c.b16 %v351, %v347
    %v604 = vpack.c.b16 %v352, %v348
    %v605 = vpack.c.b16 %v353, %v349
    %v606 = vpack.c.b16 %v354, %v350
    %v607 = vpack.c.b16 %v359, %v355
    %v608 = vpack.c.b16 %v360, %v356
    %v609 = vpack.c.b16 %v361, %v357
    %v610 = vpack.c.b16 %v362, %v358
    %v611 = vpack.c.b16 %v367, %v363
    %v612 = vpack.c.b16 %v368, %v364
    %v613 = vpack.c.b16 %v369, %v365
    %v614 = vpack.c.b16 %v370, %v366
    %v615 = vpack.c.b16 %v375, %v371
    %v616 = vpack.c.b16 %v376, %v372
    %v617 = vpack.c.b16 %v377, %v373
    %v618 = vpack.c.b16 %v378, %v374
    %v619 = vpack.c.b16 %v383, %v379
    %v620 = vpack.c.b16 %v384, %v380
    %v621 = vpack.c.b16 %v385, %v381
    %v622 = vpack.c.b16 %v386, %v382
    %v623 = vpack.c.b16 %v391, %v387
    %v624 = vpack.c.b16 %v392, %v388
    %v625 = vpack.c.b16 %v393, %v389
    %v626 = vpack.c.b16 %v394, %v390
    %v627 = vpack.c.b16 %v399, %v395
    %v628 = vpack.c.b16 %v400, %v396
    %v629 = vpack.c.b16 %v401, %v397
    %v630 = vpack.c.b16 %v402, %v398
    %v631 = vpack.c.b16 %v407, %v403
    %v632 = vpack.c.b16 %v408, %v404
    %v633 = vpack.c.b16 %v409, %v405
    %v634 = vpack.c.b16 %v410, %v406
    %v635 = vpack.c.b16 %v415, %v411
    %v636 = vpack.c.b16 %v416, %v412
    %v637 = vpack.c.b16 %v417, %v413
    %v638 = vpack.c.b16 %v418, %v414
    %v639 = vpack.c.b16 %v423, %v419
    %v640 = vpack.c.b16 %v424, %v420
    %v641 = vpack.c.b16 %v425, %v421
    %v642 = vpack.c.b16 %v426, %v422
    %v643 = vpack.c.b16 %v431, %v427
    %v644 = vpack.c.b16 %v432, %v428
    %v645 = vpack.c.b16 %v433, %v429
    %v646 = vpack.c.b16 %v434, %v430
    %v647 = vpack.c.b16 %v439, %v435
    %v648 = vpack.c.b16 %v440, %v436
    %v649 = vpack.c.b16 %v441, %v437
    %v650 = vpack.c.b16 %v442, %v438
    %v651 = vpack.c.b16 %v447, %v443
    %v652 = vpack.c.b16 %v448, %v444
    %v653 = vpack.c.b16 %v449, %v445
    %v654 = vpack.c.b16 %v450, %v446
    %v655 = vpack.c.b16 %v455, %v451
    %v656 = vpack.c.b16 %v456, %v452
    %v657 = vpack.c.b16 %v457, %v453
    %v658 = vpack.c.b16 %v458, %v454
    %v659 = vpack.c.b16 %v463, %v459
    %v660 = vpack.c.b16 %v464, %v460
    %v661 = vpack.c.b16 %v465, %v461
    %v662 = vpack.c.b16 %v466, %v462
    %v663 = vpack.c.b16 %v471, %v467
    %v664 = vpack.c.b16 %v472, %v468
    %v665 = vpack.c.b16 %v473, %v469
    %v666 = vpack.c.b16 %v474, %v470
    %v667 = vpack.c.b16 %v479, %v475
    %v668 = vpack.c.b16 %v480, %v476
    %v669 = vpack.c.b16 %v481, %v477
    %v670 = vpack.c.b16 %v482, %v478
    %v671 = vpack.c.b16 %v487, %v483
    %v672 = vpack.c.b16 %v488, %v484
    %v673 = vpack.c.b16 %v489, %v485
    %v674 = vpack.c.b16 %v490, %v486
    %v675 = vpack.c.b16 %v495, %v491
    %v676 = vpack.c.b16 %v496, %v492
    %v677 = vpack.c.b16 %v497, %v493
    %v678 = vpack.c.b16 %v498, %v494
    %v679 = vpack.c.b16 %v503, %v499
    %v680 = vpack.c.b16 %v504, %v500
    %v681 = vpack.c.b16 %v505, %v501
    %v682 = vpack.c.b16 %v506, %v502
    %v683 = vpack.c.b16 %v511, %v507
    %v684 = vpack.c.b16 %v512, %v508
    %v685 = vpack.c.b16 %v513, %v509
    %v686 = vpack.c.b16 %v514, %v510
    %v687 = vpack.c.b16 %v519, %v515
    %v688 = vpack.c.b16 %v520, %v516
    %v689 = vpack.c.b16 %v521, %v517
    %v690 = vpack.c.b16 %v522, %v518
    %v691 = vpack.c.b16 %v527, %v523
    %v692 = vpack.c.b16 %v528, %v524
    %v693 = vpack.c.b16 %v529, %v525
    %v694 = vpack.c.b16 %v530, %v526
    %v695 = vpack.c.b16 %v535, %v531
    %v696 = vpack.c.b16 %v536, %v532
    %v697 = vpack.c.b16 %v537, %v533
    %v698 = vpack.c.b16 %v538, %v534
    %v699 = vpack.c.b16 %v543, %v539
    %v700 = vpack.c.b16 %v544, %v540
    %v701 = vpack.c.b16 %v545, %v541
    %v702 = vpack.c.b16 %v546, %v542
    %v703 = vpack.c.b16 %v551, %v547
    %v704 = vpack.c.b16 %v552, %v548
    %v705 = vpack.c.b16 %v553, %v549
    %v706 = vpack.c.b16 %v554, %v550
    %v707 = vpack.c.b16 %v559, %v555
    %v708 = vpack.c.b16 %v560, %v556
    %v709 = vpack.c.b16 %v561, %v557
    %v710 = vpack.c.b16 %v562, %v558
    %v711 = vpack.c.b16 %v567, %v563
    %v712 = vpack.c.b16 %v568, %v564
    %v713 = vpack.c.b16 %v569, %v565
    %v714 = vpack.c.b16 %v570, %v566
    %v715 = vpack.c.b16 %v575, %v571
    %v716 = vpack.c.b16 %v576, %v572
    %v717 = vpack.c.b16 %v577, %v573
    %v718 = vpack.c.b16 %v578, %v574
    %v719 = vpack.c.b16 %v583, %v579
    %v720 = vpack.c.b16 %v584, %v580
    %v721 = vpack.c.b16 %v585, %v581
    %v722 = vpack.c.b16 %v586, %v582
    %v723 = vpack.c.b16 %v591, %v587
    %v724 = vpack.c.b16 %v592, %v588
    %v725 = vpack.c.b16 %v593, %v589
    %v726 = vpack.c.b16 %v594, %v590
    %v727 = vpack.c.b16 %v599, %v595
    %v728 = vpack.c.b16 %v600, %v596
    %v729 = vpack.c.b16 %v601, %v597
    %v730 = vpack.c.b16 %v602, %v598
    %859 = vmatprep.subr.bf16.mxu0 %v604
    %860 = vmatpush1.bf16.msra.mxu0 %v603
    %861 = vmatprep.subr.bf16.mxu0 %v608
    %862 = vmatpush1.bf16.msra.mxu0 %v607
    %863 = vmatprep.subr.bf16.mxu0 %v612
    %864 = vmatpush1.bf16.msra.mxu0 %v611
    %865 = vmatprep.subr.bf16.mxu0 %v616
    %866 = vmatpush1.bf16.msra.mxu0 %v615
    %867 = vmatprep.subr.bf16.mxu0 %v620
    %868 = vmatpush1.bf16.msra.mxu0 %v619
    %869 = vmatprep.subr.bf16.mxu0 %v624
    %870 = vmatpush1.bf16.msra.mxu0 %v623
    %871 = vmatprep.subr.bf16.mxu0 %v628
    %872 = vmatpush1.bf16.msra.mxu0 %v627
    %873 = vmatprep.subr.bf16.mxu0 %v632
    %874 = vmatpush1.bf16.msra.mxu0 %v631
    %875 = vmatprep.subr.bf16.mxu0 %v636
    %876 = vmatpush1.bf16.msra.mxu0 %v635
    %877 = vmatprep.subr.bf16.mxu0 %v640
    %878 = vmatpush1.bf16.msra.mxu0 %v639
    %879 = vmatprep.subr.bf16.mxu0 %v644
    %880 = vmatpush1.bf16.msra.mxu0 %v643
    %881 = vmatprep.subr.bf16.mxu0 %v648
    %882 = vmatpush1.bf16.msra.mxu0 %v647
    %883 = vmatprep.subr.bf16.mxu0 %v652
    %884 = vmatpush1.bf16.msra.mxu0 %v651
    %885 = vmatprep.subr.bf16.mxu0 %v656
    %886 = vmatpush1.bf16.msra.mxu0 %v655
    %887 = vmatprep.subr.bf16.mxu0 %v660
    %888 = vmatpush1.bf16.msra.mxu0 %v659
    %889 = vmatprep.subr.bf16.mxu0 %v664
    %890 = vmatpush1.bf16.msra.mxu0 %v663
    %891 = vmatprep.mubr.bf16.mxu0 %v212
    %892 = vmatmul.mubr.bf16.gmra.mrb[0].mxu0 %v211
    %v893 = vpop.f32.mrb[0].mxu0
    %v894 = vadd.f32 0.0, %v893
    %v895 = vpop.f32.mrb[0].mxu0
    %v896 = vadd.f32 0.0, %v895
    %v897 = vpop.f32.mrb[0].mxu0
    %v898 = vpop.f32.mrb[0].mxu0
    %899 = vdwg.mxu0
    %900 = vmatprep.subr.bf16.mxu0 %v668
    %901 = vmatpush1.bf16.msra.mxu0 %v667
    %902 = vmatprep.subr.bf16.mxu0 %v672
    %903 = vmatpush1.bf16.msra.mxu0 %v671
    %904 = vmatprep.subr.bf16.mxu0 %v676
    %905 = vmatpush1.bf16.msra.mxu0 %v675
    %906 = vmatprep.subr.bf16.mxu0 %v680
    %907 = vmatpush1.bf16.msra.mxu0 %v679
    %908 = vmatprep.subr.bf16.mxu0 %v684
    %909 = vmatpush1.bf16.msra.mxu0 %v683
    %910 = vmatprep.subr.bf16.mxu0 %v688
    %911 = vmatpush1.bf16.msra.mxu0 %v687
    %912 = vmatprep.subr.bf16.mxu0 %v692
    %913 = vmatpush1.bf16.msra.mxu0 %v691
    %914 = vmatprep.subr.bf16.mxu0 %v696
    %915 = vmatpush1.bf16.msra.mxu0 %v695
    %916 = vmatprep.subr.bf16.mxu0 %v700
    %917 = vmatpush1.bf16.msra.mxu0 %v699
    %918 = vmatprep.subr.bf16.mxu0 %v704
    %919 = vmatpush1.bf16.msra.mxu0 %v703
    %920 = vmatprep.subr.bf16.mxu0 %v708
    %921 = vmatpush1.bf16.msra.mxu0 %v707
    %922 = vmatprep.subr.bf16.mxu0 %v712
    %923 = vmatpush1.bf16.msra.mxu0 %v711
    %924 = vmatprep.subr.bf16.mxu0 %v716
    %925 = vmatpush1.bf16.msra.mxu0 %v715
    %926 = vmatprep.subr.bf16.mxu0 %v720
    %927 = vmatpush1.bf16.msra.mxu0 %v719
    %928 = vmatprep.subr.bf16.mxu0 %v724
    %929 = vmatpush1.bf16.msra.mxu0 %v723
    %930 = vmatprep.subr.bf16.mxu0 %v728
    %931 = vmatpush1.bf16.msra.mxu0 %v727
    %932 = vmatprep.mubr.bf16.mxu0 %v214
    %933 = vmatmul.mubr.bf16.gmra.mrb[0].mxu0 %v213
    %v934 = vpop.f32.mrb[0].mxu0
    %v935 = vadd.f32 %v894, %v934
    %v936 = vpop.f32.mrb[0].mxu0
    %v937 = vadd.f32 %v896, %v936
    %v938 = vpop.f32.mrb[0].mxu0
    %v939 = vpop.f32.mrb[0].mxu0
    %940 = vdwg.mxu0
    %941 = vmatprep.subr.bf16.mxu0 %v606
    %942 = vmatpush1.bf16.msra.mxu0 %v605
    %943 = vmatprep.subr.bf16.mxu0 %v610
    %944 = vmatpush1.bf16.msra.mxu0 %v609
    %945 = vmatprep.subr.bf16.mxu0 %v614
    %946 = vmatpush1.bf16.msra.mxu0 %v613
    %947 = vmatprep.subr.bf16.mxu0 %v618
    %948 = vmatpush1.bf16.msra.mxu0 %v617
    %949 = vmatprep.subr.bf16.mxu0 %v622
    %950 = vmatpush1.bf16.msra.mxu0 %v621
    %951 = vmatprep.subr.bf16.mxu0 %v626
    %952 = vmatpush1.bf16.msra.mxu0 %v625
    %953 = vmatprep.subr.bf16.mxu0 %v630
    %954 = vmatpush1.bf16.msra.mxu0 %v629
    %955 = vmatprep.subr.bf16.mxu0 %v634
    %956 = vmatpush1.bf16.msra.mxu0 %v633
    %957 = vmatprep.subr.bf16.mxu0 %v638
    %958 = vmatpush1.bf16.msra.mxu0 %v637
    %959 = vmatprep.subr.bf16.mxu0 %v642
    %960 = vmatpush1.bf16.msra.mxu0 %v641
    %961 = vmatprep.subr.bf16.mxu0 %v646
    %962 = vmatpush1.bf16.msra.mxu0 %v645
    %963 = vmatprep.subr.bf16.mxu0 %v650
    %964 = vmatpush1.bf16.msra.mxu0 %v649
    %965 = vmatprep.subr.bf16.mxu0 %v654
    %966 = vmatpush1.bf16.msra.mxu0 %v653
    %967 = vmatprep.subr.bf16.mxu0 %v658
    %968 = vmatpush1.bf16.msra.mxu0 %v657
    %969 = vmatprep.subr.bf16.mxu0 %v662
    %970 = vmatpush1.bf16.msra.mxu0 %v661
    %971 = vmatprep.subr.bf16.mxu0 %v666
    %972 = vmatpush1.bf16.msra.mxu0 %v665
    %973 = vmatprep.mubr.bf16.mxu0 %v212
    %974 = vmatmul.mubr.bf16.gmra.mrb[0].mxu0 %v211
    %v975 = vpop.f32.mrb[0].mxu0
    %v976 = vadd.f32 0.0, %v975
    %v977 = vpop.f32.mrb[0].mxu0
    %v978 = vadd.f32 0.0, %v977
    %v979 = vpop.f32.mrb[0].mxu0
    %v980 = vpop.f32.mrb[0].mxu0
    %981 = vdwg.mxu0
    %982 = vmatprep.subr.bf16.mxu0 %v670
    %983 = vmatpush1.bf16.msra.mxu0 %v669
    %984 = vmatprep.subr.bf16.mxu0 %v674
    %985 = vmatpush1.bf16.msra.mxu0 %v673
    %986 = vmatprep.subr.bf16.mxu0 %v678
    %987 = vmatpush1.bf16.msra.mxu0 %v677
    %988 = vmatprep.subr.bf16.mxu0 %v682
    %989 = vmatpush1.bf16.msra.mxu0 %v681
    %990 = vmatprep.subr.bf16.mxu0 %v686
    %991 = vmatpush1.bf16.msra.mxu0 %v685
    %992 = vmatprep.subr.bf16.mxu0 %v690
    %993 = vmatpush1.bf16.msra.mxu0 %v689
    %994 = vmatprep.subr.bf16.mxu0 %v694
    %995 = vmatpush1.bf16.msra.mxu0 %v693
    %996 = vmatprep.subr.bf16.mxu0 %v698
    %997 = vmatpush1.bf16.msra.mxu0 %v697
    %998 = vmatprep.subr.bf16.mxu0 %v702
    %999 = vmatpush1.bf16.msra.mxu0 %v701
    %1000 = vmatprep.subr.bf16.mxu0 %v706
    %1001 = vmatpush1.bf16.msra.mxu0 %v705
    %1002 = vmatprep.subr.bf16.mxu0 %v710
    %1003 = vmatpush1.bf16.msra.mxu0 %v709
    %1004 = vmatprep.subr.bf16.mxu0 %v714
    %1005 = vmatpush1.bf16.msra.mxu0 %v713
    %1006 = vmatprep.subr.bf16.mxu0 %v718
    %1007 = vmatpush1.bf16.msra.mxu0 %v717
    %1008 = vmatprep.subr.bf16.mxu0 %v722
    %1009 = vmatpush1.bf16.msra.mxu0 %v721
    %1010 = vmatprep.subr.bf16.mxu0 %v726
    %1011 = vmatpush1.bf16.msra.mxu0 %v725
    %1012 = vmatprep.subr.bf16.mxu0 %v730
    %1013 = vmatpush1.bf16.msra.mxu0 %v729
    %1014 = vmatprep.mubr.bf16.mxu0 %v214
    %1015 = vmatmul.mubr.bf16.gmra.mrb[0].mxu0 %v213
    %v1016 = vpop.f32.mrb[0].mxu0
    %v1017 = vadd.f32 %v976, %v1016
    %v1018 = vpop.f32.mrb[0].mxu0
    %v1019 = vadd.f32 %v978, %v1018
    %v1020 = vpop.f32.mrb[0].mxu0
    %v1021 = vpop.f32.mrb[0].mxu0
    %1022 = vdwg.mxu0
    %v1023 = vld [vmem:[%s1] sm:$0xff]
    %v1024 = vld [vmem:[%s1 + $0x8] sm:$0xff]
    %v1025 = vld [vmem:[%s1 + $0x10] sm:$0xff]
    %v1026 = vld [vmem:[%s1 + $0x18] sm:$0xff]
    %v1027 = vld [vmem:[%s1 + $0x20] sm:$0xff]
    %v1028 = vld [vmem:[%s1 + $0x28] sm:$0xff]
    %v1029 = vld [vmem:[%s1 + $0x30] sm:$0xff]
    %v1030 = vld [vmem:[%s1 + $0x38] sm:$0xff]
    %v1031 = vld [vmem:[%s1 + $0x40] sm:$0xff]
    %v1032 = vld [vmem:[%s1 + $0x48] sm:$0xff]
    %v1033 = vld [vmem:[%s1 + $0x50] sm:$0xff]
    %v1034 = vld [vmem:[%s1 + $0x58] sm:$0xff]
    %v1035 = vld [vmem:[%s1 + $0x60] sm:$0xff]
    %v1036 = vld [vmem:[%s1 + $0x68] sm:$0xff]
    %v1037 = vld [vmem:[%s1 + $0x70] sm:$0xff]
    %v1038 = vld [vmem:[%s1 + $0x78] sm:$0xff]
    %v1039 = vld [vmem:[%s1 + $0x80] sm:$0xff]
    %v1040 = vld [vmem:[%s1 + $0x88] sm:$0xff]
    %v1041 = vld [vmem:[%s1 + $0x90] sm:$0xff]
    %v1042 = vld [vmem:[%s1 + $0x98] sm:$0xff]
    %v1043 = vld [vmem:[%s1 + $0xa0] sm:$0xff]
    %v1044 = vld [vmem:[%s1 + $0xa8] sm:$0xff]
    %v1045 = vld [vmem:[%s1 + $0xb0] sm:$0xff]
    %v1046 = vld [vmem:[%s1 + $0xb8] sm:$0xff]
    %v1047 = vld [vmem:[%s1 + $0xc0] sm:$0xff]
    %v1048 = vld [vmem:[%s1 + $0xc8] sm:$0xff]
    %v1049 = vld [vmem:[%s1 + $0xd0] sm:$0xff]
    %v1050 = vld [vmem:[%s1 + $0xd8] sm:$0xff]
    %v1051 = vld [vmem:[%s1 + $0xe0] sm:$0xff]
    %v1052 = vld [vmem:[%s1 + $0xe8] sm:$0xff]
    %v1053 = vld [vmem:[%s1 + $0xf0] sm:$0xff]
    %v1054 = vld [vmem:[%s1 + $0xf8] sm:$0xff]
    %v1055 = vld [vmem:[%s1 + $0x100] sm:$0xff]
    %v1056 = vld [vmem:[%s1 + $0x108] sm:$0xff]
    %v1057 = vld [vmem:[%s1 + $0x110] sm:$0xff]
    %v1058 = vld [vmem:[%s1 + $0x118] sm:$0xff]
    %v1059 = vld [vmem:[%s1 + $0x120] sm:$0xff]
    %v1060 = vld [vmem:[%s1 + $0x128] sm:$0xff]
    %v1061 = vld [vmem:[%s1 + $0x130] sm:$0xff]
    %v1062 = vld [vmem:[%s1 + $0x138] sm:$0xff]
    %v1063 = vld [vmem:[%s1 + $0x140] sm:$0xff]
    %v1064 = vld [vmem:[%s1 + $0x148] sm:$0xff]
    %v1065 = vld [vmem:[%s1 + $0x150] sm:$0xff]
    %v1066 = vld [vmem:[%s1 + $0x158] sm:$0xff]
    %v1067 = vld [vmem:[%s1 + $0x160] sm:$0xff]
    %v1068 = vld [vmem:[%s1 + $0x168] sm:$0xff]
    %v1069 = vld [vmem:[%s1 + $0x170] sm:$0xff]
    %v1070 = vld [vmem:[%s1 + $0x178] sm:$0xff]
    %v1071 = vld [vmem:[%s1 + $0x180] sm:$0xff]
    %v1072 = vld [vmem:[%s1 + $0x188] sm:$0xff]
    %v1073 = vld [vmem:[%s1 + $0x190] sm:$0xff]
    %v1074 = vld [vmem:[%s1 + $0x198] sm:$0xff]
    %v1075 = vld [vmem:[%s1 + $0x1a0] sm:$0xff]
    %v1076 = vld [vmem:[%s1 + $0x1a8] sm:$0xff]
    %v1077 = vld [vmem:[%s1 + $0x1b0] sm:$0xff]
    %v1078 = vld [vmem:[%s1 + $0x1b8] sm:$0xff]
    %v1079 = vld [vmem:[%s1 + $0x1c0] sm:$0xff]
    %v1080 = vld [vmem:[%s1 + $0x1c8] sm:$0xff]
    %v1081 = vld [vmem:[%s1 + $0x1d0] sm:$0xff]
    %v1082 = vld [vmem:[%s1 + $0x1d8] sm:$0xff]
    %v1083 = vld [vmem:[%s1 + $0x1e0] sm:$0xff]
    %v1084 = vld [vmem:[%s1 + $0x1e8] sm:$0xff]
    %v1085 = vld [vmem:[%s1 + $0x1f0] sm:$0xff]
    %v1086 = vld [vmem:[%s1 + $0x1f8] sm:$0xff]
    %v1087 = vld [vmem:[%s1 + $0x200] sm:$0xff]
    %v1088 = vld [vmem:[%s1 + $0x208] sm:$0xff]
    %v1089 = vld [vmem:[%s1 + $0x210] sm:$0xff]
    %v1090 = vld [vmem:[%s1 + $0x218] sm:$0xff]
    %v1091 = vld [vmem:[%s1 + $0x220] sm:$0xff]
    %v1092 = vld [vmem:[%s1 + $0x228] sm:$0xff]
    %v1093 = vld [vmem:[%s1 + $0x230] sm:$0xff]
    %v1094 = vld [vmem:[%s1 + $0x238] sm:$0xff]
    %v1095 = vld [vmem:[%s1 + $0x240] sm:$0xff]
    %v1096 = vld [vmem:[%s1 + $0x248] sm:$0xff]
    %v1097 = vld [vmem:[%s1 + $0x250] sm:$0xff]
    %v1098 = vld [vmem:[%s1 + $0x258] sm:$0xff]
    %v1099 = vld [vmem:[%s1 + $0x260] sm:$0xff]
    %v1100 = vld [vmem:[%s1 + $0x268] sm:$0xff]
    %v1101 = vld [vmem:[%s1 + $0x270] sm:$0xff]
    %v1102 = vld [vmem:[%s1 + $0x278] sm:$0xff]
    %v1103 = vld [vmem:[%s1 + $0x280] sm:$0xff]
    %v1104 = vld [vmem:[%s1 + $0x288] sm:$0xff]
    %v1105 = vld [vmem:[%s1 + $0x290] sm:$0xff]
    %v1106 = vld [vmem:[%s1 + $0x298] sm:$0xff]
    %v1107 = vld [vmem:[%s1 + $0x2a0] sm:$0xff]
    %v1108 = vld [vmem:[%s1 + $0x2a8] sm:$0xff]
    %v1109 = vld [vmem:[%s1 + $0x2b0] sm:$0xff]
    %v1110 = vld [vmem:[%s1 + $0x2b8] sm:$0xff]
    %v1111 = vld [vmem:[%s1 + $0x2c0] sm:$0xff]
    %v1112 = vld [vmem:[%s1 + $0x2c8] sm:$0xff]
    %v1113 = vld [vmem:[%s1 + $0x2d0] sm:$0xff]
    %v1114 = vld [vmem:[%s1 + $0x2d8] sm:$0xff]
    %v1115 = vld [vmem:[%s1 + $0x2e0] sm:$0xff]
    %v1116 = vld [vmem:[%s1 + $0x2e8] sm:$0xff]
    %v1117 = vld [vmem:[%s1 + $0x2f0] sm:$0xff]
    %v1118 = vld [vmem:[%s1 + $0x2f8] sm:$0xff]
    %v1119 = vld [vmem:[%s1 + $0x300] sm:$0xff]
    %v1120 = vld [vmem:[%s1 + $0x308] sm:$0xff]
    %v1121 = vld [vmem:[%s1 + $0x310] sm:$0xff]
    %v1122 = vld [vmem:[%s1 + $0x318] sm:$0xff]
    %v1123 = vld [vmem:[%s1 + $0x320] sm:$0xff]
    %v1124 = vld [vmem:[%s1 + $0x328] sm:$0xff]
    %v1125 = vld [vmem:[%s1 + $0x330] sm:$0xff]
    %v1126 = vld [vmem:[%s1 + $0x338] sm:$0xff]
    %v1127 = vld [vmem:[%s1 + $0x340] sm:$0xff]
    %v1128 = vld [vmem:[%s1 + $0x348] sm:$0xff]
    %v1129 = vld [vmem:[%s1 + $0x350] sm:$0xff]
    %v1130 = vld [vmem:[%s1 + $0x358] sm:$0xff]
    %v1131 = vld [vmem:[%s1 + $0x360] sm:$0xff]
    %v1132 = vld [vmem:[%s1 + $0x368] sm:$0xff]
    %v1133 = vld [vmem:[%s1 + $0x370] sm:$0xff]
    %v1134 = vld [vmem:[%s1 + $0x378] sm:$0xff]
    %v1135 = vld [vmem:[%s1 + $0x380] sm:$0xff]
    %v1136 = vld [vmem:[%s1 + $0x388] sm:$0xff]
    %v1137 = vld [vmem:[%s1 + $0x390] sm:$0xff]
    %v1138 = vld [vmem:[%s1 + $0x398] sm:$0xff]
    %v1139 = vld [vmem:[%s1 + $0x3a0] sm:$0xff]
    %v1140 = vld [vmem:[%s1 + $0x3a8] sm:$0xff]
    %v1141 = vld [vmem:[%s1 + $0x3b0] sm:$0xff]
    %v1142 = vld [vmem:[%s1 + $0x3b8] sm:$0xff]
    %v1143 = vld [vmem:[%s1 + $0x3c0] sm:$0xff]
    %v1144 = vld [vmem:[%s1 + $0x3c8] sm:$0xff]
    %v1145 = vld [vmem:[%s1 + $0x3d0] sm:$0xff]
    %v1146 = vld [vmem:[%s1 + $0x3d8] sm:$0xff]
    %v1147 = vld [vmem:[%s1 + $0x3e0] sm:$0xff]
    %v1148 = vld [vmem:[%s1 + $0x3e8] sm:$0xff]
    %v1149 = vld [vmem:[%s1 + $0x3f0] sm:$0xff]
    %v1150 = vld [vmem:[%s1 + $0x3f8] sm:$0xff]
    %v1165 = vunpack.c.l.b16 %v61
    %v1166 = vunpack.c.h.b16 %v61
    %v1167 = vunpack.c.l.b16 %v62
    %v1168 = vunpack.c.h.b16 %v62
    %v1169 = vunpack.c.l.b16 %v63
    %v1170 = vunpack.c.h.b16 %v63
    %v1171 = vunpack.c.l.b16 %v64
    %v1172 = vunpack.c.h.b16 %v64
    %v1173 = vunpack.c.l.b16 %v65
    %v1174 = vunpack.c.h.b16 %v65
    %v1175 = vunpack.c.l.b16 %v66
    %v1176 = vunpack.c.h.b16 %v66
    %v1177 = vunpack.c.l.b16 %v67
    %v1178 = vunpack.c.h.b16 %v67
    %v1179 = vunpack.c.l.b16 %v68
    %v1180 = vunpack.c.h.b16 %v68
    %v1181 = vunpack.c.l.b16 %v69
    %v1182 = vunpack.c.h.b16 %v69
    %v1183 = vunpack.c.l.b16 %v70
    %v1184 = vunpack.c.h.b16 %v70
    %v1185 = vunpack.c.l.b16 %v71
    %v1186 = vunpack.c.h.b16 %v71
    %v1187 = vunpack.c.l.b16 %v72
    %v1188 = vunpack.c.h.b16 %v72
    %v1189 = vunpack.c.l.b16 %v73
    %v1190 = vunpack.c.h.b16 %v73
    %v1191 = vunpack.c.l.b16 %v74
    %v1192 = vunpack.c.h.b16 %v74
    %v1193 = vpack.c.b16 %v1169, %v1165
    %v1194 = vpack.c.b16 %v1170, %v1166
    %v1195 = vpack.c.b16 %v1171, %v1167
    %v1196 = vpack.c.b16 %v1172, %v1168
    %v1197 = vpack.c.b16 %v1177, %v1173
    %v1198 = vpack.c.b16 %v1178, %v1174
    %v1199 = vpack.c.b16 %v1179, %v1175
    %v1200 = vpack.c.b16 %v1180, %v1176
    %v1201 = vpack.c.b16 %v1185, %v1181
    %v1202 = vpack.c.b16 %v1186, %v1182
    %v1203 = vpack.c.b16 %v1187, %v1183
    %v1204 = vpack.c.b16 %v1188, %v1184
    %v1205 = vpack.c.b16 %v1189, %v1189
    %v1206 = vpack.c.b16 %v1190, %v1190
    %v1207 = vpack.c.b16 %v1191, %v1191
    %v1208 = vpack.c.b16 %v1192, %v1192
    %v1353 = vunpack.c.l.b16 %v1023
    %v1354 = vunpack.c.h.b16 %v1023
    %v1355 = vunpack.c.l.b16 %v1024
    %v1356 = vunpack.c.h.b16 %v1024
    %v1357 = vunpack.c.l.b16 %v1025
    %v1358 = vunpack.c.h.b16 %v1025
    %v1359 = vunpack.c.l.b16 %v1026
    %v1360 = vunpack.c.h.b16 %v1026
    %v1361 = vunpack.c.l.b16 %v1027
    %v1362 = vunpack.c.h.b16 %v1027
    %v1363 = vunpack.c.l.b16 %v1028
    %v1364 = vunpack.c.h.b16 %v1028
    %v1365 = vunpack.c.l.b16 %v1029
    %v1366 = vunpack.c.h.b16 %v1029
    %v1367 = vunpack.c.l.b16 %v1030
    %v1368 = vunpack.c.h.b16 %v1030
    %v1369 = vunpack.c.l.b16 %v1031
    %v1370 = vunpack.c.h.b16 %v1031
    %v1371 = vunpack.c.l.b16 %v1032
    %v1372 = vunpack.c.h.b16 %v1032
    %v1373 = vunpack.c.l.b16 %v1033
    %v1374 = vunpack.c.h.b16 %v1033
    %v1375 = vunpack.c.l.b16 %v1034
    %v1376 = vunpack.c.h.b16 %v1034
    %v1377 = vunpack.c.l.b16 %v1035
    %v1378 = vunpack.c.h.b16 %v1035
    %v1379 = vunpack.c.l.b16 %v1036
    %v1380 = vunpack.c.h.b16 %v1036
    %v1381 = vunpack.c.l.b16 %v1037
    %v1382 = vunpack.c.h.b16 %v1037
    %v1383 = vunpack.c.l.b16 %v1038
    %v1384 = vunpack.c.h.b16 %v1038
    %v1385 = vunpack.c.l.b16 %v1039
    %v1386 = vunpack.c.h.b16 %v1039
    %v1387 = vunpack.c.l.b16 %v1040
    %v1388 = vunpack.c.h.b16 %v1040
    %v1389 = vunpack.c.l.b16 %v1041
    %v1390 = vunpack.c.h.b16 %v1041
    %v1391 = vunpack.c.l.b16 %v1042
    %v1392 = vunpack.c.h.b16 %v1042
    %v1393 = vunpack.c.l.b16 %v1043
    %v1394 = vunpack.c.h.b16 %v1043
    %v1395 = vunpack.c.l.b16 %v1044
    %v1396 = vunpack.c.h.b16 %v1044
    %v1397 = vunpack.c.l.b16 %v1045
    %v1398 = vunpack.c.h.b16 %v1045
    %v1399 = vunpack.c.l.b16 %v1046
    %v1400 = vunpack.c.h.b16 %v1046
    %v1401 = vunpack.c.l.b16 %v1047
    %v1402 = vunpack.c.h.b16 %v1047
    %v1403 = vunpack.c.l.b16 %v1048
    %v1404 = vunpack.c.h.b16 %v1048
    %v1405 = vunpack.c.l.b16 %v1049
    %v1406 = vunpack.c.h.b16 %v1049
    %v1407 = vunpack.c.l.b16 %v1050
    %v1408 = vunpack.c.h.b16 %v1050
    %v1409 = vunpack.c.l.b16 %v1051
    %v1410 = vunpack.c.h.b16 %v1051
    %v1411 = vunpack.c.l.b16 %v1052
    %v1412 = vunpack.c.h.b16 %v1052
    %v1413 = vunpack.c.l.b16 %v1053
    %v1414 = vunpack.c.h.b16 %v1053
    %v1415 = vunpack.c.l.b16 %v1054
    %v1416 = vunpack.c.h.b16 %v1054
    %v1417 = vunpack.c.l.b16 %v1055
    %v1418 = vunpack.c.h.b16 %v1055
    %v1419 = vunpack.c.l.b16 %v1056
    %v1420 = vunpack.c.h.b16 %v1056
    %v1421 = vunpack.c.l.b16 %v1057
    %v1422 = vunpack.c.h.b16 %v1057
    %v1423 = vunpack.c.l.b16 %v1058
    %v1424 = vunpack.c.h.b16 %v1058
    %v1425 = vunpack.c.l.b16 %v1059
    %v1426 = vunpack.c.h.b16 %v1059
    %v1427 = vunpack.c.l.b16 %v1060
    %v1428 = vunpack.c.h.b16 %v1060
    %v1429 = vunpack.c.l.b16 %v1061
    %v1430 = vunpack.c.h.b16 %v1061
    %v1431 = vunpack.c.l.b16 %v1062
    %v1432 = vunpack.c.h.b16 %v1062
    %v1433 = vunpack.c.l.b16 %v1063
    %v1434 = vunpack.c.h.b16 %v1063
    %v1435 = vunpack.c.l.b16 %v1064
    %v1436 = vunpack.c.h.b16 %v1064
    %v1437 = vunpack.c.l.b16 %v1065
    %v1438 = vunpack.c.h.b16 %v1065
    %v1439 = vunpack.c.l.b16 %v1066
    %v1440 = vunpack.c.h.b16 %v1066
    %v1441 = vunpack.c.l.b16 %v1067
    %v1442 = vunpack.c.h.b16 %v1067
    %v1443 = vunpack.c.l.b16 %v1068
    %v1444 = vunpack.c.h.b16 %v1068
    %v1445 = vunpack.c.l.b16 %v1069
    %v1446 = vunpack.c.h.b16 %v1069
    %v1447 = vunpack.c.l.b16 %v1070
    %v1448 = vunpack.c.h.b16 %v1070
    %v1449 = vunpack.c.l.b16 %v1071
    %v1450 = vunpack.c.h.b16 %v1071
    %v1451 = vunpack.c.l.b16 %v1072
    %v1452 = vunpack.c.h.b16 %v1072
    %v1453 = vunpack.c.l.b16 %v1073
    %v1454 = vunpack.c.h.b16 %v1073
    %v1455 = vunpack.c.l.b16 %v1074
    %v1456 = vunpack.c.h.b16 %v1074
    %v1457 = vunpack.c.l.b16 %v1075
    %v1458 = vunpack.c.h.b16 %v1075
    %v1459 = vunpack.c.l.b16 %v1076
    %v1460 = vunpack.c.h.b16 %v1076
    %v1461 = vunpack.c.l.b16 %v1077
    %v1462 = vunpack.c.h.b16 %v1077
    %v1463 = vunpack.c.l.b16 %v1078
    %v1464 = vunpack.c.h.b16 %v1078
    %v1465 = vunpack.c.l.b16 %v1079
    %v1466 = vunpack.c.h.b16 %v1079
    %v1467 = vunpack.c.l.b16 %v1080
    %v1468 = vunpack.c.h.b16 %v1080
    %v1469 = vunpack.c.l.b16 %v1081
    %v1470 = vunpack.c.h.b16 %v1081
    %v1471 = vunpack.c.l.b16 %v1082
    %v1472 = vunpack.c.h.b16 %v1082
    %v1473 = vunpack.c.l.b16 %v1083
    %v1474 = vunpack.c.h.b16 %v1083
    %v1475 = vunpack.c.l.b16 %v1084
    %v1476 = vunpack.c.h.b16 %v1084
    %v1477 = vunpack.c.l.b16 %v1085
    %v1478 = vunpack.c.h.b16 %v1085
    %v1479 = vunpack.c.l.b16 %v1086
    %v1480 = vunpack.c.h.b16 %v1086
    %v1481 = vunpack.c.l.b16 %v1087
    %v1482 = vunpack.c.h.b16 %v1087
    %v1483 = vunpack.c.l.b16 %v1088
    %v1484 = vunpack.c.h.b16 %v1088
    %v1485 = vunpack.c.l.b16 %v1089
    %v1486 = vunpack.c.h.b16 %v1089
    %v1487 = vunpack.c.l.b16 %v1090
    %v1488 = vunpack.c.h.b16 %v1090
    %v1489 = vunpack.c.l.b16 %v1091
    %v1490 = vunpack.c.h.b16 %v1091
    %v1491 = vunpack.c.l.b16 %v1092
    %v1492 = vunpack.c.h.b16 %v1092
    %v1493 = vunpack.c.l.b16 %v1093
    %v1494 = vunpack.c.h.b16 %v1093
    %v1495 = vunpack.c.l.b16 %v1094
    %v1496 = vunpack.c.h.b16 %v1094
    %v1497 = vunpack.c.l.b16 %v1095
    %v1498 = vunpack.c.h.b16 %v1095
    %v1499 = vunpack.c.l.b16 %v1096
    %v1500 = vunpack.c.h.b16 %v1096
    %v1501 = vunpack.c.l.b16 %v1097
    %v1502 = vunpack.c.h.b16 %v1097
    %v1503 = vunpack.c.l.b16 %v1098
    %v1504 = vunpack.c.h.b16 %v1098
    %v1505 = vunpack.c.l.b16 %v1099
    %v1506 = vunpack.c.h.b16 %v1099
    %v1507 = vunpack.c.l.b16 %v1100
    %v1508 = vunpack.c.h.b16 %v1100
    %v1509 = vunpack.c.l.b16 %v1101
    %v1510 = vunpack.c.h.b16 %v1101
    %v1511 = vunpack.c.l.b16 %v1102
    %v1512 = vunpack.c.h.b16 %v1102
    %v1513 = vunpack.c.l.b16 %v1103
    %v1514 = vunpack.c.h.b16 %v1103
    %v1515 = vunpack.c.l.b16 %v1104
    %v1516 = vunpack.c.h.b16 %v1104
    %v1517 = vunpack.c.l.b16 %v1105
    %v1518 = vunpack.c.h.b16 %v1105
    %v1519 = vunpack.c.l.b16 %v1106
    %v1520 = vunpack.c.h.b16 %v1106
    %v1521 = vunpack.c.l.b16 %v1107
    %v1522 = vunpack.c.h.b16 %v1107
    %v1523 = vunpack.c.l.b16 %v1108
    %v1524 = vunpack.c.h.b16 %v1108
    %v1525 = vunpack.c.l.b16 %v1109
    %v1526 = vunpack.c.h.b16 %v1109
    %v1527 = vunpack.c.l.b16 %v1110
    %v1528 = vunpack.c.h.b16 %v1110
    %v1529 = vunpack.c.l.b16 %v1111
    %v1530 = vunpack.c.h.b16 %v1111
    %v1531 = vunpack.c.l.b16 %v1112
    %v1532 = vunpack.c.h.b16 %v1112
    %v1533 = vunpack.c.l.b16 %v1113
    %v1534 = vunpack.c.h.b16 %v1113
    %v1535 = vunpack.c.l.b16 %v1114
    %v1536 = vunpack.c.h.b16 %v1114
    %v1537 = vunpack.c.l.b16 %v1115
    %v1538 = vunpack.c.h.b16 %v1115
    %v1539 = vunpack.c.l.b16 %v1116
    %v1540 = vunpack.c.h.b16 %v1116
    %v1541 = vunpack.c.l.b16 %v1117
    %v1542 = vunpack.c.h.b16 %v1117
    %v1543 = vunpack.c.l.b16 %v1118
    %v1544 = vunpack.c.h.b16 %v1118
    %v1545 = vunpack.c.l.b16 %v1119
    %v1546 = vunpack.c.h.b16 %v1119
    %v1547 = vunpack.c.l.b16 %v1120
    %v1548 = vunpack.c.h.b16 %v1120
    %v1549 = vunpack.c.l.b16 %v1121
    %v1550 = vunpack.c.h.b16 %v1121
    %v1551 = vunpack.c.l.b16 %v1122
    %v1552 = vunpack.c.h.b16 %v1122
    %v1553 = vunpack.c.l.b16 %v1123
    %v1554 = vunpack.c.h.b16 %v1123
    %v1555 = vunpack.c.l.b16 %v1124
    %v1556 = vunpack.c.h.b16 %v1124
    %v1557 = vunpack.c.l.b16 %v1125
    %v1558 = vunpack.c.h.b16 %v1125
    %v1559 = vunpack.c.l.b16 %v1126
    %v1560 = vunpack.c.h.b16 %v1126
    %v1561 = vunpack.c.l.b16 %v1127
    %v1562 = vunpack.c.h.b16 %v1127
    %v1563 = vunpack.c.l.b16 %v1128
    %v1564 = vunpack.c.h.b16 %v1128
    %v1565 = vunpack.c.l.b16 %v1129
    %v1566 = vunpack.c.h.b16 %v1129
    %v1567 = vunpack.c.l.b16 %v1130
    %v1568 = vunpack.c.h.b16 %v1130
    %v1569 = vunpack.c.l.b16 %v1131
    %v1570 = vunpack.c.h.b16 %v1131
    %v1571 = vunpack.c.l.b16 %v1132
    %v1572 = vunpack.c.h.b16 %v1132
    %v1573 = vunpack.c.l.b16 %v1133
    %v1574 = vunpack.c.h.b16 %v1133
    %v1575 = vunpack.c.l.b16 %v1134
    %v1576 = vunpack.c.h.b16 %v1134
    %v1577 = vunpack.c.l.b16 %v1135
    %v1578 = vunpack.c.h.b16 %v1135
    %v1579 = vunpack.c.l.b16 %v1136
    %v1580 = vunpack.c.h.b16 %v1136
    %v1581 = vunpack.c.l.b16 %v1137
    %v1582 = vunpack.c.h.b16 %v1137
    %v1583 = vunpack.c.l.b16 %v1138
    %v1584 = vunpack.c.h.b16 %v1138
    %v1585 = vunpack.c.l.b16 %v1139
    %v1586 = vunpack.c.h.b16 %v1139
    %v1587 = vunpack.c.l.b16 %v1140
    %v1588 = vunpack.c.h.b16 %v1140
    %v1589 = vunpack.c.l.b16 %v1141
    %v1590 = vunpack.c.h.b16 %v1141
    %v1591 = vunpack.c.l.b16 %v1142
    %v1592 = vunpack.c.h.b16 %v1142
    %v1593 = vunpack.c.l.b16 %v1143
    %v1594 = vunpack.c.h.b16 %v1143
    %v1595 = vunpack.c.l.b16 %v1144
    %v1596 = vunpack.c.h.b16 %v1144
    %v1597 = vunpack.c.l.b16 %v1145
    %v1598 = vunpack.c.h.b16 %v1145
    %v1599 = vunpack.c.l.b16 %v1146
    %v1600 = vunpack.c.h.b16 %v1146
    %v1601 = vunpack.c.l.b16 %v1147
    %v1602 = vunpack.c.h.b16 %v1147
    %v1603 = vunpack.c.l.b16 %v1148
    %v1604 = vunpack.c.h.b16 %v1148
    %v1605 = vunpack.c.l.b16 %v1149
    %v1606 = vunpack.c.h.b16 %v1149
    %v1607 = vunpack.c.l.b16 %v1150
    %v1608 = vunpack.c.h.b16 %v1150
    %v1609 = vpack.c.b16 %v1357, %v1353
    %v1610 = vpack.c.b16 %v1358, %v1354
    %v1611 = vpack.c.b16 %v1359, %v1355
    %v1612 = vpack.c.b16 %v1360, %v1356
    %v1613 = vpack.c.b16 %v1365, %v1361
    %v1614 = vpack.c.b16 %v1366, %v1362
    %v1615 = vpack.c.b16 %v1367, %v1363
    %v1616 = vpack.c.b16 %v1368, %v1364
    %v1617 = vpack.c.b16 %v1373, %v1369
    %v1618 = vpack.c.b16 %v1374, %v1370
    %v1619 = vpack.c.b16 %v1375, %v1371
    %v1620 = vpack.c.b16 %v1376, %v1372
    %v1621 = vpack.c.b16 %v1381, %v1377
    %v1622 = vpack.c.b16 %v1382, %v1378
    %v1623 = vpack.c.b16 %v1383, %v1379
    %v1624 = vpack.c.b16 %v1384, %v1380
    %v1625 = vpack.c.b16 %v1389, %v1385
    %v1626 = vpack.c.b16 %v1390, %v1386
    %v1627 = vpack.c.b16 %v1391, %v1387
    %v1628 = vpack.c.b16 %v1392, %v1388
    %v1629 = vpack.c.b16 %v1397, %v1393
    %v1630 = vpack.c.b16 %v1398, %v1394
    %v1631 = vpack.c.b16 %v1399, %v1395
    %v1632 = vpack.c.b16 %v1400, %v1396
    %v1633 = vpack.c.b16 %v1405, %v1401
    %v1634 = vpack.c.b16 %v1406, %v1402
    %v1635 = vpack.c.b16 %v1407, %v1403
    %v1636 = vpack.c.b16 %v1408, %v1404
    %v1637 = vpack.c.b16 %v1413, %v1409
    %v1638 = vpack.c.b16 %v1414, %v1410
    %v1639 = vpack.c.b16 %v1415, %v1411
    %v1640 = vpack.c.b16 %v1416, %v1412
    %v1641 = vpack.c.b16 %v1421, %v1417
    %v1642 = vpack.c.b16 %v1422, %v1418
    %v1643 = vpack.c.b16 %v1423, %v1419
    %v1644 = vpack.c.b16 %v1424, %v1420
    %v1645 = vpack.c.b16 %v1429, %v1425
    %v1646 = vpack.c.b16 %v1430, %v1426
    %v1647 = vpack.c.b16 %v1431, %v1427
    %v1648 = vpack.c.b16 %v1432, %v1428
    %v1649 = vpack.c.b16 %v1437, %v1433
    %v1650 = vpack.c.b16 %v1438, %v1434
    %v1651 = vpack.c.b16 %v1439, %v1435
    %v1652 = vpack.c.b16 %v1440, %v1436
    %v1653 = vpack.c.b16 %v1445, %v1441
    %v1654 = vpack.c.b16 %v1446, %v1442
    %v1655 = vpack.c.b16 %v1447, %v1443
    %v1656 = vpack.c.b16 %v1448, %v1444
    %v1657 = vpack.c.b16 %v1453, %v1449
    %v1658 = vpack.c.b16 %v1454, %v1450
    %v1659 = vpack.c.b16 %v1455, %v1451
    %v1660 = vpack.c.b16 %v1456, %v1452
    %v1661 = vpack.c.b16 %v1461, %v1457
    %v1662 = vpack.c.b16 %v1462, %v1458
    %v1663 = vpack.c.b16 %v1463, %v1459
    %v1664 = vpack.c.b16 %v1464, %v1460
    %v1665 = vpack.c.b16 %v1469, %v1465
    %v1666 = vpack.c.b16 %v1470, %v1466
    %v1667 = vpack.c.b16 %v1471, %v1467
    %v1668 = vpack.c.b16 %v1472, %v1468
    %v1669 = vpack.c.b16 %v1477, %v1473
    %v1670 = vpack.c.b16 %v1478, %v1474
    %v1671 = vpack.c.b16 %v1479, %v1475
    %v1672 = vpack.c.b16 %v1480, %v1476
    %v1673 = vpack.c.b16 %v1485, %v1481
    %v1674 = vpack.c.b16 %v1486, %v1482
    %v1675 = vpack.c.b16 %v1487, %v1483
    %v1676 = vpack.c.b16 %v1488, %v1484
    %v1677 = vpack.c.b16 %v1493, %v1489
    %v1678 = vpack.c.b16 %v1494, %v1490
    %v1679 = vpack.c.b16 %v1495, %v1491
    %v1680 = vpack.c.b16 %v1496, %v1492
    %v1681 = vpack.c.b16 %v1501, %v1497
    %v1682 = vpack.c.b16 %v1502, %v1498
    %v1683 = vpack.c.b16 %v1503, %v1499
    %v1684 = vpack.c.b16 %v1504, %v1500
    %v1685 = vpack.c.b16 %v1509, %v1505
    %v1686 = vpack.c.b16 %v1510, %v1506
    %v1687 = vpack.c.b16 %v1511, %v1507
    %v1688 = vpack.c.b16 %v1512, %v1508
    %v1689 = vpack.c.b16 %v1517, %v1513
    %v1690 = vpack.c.b16 %v1518, %v1514
    %v1691 = vpack.c.b16 %v1519, %v1515
    %v1692 = vpack.c.b16 %v1520, %v1516
    %v1693 = vpack.c.b16 %v1525, %v1521
    %v1694 = vpack.c.b16 %v1526, %v1522
    %v1695 = vpack.c.b16 %v1527, %v1523
    %v1696 = vpack.c.b16 %v1528, %v1524
    %v1697 = vpack.c.b16 %v1533, %v1529
    %v1698 = vpack.c.b16 %v1534, %v1530
    %v1699 = vpack.c.b16 %v1535, %v1531
    %v1700 = vpack.c.b16 %v1536, %v1532
    %v1701 = vpack.c.b16 %v1541, %v1537
    %v1702 = vpack.c.b16 %v1542, %v1538
    %v1703 = vpack.c.b16 %v1543, %v1539
    %v1704 = vpack.c.b16 %v1544, %v1540
    %v1705 = vpack.c.b16 %v1549, %v1545
    %v1706 = vpack.c.b16 %v1550, %v1546
    %v1707 = vpack.c.b16 %v1551, %v1547
    %v1708 = vpack.c.b16 %v1552, %v1548
    %v1709 = vpack.c.b16 %v1557, %v1553
    %v1710 = vpack.c.b16 %v1558, %v1554
    %v1711 = vpack.c.b16 %v1559, %v1555
    %v1712 = vpack.c.b16 %v1560, %v1556
    %v1713 = vpack.c.b16 %v1565, %v1561
    %v1714 = vpack.c.b16 %v1566, %v1562
    %v1715 = vpack.c.b16 %v1567, %v1563
    %v1716 = vpack.c.b16 %v1568, %v1564
    %v1717 = vpack.c.b16 %v1573, %v1569
    %v1718 = vpack.c.b16 %v1574, %v1570
    %v1719 = vpack.c.b16 %v1575, %v1571
    %v1720 = vpack.c.b16 %v1576, %v1572
    %v1721 = vpack.c.b16 %v1581, %v1577
    %v1722 = vpack.c.b16 %v1582, %v1578
    %v1723 = vpack.c.b16 %v1583, %v1579
    %v1724 = vpack.c.b16 %v1584, %v1580
    %v1725 = vpack.c.b16 %v1589, %v1585
    %v1726 = vpack.c.b16 %v1590, %v1586
    %v1727 = vpack.c.b16 %v1591, %v1587
    %v1728 = vpack.c.b16 %v1592, %v1588
    %v1729 = vpack.c.b16 %v1597, %v1593
    %v1730 = vpack.c.b16 %v1598, %v1594
    %v1731 = vpack.c.b16 %v1599, %v1595
    %v1732 = vpack.c.b16 %v1600, %v1596
    %v1733 = vpack.c.b16 %v1605, %v1601
    %v1734 = vpack.c.b16 %v1606, %v1602
    %v1735 = vpack.c.b16 %v1607, %v1603
    %v1736 = vpack.c.b16 %v1608, %v1604
    %1865 = vmatprep.subr.bf16.mxu0 %v1610
    %1866 = vmatpush1.bf16.msra.mxu0 %v1609
    %1867 = vmatprep.subr.bf16.mxu0 %v1614
    %1868 = vmatpush1.bf16.msra.mxu0 %v1613
    %1869 = vmatprep.subr.bf16.mxu0 %v1618
    %1870 = vmatpush1.bf16.msra.mxu0 %v1617
    %1871 = vmatprep.subr.bf16.mxu0 %v1622
    %1872 = vmatpush1.bf16.msra.mxu0 %v1621
    %1873 = vmatprep.subr.bf16.mxu0 %v1626
    %1874 = vmatpush1.bf16.msra.mxu0 %v1625
    %1875 = vmatprep.subr.bf16.mxu0 %v1630
    %1876 = vmatpush1.bf16.msra.mxu0 %v1629
    %1877 = vmatprep.subr.bf16.mxu0 %v1634
    %1878 = vmatpush1.bf16.msra.mxu0 %v1633
    %1879 = vmatprep.subr.bf16.mxu0 %v1638
    %1880 = vmatpush1.bf16.msra.mxu0 %v1637
    %1881 = vmatprep.subr.bf16.mxu0 %v1642
    %1882 = vmatpush1.bf16.msra.mxu0 %v1641
    %1883 = vmatprep.subr.bf16.mxu0 %v1646
    %1884 = vmatpush1.bf16.msra.mxu0 %v1645
    %1885 = vmatprep.subr.bf16.mxu0 %v1650
    %1886 = vmatpush1.bf16.msra.mxu0 %v1649
    %1887 = vmatprep.subr.bf16.mxu0 %v1654
    %1888 = vmatpush1.bf16.msra.mxu0 %v1653
    %1889 = vmatprep.subr.bf16.mxu0 %v1658
    %1890 = vmatpush1.bf16.msra.mxu0 %v1657
    %1891 = vmatprep.subr.bf16.mxu0 %v1662
    %1892 = vmatpush1.bf16.msra.mxu0 %v1661
    %1893 = vmatprep.subr.bf16.mxu0 %v1666
    %1894 = vmatpush1.bf16.msra.mxu0 %v1665
    %1895 = vmatprep.subr.bf16.mxu0 %v1670
    %1896 = vmatpush1.bf16.msra.mxu0 %v1669
    %1897 = vmatprep.mubr.bf16.mxu0 %v1194
    %1898 = vmatmul.mubr.bf16.gmra.mrb[0].mxu0 %v1193
    %v1899 = vpop.f32.mrb[0].mxu0
    %v1900 = vadd.f32 0.0, %v1899
    %v1901 = vpop.f32.mrb[0].mxu0
    %v1902 = vadd.f32 0.0, %v1901
    %v1903 = vpop.f32.mrb[0].mxu0
    %v1904 = vadd.f32 0.0, %v1903
    %v1905 = vpop.f32.mrb[0].mxu0
    %v1906 = vadd.f32 0.0, %v1905
    %1907 = vmatprep.mubr.bf16.mxu0 %v1198
    %1908 = vmatmul.mubr.bf16.gmra.mrb[0].mxu0 %v1197
    %v1909 = vpop.f32.mrb[0].mxu0
    %v1910 = vadd.f32 0.0, %v1909
    %v1911 = vpop.f32.mrb[0].mxu0
    %v1912 = vadd.f32 0.0, %v1911
    %v1913 = vpop.f32.mrb[0].mxu0
    %v1914 = vadd.f32 0.0, %v1913
    %v1915 = vpop.f32.mrb[0].mxu0
    %v1916 = vadd.f32 0.0, %v1915
    %1917 = vmatprep.mubr.bf16.mxu0 %v1202
    %1918 = vmatmul.mubr.bf16.gmra.mrb[0].mxu0 %v1201
    %v1919 = vpop.f32.mrb[0].mxu0
    %v1920 = vadd.f32 0.0, %v1919
    %v1921 = vpop.f32.mrb[0].mxu0
    %v1922 = vadd.f32 0.0, %v1921
    %v1923 = vpop.f32.mrb[0].mxu0
    %v1924 = vadd.f32 0.0, %v1923
    %v1925 = vpop.f32.mrb[0].mxu0
    %v1926 = vadd.f32 0.0, %v1925
    %1927 = vmatprep.mubr.bf16.mxu0 %v1206
    %1928 = vmatmul.mubr.bf16.gmra.mrb[0].mxu0 %v1205
    %v1929 = vpop.f32.mrb[0].mxu0
    %v1930 = vadd.f32 0.0, %v1929
    %v1931 = vpop.f32.mrb[0].mxu0
    %v1932 = vadd.f32 0.0, %v1931
    %v1933 = vpop.f32.mrb[0].mxu0
    %v1934 = vpop.f32.mrb[0].mxu0
    %1935 = vdwg.mxu0
    %1936 = vmatprep.subr.bf16.mxu0 %v1674
    %1937 = vmatpush1.bf16.msra.mxu0 %v1673
    %1938 = vmatprep.subr.bf16.mxu0 %v1678
    %1939 = vmatpush1.bf16.msra.mxu0 %v1677
    %1940 = vmatprep.subr.bf16.mxu0 %v1682
    %1941 = vmatpush1.bf16.msra.mxu0 %v1681
    %1942 = vmatprep.subr.bf16.mxu0 %v1686
    %1943 = vmatpush1.bf16.msra.mxu0 %v1685
    %1944 = vmatprep.subr.bf16.mxu0 %v1690
    %1945 = vmatpush1.bf16.msra.mxu0 %v1689
    %1946 = vmatprep.subr.bf16.mxu0 %v1694
    %1947 = vmatpush1.bf16.msra.mxu0 %v1693
    %1948 = vmatprep.subr.bf16.mxu0 %v1698
    %1949 = vmatpush1.bf16.msra.mxu0 %v1697
    %1950 = vmatprep.subr.bf16.mxu0 %v1702
    %1951 = vmatpush1.bf16.msra.mxu0 %v1701
    %1952 = vmatprep.subr.bf16.mxu0 %v1706
    %1953 = vmatpush1.bf16.msra.mxu0 %v1705
    %1954 = vmatprep.subr.bf16.mxu0 %v1710
    %1955 = vmatpush1.bf16.msra.mxu0 %v1709
    %1956 = vmatprep.subr.bf16.mxu0 %v1714
    %1957 = vmatpush1.bf16.msra.mxu0 %v1713
    %1958 = vmatprep.subr.bf16.mxu0 %v1718
    %1959 = vmatpush1.bf16.msra.mxu0 %v1717
    %1960 = vmatprep.subr.bf16.mxu0 %v1722
    %1961 = vmatpush1.bf16.msra.mxu0 %v1721
    %1962 = vmatprep.subr.bf16.mxu0 %v1726
    %1963 = vmatpush1.bf16.msra.mxu0 %v1725
    %1964 = vmatprep.subr.bf16.mxu0 %v1730
    %1965 = vmatpush1.bf16.msra.mxu0 %v1729
    %1966 = vmatprep.subr.bf16.mxu0 %v1734
    %1967 = vmatpush1.bf16.msra.mxu0 %v1733
    %1968 = vmatprep.mubr.bf16.mxu0 %v1196
    %1969 = vmatmul.mubr.bf16.gmra.mrb[0].mxu0 %v1195
    %v1970 = vpop.f32.mrb[0].mxu0
    %v1971 = vadd.f32 %v1900, %v1970
    %v1972 = vpop.f32.mrb[0].mxu0
    %v1973 = vadd.f32 %v1902, %v1972
    %v1974 = vpop.f32.mrb[0].mxu0
    %v1975 = vadd.f32 %v1904, %v1974
    %v1976 = vpop.f32.mrb[0].mxu0
    %v1977 = vadd.f32 %v1906, %v1976
    %1978 = vmatprep.mubr.bf16.mxu0 %v1200
    %1979 = vmatmul.mubr.bf16.gmra.mrb[0].mxu0 %v1199
    %v1980 = vpop.f32.mrb[0].mxu0
    %v1981 = vadd.f32 %v1910, %v1980
    %v1982 = vpop.f32.mrb[0].mxu0
    %v1983 = vadd.f32 %v1912, %v1982
    %v1984 = vpop.f32.mrb[0].mxu0
    %v1985 = vadd.f32 %v1914, %v1984
    %v1986 = vpop.f32.mrb[0].mxu0
    %v1987 = vadd.f32 %v1916, %v1986
    %1988 = vmatprep.mubr.bf16.mxu0 %v1204
    %1989 = vmatmul.mubr.bf16.gmra.mrb[0].mxu0 %v1203
    %v1990 = vpop.f32.mrb[0].mxu0
    %v1991 = vadd.f32 %v1920, %v1990
    %v1992 = vpop.f32.mrb[0].mxu0
    %v1993 = vadd.f32 %v1922, %v1992
    %v1994 = vpop.f32.mrb[0].mxu0
    %v1995 = vadd.f32 %v1924, %v1994
    %v1996 = vpop.f32.mrb[0].mxu0
    %v1997 = vadd.f32 %v1926, %v1996
    %1998 = vmatprep.mubr.bf16.mxu0 %v1208
    %1999 = vmatmul.mubr.bf16.gmra.mrb[0].mxu0 %v1207
    %v2000 = vpop.f32.mrb[0].mxu0
    %v2001 = vadd.f32 %v1930, %v2000
    %v2002 = vpop.f32.mrb[0].mxu0
    %v2003 = vadd.f32 %v1932, %v2002
    %v2004 = vpop.f32.mrb[0].mxu0
    %v2005 = vpop.f32.mrb[0].mxu0
    %2006 = vdwg.mxu0
    %2007 = vmatprep.subr.bf16.mxu0 %v1612
    %2008 = vmatpush1.bf16.msra.mxu0 %v1611
    %2009 = vmatprep.subr.bf16.mxu0 %v1616
    %2010 = vmatpush1.bf16.msra.mxu0 %v1615
    %2011 = vmatprep.subr.bf16.mxu0 %v1620
    %2012 = vmatpush1.bf16.msra.mxu0 %v1619
    %2013 = vmatprep.subr.bf16.mxu0 %v1624
    %2014 = vmatpush1.bf16.msra.mxu0 %v1623
    %2015 = vmatprep.subr.bf16.mxu0 %v1628
    %2016 = vmatpush1.bf16.msra.mxu0 %v1627
    %2017 = vmatprep.subr.bf16.mxu0 %v1632
    %2018 = vmatpush1.bf16.msra.mxu0 %v1631
    %2019 = vmatprep.subr.bf16.mxu0 %v1636
    %2020 = vmatpush1.bf16.msra.mxu0 %v1635
    %2021 = vmatprep.subr.bf16.mxu0 %v1640
    %2022 = vmatpush1.bf16.msra.mxu0 %v1639
    %2023 = vmatprep.subr.bf16.mxu0 %v1644
    %2024 = vmatpush1.bf16.msra.mxu0 %v1643
    %2025 = vmatprep.subr.bf16.mxu0 %v1648
    %2026 = vmatpush1.bf16.msra.mxu0 %v1647
    %2027 = vmatprep.subr.bf16.mxu0 %v1652
    %2028 = vmatpush1.bf16.msra.mxu0 %v1651
    %2029 = vmatprep.subr.bf16.mxu0 %v1656
    %2030 = vmatpush1.bf16.msra.mxu0 %v1655
    %2031 = vmatprep.subr.bf16.mxu0 %v1660
    %2032 = vmatpush1.bf16.msra.mxu0 %v1659
    %2033 = vmatprep.subr.bf16.mxu0 %v1664
    %2034 = vmatpush1.bf16.msra.mxu0 %v1663
    %2035 = vmatprep.subr.bf16.mxu0 %v1668
    %2036 = vmatpush1.bf16.msra.mxu0 %v1667
    %2037 = vmatprep.subr.bf16.mxu0 %v1672
    %2038 = vmatpush1.bf16.msra.mxu0 %v1671
    %2039 = vmatprep.mubr.bf16.mxu0 %v1194
    %2040 = vmatmul.mubr.bf16.gmra.mrb[0].mxu0 %v1193
    %v2041 = vpop.f32.mrb[0].mxu0
    %v2042 = vadd.f32 0.0, %v2041
    %v2043 = vpop.f32.mrb[0].mxu0
    %v2044 = vadd.f32 0.0, %v2043
    %v2045 = vpop.f32.mrb[0].mxu0
    %v2046 = vadd.f32 0.0, %v2045
    %v2047 = vpop.f32.mrb[0].mxu0
    %v2048 = vadd.f32 0.0, %v2047
    %2049 = vmatprep.mubr.bf16.mxu0 %v1198
    %2050 = vmatmul.mubr.bf16.gmra.mrb[0].mxu0 %v1197
    %v2051 = vpop.f32.mrb[0].mxu0
    %v2052 = vadd.f32 0.0, %v2051
    %v2053 = vpop.f32.mrb[0].mxu0
    %v2054 = vadd.f32 0.0, %v2053
    %v2055 = vpop.f32.mrb[0].mxu0
    %v2056 = vadd.f32 0.0, %v2055
    %v2057 = vpop.f32.mrb[0].mxu0
    %v2058 = vadd.f32 0.0, %v2057
    %2059 = vmatprep.mubr.bf16.mxu0 %v1202
    %2060 = vmatmul.mubr.bf16.gmra.mrb[0].mxu0 %v1201
    %v2061 = vpop.f32.mrb[0].mxu0
    %v2062 = vadd.f32 0.0, %v2061
    %v2063 = vpop.f32.mrb[0].mxu0
    %v2064 = vadd.f32 0.0, %v2063
    %v2065 = vpop.f32.mrb[0].mxu0
    %v2066 = vadd.f32 0.0, %v2065
    %v2067 = vpop.f32.mrb[0].mxu0
    %v2068 = vadd.f32 0.0, %v2067
    %2069 = vmatprep.mubr.bf16.mxu0 %v1206
    %2070 = vmatmul.mubr.bf16.gmra.mrb[0].mxu0 %v1205
    %v2071 = vpop.f32.mrb[0].mxu0
    %v2072 = vadd.f32 0.0, %v2071
    %v2073 = vpop.f32.mrb[0].mxu0
    %v2074 = vadd.f32 0.0, %v2073
    %v2075 = vpop.f32.mrb[0].mxu0
    %v2076 = vpop.f32.mrb[0].mxu0
    %2077 = vdwg.mxu0
    %2078 = vmatprep.subr.bf16.mxu0 %v1676
    %2079 = vmatpush1.bf16.msra.mxu0 %v1675
    %2080 = vmatprep.subr.bf16.mxu0 %v1680
    %2081 = vmatpush1.bf16.msra.mxu0 %v1679
    %2082 = vmatprep.subr.bf16.mxu0 %v1684
    %2083 = vmatpush1.bf16.msra.mxu0 %v1683
    %2084 = vmatprep.subr.bf16.mxu0 %v1688
    %2085 = vmatpush1.bf16.msra.mxu0 %v1687
    %2086 = vmatprep.subr.bf16.mxu0 %v1692
    %2087 = vmatpush1.bf16.msra.mxu0 %v1691
    %2088 = vmatprep.subr.bf16.mxu0 %v1696
    %2089 = vmatpush1.bf16.msra.mxu0 %v1695
    %2090 = vmatprep.subr.bf16.mxu0 %v1700
    %2091 = vmatpush1.bf16.msra.mxu0 %v1699
    %2092 = vmatprep.subr.bf16.mxu0 %v1704
    %2093 = vmatpush1.bf16.msra.mxu0 %v1703
    %2094 = vmatprep.subr.bf16.mxu0 %v1708
    %2095 = vmatpush1.bf16.msra.mxu0 %v1707
    %2096 = vmatprep.subr.bf16.mxu0 %v1712
    %2097 = vmatpush1.bf16.msra.mxu0 %v1711
    %2098 = vmatprep.subr.bf16.mxu0 %v1716
    %2099 = vmatpush1.bf16.msra.mxu0 %v1715
    %2100 = vmatprep.subr.bf16.mxu0 %v1720
    %2101 = vmatpush1.bf16.msra.mxu0 %v1719
    %2102 = vmatprep.subr.bf16.mxu0 %v1724
    %2103 = vmatpush1.bf16.msra.mxu0 %v1723
    %2104 = vmatprep.subr.bf16.mxu0 %v1728
    %2105 = vmatpush1.bf16.msra.mxu0 %v1727
    %2106 = vmatprep.subr.bf16.mxu0 %v1732
    %2107 = vmatpush1.bf16.msra.mxu0 %v1731
    %2108 = vmatprep.subr.bf16.mxu0 %v1736
    %2109 = vmatpush1.bf16.msra.mxu0 %v1735
    %2110 = vmatprep.mubr.bf16.mxu0 %v1196
    %2111 = vmatmul.mubr.bf16.gmra.mrb[0].mxu0 %v1195
    %v2112 = vpop.f32.mrb[0].mxu0
    %v2113 = vadd.f32 %v2042, %v2112
    %v2114 = vpop.f32.mrb[0].mxu0
    %v2115 = vadd.f32 %v2044, %v2114
    %v2116 = vpop.f32.mrb[0].mxu0
    %v2117 = vadd.f32 %v2046, %v2116
    %v2118 = vpop.f32.mrb[0].mxu0
    %v2119 = vadd.f32 %v2048, %v2118
    %2120 = vmatprep.mubr.bf16.mxu0 %v1200
    %2121 = vmatmul.mubr.bf16.gmra.mrb[0].mxu0 %v1199
    %v2122 = vpop.f32.mrb[0].mxu0
    %v2123 = vadd.f32 %v2052, %v2122
    %v2124 = vpop.f32.mrb[0].mxu0
    %v2125 = vadd.f32 %v2054, %v2124
    %v2126 = vpop.f32.mrb[0].mxu0
    %v2127 = vadd.f32 %v2056, %v2126
    %v2128 = vpop.f32.mrb[0].mxu0
    %v2129 = vadd.f32 %v2058, %v2128
    %2130 = vmatprep.mubr.bf16.mxu0 %v1204
    %2131 = vmatmul.mubr.bf16.gmra.mrb[0].mxu0 %v1203
    %v2132 = vpop.f32.mrb[0].mxu0
    %v2133 = vadd.f32 %v2062, %v2132
    %v2134 = vpop.f32.mrb[0].mxu0
    %v2135 = vadd.f32 %v2064, %v2134
    %v2136 = vpop.f32.mrb[0].mxu0
    %v2137 = vadd.f32 %v2066, %v2136
    %v2138 = vpop.f32.mrb[0].mxu0
    %v2139 = vadd.f32 %v2068, %v2138
    %2140 = vmatprep.mubr.bf16.mxu0 %v1208
    %2141 = vmatmul.mubr.bf16.gmra.mrb[0].mxu0 %v1207
    %v2142 = vpop.f32.mrb[0].mxu0
    %v2143 = vadd.f32 %v2072, %v2142
    %v2144 = vpop.f32.mrb[0].mxu0
    %v2145 = vadd.f32 %v2074, %v2144
    %v2146 = vpop.f32.mrb[0].mxu0
    %v2147 = vpop.f32.mrb[0].mxu0
    %2148 = vdwg.mxu0
    %v2149 = vld [vmem:[#allocation4] sm:$0xff]
    %v2150 = vld [vmem:[#allocation4 + $0x8] sm:$0xff]
    %v2151 = vld [vmem:[#allocation4 + $0x10] sm:$0xff]
    %v2152 = vld [vmem:[#allocation4 + $0x18] sm:$0xff]
    %v2153 = vld [vmem:[#allocation4 + $0x20] sm:$0xff]
    %v2154 = vld [vmem:[#allocation4 + $0x28] sm:$0xff]
    %v2155 = vld [vmem:[#allocation4 + $0x30] sm:$0xff]
    %v2156 = vld [vmem:[#allocation4 + $0x38] sm:$0xff]
    %v2157 = vld [vmem:[#allocation4 + $0x40] sm:$0xff]
    %v2158 = vld [vmem:[#allocation4 + $0x48] sm:$0xff]
    %v2159 = vld [vmem:[#allocation4 + $0x50] sm:$0xff]
    %v2160 = vld [vmem:[#allocation4 + $0x58] sm:$0xff]
    %v2161 = vld [vmem:[#allocation4 + $0x60] sm:$0xff]
    %v2162 = vld [vmem:[#allocation4 + $0x68] sm:$0xff]
    %v2163 = vld [vmem:[#allocation4 + $0x70] sm:$0xff]
    %v2164 = vld [vmem:[#allocation4 + $0x78] sm:$0xff]
    %v2165 = vld [vmem:[#allocation4 + $0x80] sm:$0xff]
    %v2166 = vld [vmem:[#allocation4 + $0x88] sm:$0xff]
    %v2167 = vld [vmem:[#allocation4 + $0x90] sm:$0xff]
    %v2168 = vld [vmem:[#allocation4 + $0x98] sm:$0xff]
    %v2169 = vld [vmem:[#allocation4 + $0xa0] sm:$0xff]
    %v2170 = vld [vmem:[#allocation4 + $0xa8] sm:$0xff]
    %v2171 = vld [vmem:[#allocation4 + $0xb0] sm:$0xff]
    %v2172 = vld [vmem:[#allocation4 + $0xb8] sm:$0xff]
    %v2173 = vld [vmem:[#allocation4 + $0xc0] sm:$0xff]
    %v2174 = vld [vmem:[#allocation4 + $0xc8] sm:$0xff]
    %v2175 = vld [vmem:[#allocation4 + $0xd0] sm:$0xff]
    %v2176 = vld [vmem:[#allocation4 + $0xd8] sm:$0xff]
    %v2177 = vld [vmem:[#allocation4 + $0xe0] sm:$0xff]
    %v2178 = vld [vmem:[#allocation4 + $0xe8] sm:$0xff]
    %v2179 = vld [vmem:[#allocation4 + $0xf0] sm:$0xff]
    %v2180 = vld [vmem:[#allocation4 + $0xf8] sm:$0xff]
    %v2181 = vld [vmem:[#allocation4 + $0x100] sm:$0xff]
    %v2182 = vld [vmem:[#allocation4 + $0x108] sm:$0xff]
    %v2183 = vld [vmem:[#allocation4 + $0x110] sm:$0xff]
    %v2184 = vld [vmem:[#allocation4 + $0x118] sm:$0xff]
    %v2185 = vld [vmem:[#allocation4 + $0x120] sm:$0xff]
    %v2186 = vld [vmem:[#allocation4 + $0x128] sm:$0xff]
    %v2187 = vld [vmem:[#allocation4 + $0x130] sm:$0xff]
    %v2188 = vld [vmem:[#allocation4 + $0x138] sm:$0xff]
    %v2189 = vld [vmem:[#allocation4 + $0x140] sm:$0xff]
    %v2190 = vld [vmem:[#allocation4 + $0x148] sm:$0xff]
    %v2191 = vld [vmem:[#allocation4 + $0x150] sm:$0xff]
    %v2192 = vld [vmem:[#allocation4 + $0x158] sm:$0xff]
    %v2193 = vld [vmem:[#allocation4 + $0x160] sm:$0xff]
    %v2194 = vld [vmem:[#allocation4 + $0x168] sm:$0xff]
    %v2195 = vld [vmem:[#allocation4 + $0x170] sm:$0xff]
    %v2196 = vld [vmem:[#allocation4 + $0x178] sm:$0xff]
    %v2197 = vld [vmem:[#allocation4 + $0x180] sm:$0xff]
    %v2198 = vld [vmem:[#allocation4 + $0x188] sm:$0xff]
    %v2199 = vld [vmem:[#allocation4 + $0x190] sm:$0xff]
    %v2200 = vld [vmem:[#allocation4 + $0x198] sm:$0xff]
    %v2201 = vld [vmem:[#allocation4 + $0x1a0] sm:$0xff]
    %v2202 = vld [vmem:[#allocation4 + $0x1a8] sm:$0xff]
    %v2203 = vld [vmem:[#allocation4 + $0x1b0] sm:$0xff]
    %v2204 = vld [vmem:[#allocation4 + $0x1b8] sm:$0xff]
    %v2205 = vld [vmem:[#allocation4 + $0x1c0] sm:$0xff]
    %v2206 = vld [vmem:[#allocation4 + $0x1c8] sm:$0xff]
    %v2207 = vld [vmem:[#allocation4 + $0x1d0] sm:$0xff]
    %v2208 = vld [vmem:[#allocation4 + $0x1d8] sm:$0xff]
    %v2209 = vld [vmem:[#allocation4 + $0x1e0] sm:$0xff]
    %v2210 = vld [vmem:[#allocation4 + $0x1e8] sm:$0xff]
    %v2211 = vld [vmem:[#allocation4 + $0x1f0] sm:$0xff]
    %v2212 = vld [vmem:[#allocation4 + $0x1f8] sm:$0xff]
    %v2213 = vld [vmem:[#allocation4 + $0x200] sm:$0xff]
    %v2214 = vld [vmem:[#allocation4 + $0x208] sm:$0xff]
    %v2215 = vld [vmem:[#allocation4 + $0x210] sm:$0xff]
    %v2216 = vld [vmem:[#allocation4 + $0x218] sm:$0xff]
    %v2217 = vld [vmem:[#allocation4 + $0x220] sm:$0xff]
    %v2218 = vld [vmem:[#allocation4 + $0x228] sm:$0xff]
    %v2219 = vld [vmem:[#allocation4 + $0x230] sm:$0xff]
    %v2220 = vld [vmem:[#allocation4 + $0x238] sm:$0xff]
    %v2221 = vld [vmem:[#allocation4 + $0x240] sm:$0xff]
    %v2222 = vld [vmem:[#allocation4 + $0x248] sm:$0xff]
    %v2223 = vld [vmem:[#allocation4 + $0x250] sm:$0xff]
    %v2224 = vld [vmem:[#allocation4 + $0x258] sm:$0xff]
    %v2225 = vld [vmem:[#allocation4 + $0x260] sm:$0xff]
    %v2226 = vld [vmem:[#allocation4 + $0x268] sm:$0xff]
    %v2227 = vld [vmem:[#allocation4 + $0x270] sm:$0xff]
    %v2228 = vld [vmem:[#allocation4 + $0x278] sm:$0xff]
    %v2229 = vld [vmem:[#allocation4 + $0x280] sm:$0xff]
    %v2230 = vld [vmem:[#allocation4 + $0x288] sm:$0xff]
    %v2231 = vld [vmem:[#allocation4 + $0x290] sm:$0xff]
    %v2232 = vld [vmem:[#allocation4 + $0x298] sm:$0xff]
    %v2233 = vld [vmem:[#allocation4 + $0x2a0] sm:$0xff]
    %v2234 = vld [vmem:[#allocation4 + $0x2a8] sm:$0xff]
    %v2235 = vld [vmem:[#allocation4 + $0x2b0] sm:$0xff]
    %v2236 = vld [vmem:[#allocation4 + $0x2b8] sm:$0xff]
    %v2237 = vld [vmem:[#allocation4 + $0x2c0] sm:$0xff]
    %v2238 = vld [vmem:[#allocation4 + $0x2c8] sm:$0xff]
    %v2239 = vld [vmem:[#allocation4 + $0x2d0] sm:$0xff]
    %v2240 = vld [vmem:[#allocation4 + $0x2d8] sm:$0xff]
    %v2241 = vld [vmem:[#allocation4 + $0x2e0] sm:$0xff]
    %v2242 = vld [vmem:[#allocation4 + $0x2e8] sm:$0xff]
    %v2243 = vld [vmem:[#allocation4 + $0x2f0] sm:$0xff]
    %v2244 = vld [vmem:[#allocation4 + $0x2f8] sm:$0xff]
    %v2245 = vld [vmem:[#allocation4 + $0x300] sm:$0xff]
    %v2246 = vld [vmem:[#allocation4 + $0x308] sm:$0xff]
    %v2247 = vld [vmem:[#allocation4 + $0x310] sm:$0xff]
    %v2248 = vld [vmem:[#allocation4 + $0x318] sm:$0xff]
    %v2249 = vld [vmem:[#allocation4 + $0x320] sm:$0xff]
    %v2250 = vld [vmem:[#allocation4 + $0x328] sm:$0xff]
    %v2251 = vld [vmem:[#allocation4 + $0x330] sm:$0xff]
    %v2252 = vld [vmem:[#allocation4 + $0x338] sm:$0xff]
    %v2253 = vld [vmem:[#allocation4 + $0x340] sm:$0xff]
    %v2254 = vld [vmem:[#allocation4 + $0x348] sm:$0xff]
    %v2255 = vld [vmem:[#allocation4 + $0x350] sm:$0xff]
    %v2256 = vld [vmem:[#allocation4 + $0x358] sm:$0xff]
    %v2257 = vld [vmem:[#allocation4 + $0x360] sm:$0xff]
    %v2258 = vld [vmem:[#allocation4 + $0x368] sm:$0xff]
    %v2259 = vld [vmem:[#allocation4 + $0x370] sm:$0xff]
    %v2260 = vld [vmem:[#allocation4 + $0x378] sm:$0xff]
    %v2261 = vld [vmem:[#allocation4 + $0x380] sm:$0xff]
    %v2262 = vld [vmem:[#allocation4 + $0x388] sm:$0xff]
    %v2263 = vld [vmem:[#allocation4 + $0x390] sm:$0xff]
    %v2264 = vld [vmem:[#allocation4 + $0x398] sm:$0xff]
    %v2265 = vld [vmem:[#allocation4 + $0x3a0] sm:$0xff]
    %v2266 = vld [vmem:[#allocation4 + $0x3a8] sm:$0xff]
    %v2267 = vld [vmem:[#allocation4 + $0x3b0] sm:$0xff]
    %v2268 = vld [vmem:[#allocation4 + $0x3b8] sm:$0xff]
    %v2269 = vld [vmem:[#allocation4 + $0x3c0] sm:$0xff]
    %v2270 = vld [vmem:[#allocation4 + $0x3c8] sm:$0xff]
    %v2271 = vld [vmem:[#allocation4 + $0x3d0] sm:$0xff]
    %v2272 = vld [vmem:[#allocation4 + $0x3d8] sm:$0xff]
    %v2273 = vld [vmem:[#allocation4 + $0x3e0] sm:$0xff]
    %v2274 = vld [vmem:[#allocation4 + $0x3e8] sm:$0xff]
    %v2275 = vld [vmem:[#allocation4 + $0x3f0] sm:$0xff]
    %v2276 = vld [vmem:[#allocation4 + $0x3f8] sm:$0xff]
    %v2277 = vpack.c.bf16 %v1971, %v1971
    %v2278 = vpack.c.bf16 %v1973, %v1973
    %v2279 = vpack.c.bf16 %v2113, %v2113
    %v2280 = vpack.c.bf16 %v2115, %v2115
    %v2409 = vunpack.c.l.b16 %v2149
    %v2410 = vunpack.c.h.b16 %v2149
    %v2411 = vunpack.c.l.b16 %v2150
    %v2412 = vunpack.c.h.b16 %v2150
    %v2413 = vunpack.c.l.b16 %v2151
    %v2414 = vunpack.c.h.b16 %v2151
    %v2415 = vunpack.c.l.b16 %v2152
    %v2416 = vunpack.c.h.b16 %v2152
    %v2417 = vunpack.c.l.b16 %v2153
    %v2418 = vunpack.c.h.b16 %v2153
    %v2419 = vunpack.c.l.b16 %v2154
    %v2420 = vunpack.c.h.b16 %v2154
    %v2421 = vunpack.c.l.b16 %v2155
    %v2422 = vunpack.c.h.b16 %v2155
    %v2423 = vunpack.c.l.b16 %v2156
    %v2424 = vunpack.c.h.b16 %v2156
    %v2425 = vunpack.c.l.b16 %v2157
    %v2426 = vunpack.c.h.b16 %v2157
    %v2427 = vunpack.c.l.b16 %v2158
    %v2428 = vunpack.c.h.b16 %v2158
    %v2429 = vunpack.c.l.b16 %v2159
    %v2430 = vunpack.c.h.b16 %v2159
    %v2431 = vunpack.c.l.b16 %v2160
    %v2432 = vunpack.c.h.b16 %v2160
    %v2433 = vunpack.c.l.b16 %v2161
    %v2434 = vunpack.c.h.b16 %v2161
    %v2435 = vunpack.c.l.b16 %v2162
    %v2436 = vunpack.c.h.b16 %v2162
    %v2437 = vunpack.c.l.b16 %v2163
    %v2438 = vunpack.c.h.b16 %v2163
    %v2439 = vunpack.c.l.b16 %v2164
    %v2440 = vunpack.c.h.b16 %v2164
    %v2441 = vunpack.c.l.b16 %v2165
    %v2442 = vunpack.c.h.b16 %v2165
    %v2443 = vunpack.c.l.b16 %v2166
    %v2444 = vunpack.c.h.b16 %v2166
    %v2445 = vunpack.c.l.b16 %v2167
    %v2446 = vunpack.c.h.b16 %v2167
    %v2447 = vunpack.c.l.b16 %v2168
    %v2448 = vunpack.c.h.b16 %v2168
    %v2449 = vunpack.c.l.b16 %v2169
    %v2450 = vunpack.c.h.b16 %v2169
    %v2451 = vunpack.c.l.b16 %v2170
    %v2452 = vunpack.c.h.b16 %v2170
    %v2453 = vunpack.c.l.b16 %v2171
    %v2454 = vunpack.c.h.b16 %v2171
    %v2455 = vunpack.c.l.b16 %v2172
    %v2456 = vunpack.c.h.b16 %v2172
    %v2457 = vunpack.c.l.b16 %v2173
    %v2458 = vunpack.c.h.b16 %v2173
    %v2459 = vunpack.c.l.b16 %v2174
    %v2460 = vunpack.c.h.b16 %v2174
    %v2461 = vunpack.c.l.b16 %v2175
    %v2462 = vunpack.c.h.b16 %v2175
    %v2463 = vunpack.c.l.b16 %v2176
    %v2464 = vunpack.c.h.b16 %v2176
    %v2465 = vunpack.c.l.b16 %v2177
    %v2466 = vunpack.c.h.b16 %v2177
    %v2467 = vunpack.c.l.b16 %v2178
    %v2468 = vunpack.c.h.b16 %v2178
    %v2469 = vunpack.c.l.b16 %v2179
    %v2470 = vunpack.c.h.b16 %v2179
    %v2471 = vunpack.c.l.b16 %v2180
    %v2472 = vunpack.c.h.b16 %v2180
    %v2473 = vunpack.c.l.b16 %v2181
    %v2474 = vunpack.c.h.b16 %v2181
    %v2475 = vunpack.c.l.b16 %v2182
    %v2476 = vunpack.c.h.b16 %v2182
    %v2477 = vunpack.c.l.b16 %v2183
    %v2478 = vunpack.c.h.b16 %v2183
    %v2479 = vunpack.c.l.b16 %v2184
    %v2480 = vunpack.c.h.b16 %v2184
    %v2481 = vunpack.c.l.b16 %v2185
    %v2482 = vunpack.c.h.b16 %v2185
    %v2483 = vunpack.c.l.b16 %v2186
    %v2484 = vunpack.c.h.b16 %v2186
    %v2485 = vunpack.c.l.b16 %v2187
    %v2486 = vunpack.c.h.b16 %v2187
    %v2487 = vunpack.c.l.b16 %v2188
    %v2488 = vunpack.c.h.b16 %v2188
    %v2489 = vunpack.c.l.b16 %v2189
    %v2490 = vunpack.c.h.b16 %v2189
    %v2491 = vunpack.c.l.b16 %v2190
    %v2492 = vunpack.c.h.b16 %v2190
    %v2493 = vunpack.c.l.b16 %v2191
    %v2494 = vunpack.c.h.b16 %v2191
    %v2495 = vunpack.c.l.b16 %v2192
    %v2496 = vunpack.c.h.b16 %v2192
    %v2497 = vunpack.c.l.b16 %v2193
    %v2498 = vunpack.c.h.b16 %v2193
    %v2499 = vunpack.c.l.b16 %v2194
    %v2500 = vunpack.c.h.b16 %v2194
    %v2501 = vunpack.c.l.b16 %v2195
    %v2502 = vunpack.c.h.b16 %v2195
    %v2503 = vunpack.c.l.b16 %v2196
    %v2504 = vunpack.c.h.b16 %v2196
    %v2505 = vunpack.c.l.b16 %v2197
    %v2506 = vunpack.c.h.b16 %v2197
    %v2507 = vunpack.c.l.b16 %v2198
    %v2508 = vunpack.c.h.b16 %v2198
    %v2509 = vunpack.c.l.b16 %v2199
    %v2510 = vunpack.c.h.b16 %v2199
    %v2511 = vunpack.c.l.b16 %v2200
    %v2512 = vunpack.c.h.b16 %v2200
    %v2513 = vunpack.c.l.b16 %v2201
    %v2514 = vunpack.c.h.b16 %v2201
    %v2515 = vunpack.c.l.b16 %v2202
    %v2516 = vunpack.c.h.b16 %v2202
    %v2517 = vunpack.c.l.b16 %v2203
    %v2518 = vunpack.c.h.b16 %v2203
    %v2519 = vunpack.c.l.b16 %v2204
    %v2520 = vunpack.c.h.b16 %v2204
    %v2521 = vunpack.c.l.b16 %v2205
    %v2522 = vunpack.c.h.b16 %v2205
    %v2523 = vunpack.c.l.b16 %v2206
    %v2524 = vunpack.c.h.b16 %v2206
    %v2525 = vunpack.c.l.b16 %v2207
    %v2526 = vunpack.c.h.b16 %v2207
    %v2527 = vunpack.c.l.b16 %v2208
    %v2528 = vunpack.c.h.b16 %v2208
    %v2529 = vunpack.c.l.b16 %v2209
    %v2530 = vunpack.c.h.b16 %v2209
    %v2531 = vunpack.c.l.b16 %v2210
    %v2532 = vunpack.c.h.b16 %v2210
    %v2533 = vunpack.c.l.b16 %v2211
    %v2534 = vunpack.c.h.b16 %v2211
    %v2535 = vunpack.c.l.b16 %v2212
    %v2536 = vunpack.c.h.b16 %v2212
    %v2537 = vunpack.c.l.b16 %v2213
    %v2538 = vunpack.c.h.b16 %v2213
    %v2539 = vunpack.c.l.b16 %v2214
    %v2540 = vunpack.c.h.b16 %v2214
    %v2541 = vunpack.c.l.b16 %v2215
    %v2542 = vunpack.c.h.b16 %v2215
    %v2543 = vunpack.c.l.b16 %v2216
    %v2544 = vunpack.c.h.b16 %v2216
    %v2545 = vunpack.c.l.b16 %v2217
    %v2546 = vunpack.c.h.b16 %v2217
    %v2547 = vunpack.c.l.b16 %v2218
    %v2548 = vunpack.c.h.b16 %v2218
    %v2549 = vunpack.c.l.b16 %v2219
    %v2550 = vunpack.c.h.b16 %v2219
    %v2551 = vunpack.c.l.b16 %v2220
    %v2552 = vunpack.c.h.b16 %v2220
    %v2553 = vunpack.c.l.b16 %v2221
    %v2554 = vunpack.c.h.b16 %v2221
    %v2555 = vunpack.c.l.b16 %v2222
    %v2556 = vunpack.c.h.b16 %v2222
    %v2557 = vunpack.c.l.b16 %v2223
    %v2558 = vunpack.c.h.b16 %v2223
    %v2559 = vunpack.c.l.b16 %v2224
    %v2560 = vunpack.c.h.b16 %v2224
    %v2561 = vunpack.c.l.b16 %v2225
    %v2562 = vunpack.c.h.b16 %v2225
    %v2563 = vunpack.c.l.b16 %v2226
    %v2564 = vunpack.c.h.b16 %v2226
    %v2565 = vunpack.c.l.b16 %v2227
    %v2566 = vunpack.c.h.b16 %v2227
    %v2567 = vunpack.c.l.b16 %v2228
    %v2568 = vunpack.c.h.b16 %v2228
    %v2569 = vunpack.c.l.b16 %v2229
    %v2570 = vunpack.c.h.b16 %v2229
    %v2571 = vunpack.c.l.b16 %v2230
    %v2572 = vunpack.c.h.b16 %v2230
    %v2573 = vunpack.c.l.b16 %v2231
    %v2574 = vunpack.c.h.b16 %v2231
    %v2575 = vunpack.c.l.b16 %v2232
    %v2576 = vunpack.c.h.b16 %v2232
    %v2577 = vunpack.c.l.b16 %v2233
    %v2578 = vunpack.c.h.b16 %v2233
    %v2579 = vunpack.c.l.b16 %v2234
    %v2580 = vunpack.c.h.b16 %v2234
    %v2581 = vunpack.c.l.b16 %v2235
    %v2582 = vunpack.c.h.b16 %v2235
    %v2583 = vunpack.c.l.b16 %v2236
    %v2584 = vunpack.c.h.b16 %v2236
    %v2585 = vunpack.c.l.b16 %v2237
    %v2586 = vunpack.c.h.b16 %v2237
    %v2587 = vunpack.c.l.b16 %v2238
    %v2588 = vunpack.c.h.b16 %v2238
    %v2589 = vunpack.c.l.b16 %v2239
    %v2590 = vunpack.c.h.b16 %v2239
    %v2591 = vunpack.c.l.b16 %v2240
    %v2592 = vunpack.c.h.b16 %v2240
    %v2593 = vunpack.c.l.b16 %v2241
    %v2594 = vunpack.c.h.b16 %v2241
    %v2595 = vunpack.c.l.b16 %v2242
    %v2596 = vunpack.c.h.b16 %v2242
    %v2597 = vunpack.c.l.b16 %v2243
    %v2598 = vunpack.c.h.b16 %v2243
    %v2599 = vunpack.c.l.b16 %v2244
    %v2600 = vunpack.c.h.b16 %v2244
    %v2601 = vunpack.c.l.b16 %v2245
    %v2602 = vunpack.c.h.b16 %v2245
    %v2603 = vunpack.c.l.b16 %v2246
    %v2604 = vunpack.c.h.b16 %v2246
    %v2605 = vunpack.c.l.b16 %v2247
    %v2606 = vunpack.c.h.b16 %v2247
    %v2607 = vunpack.c.l.b16 %v2248
    %v2608 = vunpack.c.h.b16 %v2248
    %v2609 = vunpack.c.l.b16 %v2249
    %v2610 = vunpack.c.h.b16 %v2249
    %v2611 = vunpack.c.l.b16 %v2250
    %v2612 = vunpack.c.h.b16 %v2250
    %v2613 = vunpack.c.l.b16 %v2251
    %v2614 = vunpack.c.h.b16 %v2251
    %v2615 = vunpack.c.l.b16 %v2252
    %v2616 = vunpack.c.h.b16 %v2252
    %v2617 = vunpack.c.l.b16 %v2253
    %v2618 = vunpack.c.h.b16 %v2253
    %v2619 = vunpack.c.l.b16 %v2254
    %v2620 = vunpack.c.h.b16 %v2254
    %v2621 = vunpack.c.l.b16 %v2255
    %v2622 = vunpack.c.h.b16 %v2255
    %v2623 = vunpack.c.l.b16 %v2256
    %v2624 = vunpack.c.h.b16 %v2256
    %v2625 = vunpack.c.l.b16 %v2257
    %v2626 = vunpack.c.h.b16 %v2257
    %v2627 = vunpack.c.l.b16 %v2258
    %v2628 = vunpack.c.h.b16 %v2258
    %v2629 = vunpack.c.l.b16 %v2259
    %v2630 = vunpack.c.h.b16 %v2259
    %v2631 = vunpack.c.l.b16 %v2260
    %v2632 = vunpack.c.h.b16 %v2260
    %v2633 = vunpack.c.l.b16 %v2261
    %v2634 = vunpack.c.h.b16 %v2261
    %v2635 = vunpack.c.l.b16 %v2262
    %v2636 = vunpack.c.h.b16 %v2262
    %v2637 = vunpack.c.l.b16 %v2263
    %v2638 = vunpack.c.h.b16 %v2263
    %v2639 = vunpack.c.l.b16 %v2264
    %v2640 = vunpack.c.h.b16 %v2264
    %v2641 = vunpack.c.l.b16 %v2265
    %v2642 = vunpack.c.h.b16 %v2265
    %v2643 = vunpack.c.l.b16 %v2266
    %v2644 = vunpack.c.h.b16 %v2266
    %v2645 = vunpack.c.l.b16 %v2267
    %v2646 = vunpack.c.h.b16 %v2267
    %v2647 = vunpack.c.l.b16 %v2268
    %v2648 = vunpack.c.h.b16 %v2268
    %v2649 = vunpack.c.l.b16 %v2269
    %v2650 = vunpack.c.h.b16 %v2269
    %v2651 = vunpack.c.l.b16 %v2270
    %v2652 = vunpack.c.h.b16 %v2270
    %v2653 = vunpack.c.l.b16 %v2271
    %v2654 = vunpack.c.h.b16 %v2271
    %v2655 = vunpack.c.l.b16 %v2272
    %v2656 = vunpack.c.h.b16 %v2272
    %v2657 = vunpack.c.l.b16 %v2273
    %v2658 = vunpack.c.h.b16 %v2273
    %v2659 = vunpack.c.l.b16 %v2274
    %v2660 = vunpack.c.h.b16 %v2274
    %v2661 = vunpack.c.l.b16 %v2275
    %v2662 = vunpack.c.h.b16 %v2275
    %v2663 = vunpack.c.l.b16 %v2276
    %v2664 = vunpack.c.h.b16 %v2276
    %v2665 = vpack.c.b16 %v2413, %v2409
    %v2666 = vpack.c.b16 %v2414, %v2410
    %v2667 = vpack.c.b16 %v2415, %v2411
    %v2668 = vpack.c.b16 %v2416, %v2412
    %v2669 = vpack.c.b16 %v2421, %v2417
    %v2670 = vpack.c.b16 %v2422, %v2418
    %v2671 = vpack.c.b16 %v2423, %v2419
    %v2672 = vpack.c.b16 %v2424, %v2420
    %v2673 = vpack.c.b16 %v2429, %v2425
    %v2674 = vpack.c.b16 %v2430, %v2426
    %v2675 = vpack.c.b16 %v2431, %v2427
    %v2676 = vpack.c.b16 %v2432, %v2428
    %v2677 = vpack.c.b16 %v2437, %v2433
    %v2678 = vpack.c.b16 %v2438, %v2434
    %v2679 = vpack.c.b16 %v2439, %v2435
    %v2680 = vpack.c.b16 %v2440, %v2436
    %v2681 = vpack.c.b16 %v2445, %v2441
    %v2682 = vpack.c.b16 %v2446, %v2442
    %v2683 = vpack.c.b16 %v2447, %v2443
    %v2684 = vpack.c.b16 %v2448, %v2444
    %v2685 = vpack.c.b16 %v2453, %v2449
    %v2686 = vpack.c.b16 %v2454, %v2450
    %v2687 = vpack.c.b16 %v2455, %v2451
    %v2688 = vpack.c.b16 %v2456, %v2452
    %v2689 = vpack.c.b16 %v2461, %v2457
    %v2690 = vpack.c.b16 %v2462, %v2458
    %v2691 = vpack.c.b16 %v2463, %v2459
    %v2692 = vpack.c.b16 %v2464, %v2460
    %v2693 = vpack.c.b16 %v2469, %v2465
    %v2694 = vpack.c.b16 %v2470, %v2466
    %v2695 = vpack.c.b16 %v2471, %v2467
    %v2696 = vpack.c.b16 %v2472, %v2468
    %v2697 = vpack.c.b16 %v2477, %v2473
    %v2698 = vpack.c.b16 %v2478, %v2474
    %v2699 = vpack.c.b16 %v2479, %v2475
    %v2700 = vpack.c.b16 %v2480, %v2476
    %v2701 = vpack.c.b16 %v2485, %v2481
    %v2702 = vpack.c.b16 %v2486, %v2482
    %v2703 = vpack.c.b16 %v2487, %v2483
    %v2704 = vpack.c.b16 %v2488, %v2484
    %v2705 = vpack.c.b16 %v2493, %v2489
    %v2706 = vpack.c.b16 %v2494, %v2490
    %v2707 = vpack.c.b16 %v2495, %v2491
    %v2708 = vpack.c.b16 %v2496, %v2492
    %v2709 = vpack.c.b16 %v2501, %v2497
    %v2710 = vpack.c.b16 %v2502, %v2498
    %v2711 = vpack.c.b16 %v2503, %v2499
    %v2712 = vpack.c.b16 %v2504, %v2500
    %v2713 = vpack.c.b16 %v2509, %v2505
    %v2714 = vpack.c.b16 %v2510, %v2506
    %v2715 = vpack.c.b16 %v2511, %v2507
    %v2716 = vpack.c.b16 %v2512, %v2508
    %v2717 = vpack.c.b16 %v2517, %v2513
    %v2718 = vpack.c.b16 %v2518, %v2514
    %v2719 = vpack.c.b16 %v2519, %v2515
    %v2720 = vpack.c.b16 %v2520, %v2516
    %v2721 = vpack.c.b16 %v2525, %v2521
    %v2722 = vpack.c.b16 %v2526, %v2522
    %v2723 = vpack.c.b16 %v2527, %v2523
    %v2724 = vpack.c.b16 %v2528, %v2524
    %v2725 = vpack.c.b16 %v2533, %v2529
    %v2726 = vpack.c.b16 %v2534, %v2530
    %v2727 = vpack.c.b16 %v2535, %v2531
    %v2728 = vpack.c.b16 %v2536, %v2532
    %v2729 = vpack.c.b16 %v2541, %v2537
    %v2730 = vpack.c.b16 %v2542, %v2538
    %v2731 = vpack.c.b16 %v2543, %v2539
    %v2732 = vpack.c.b16 %v2544, %v2540
    %v2733 = vpack.c.b16 %v2549, %v2545
    %v2734 = vpack.c.b16 %v2550, %v2546
    %v2735 = vpack.c.b16 %v2551, %v2547
    %v2736 = vpack.c.b16 %v2552, %v2548
    %v2737 = vpack.c.b16 %v2557, %v2553
    %v2738 = vpack.c.b16 %v2558, %v2554
    %v2739 = vpack.c.b16 %v2559, %v2555
    %v2740 = vpack.c.b16 %v2560, %v2556
    %v2741 = vpack.c.b16 %v2565, %v2561
    %v2742 = vpack.c.b16 %v2566, %v2562
    %v2743 = vpack.c.b16 %v2567, %v2563
    %v2744 = vpack.c.b16 %v2568, %v2564
    %v2745 = vpack.c.b16 %v2573, %v2569
    %v2746 = vpack.c.b16 %v2574, %v2570
    %v2747 = vpack.c.b16 %v2575, %v2571
    %v2748 = vpack.c.b16 %v2576, %v2572
    %v2749 = vpack.c.b16 %v2581, %v2577
    %v2750 = vpack.c.b16 %v2582, %v2578
    %v2751 = vpack.c.b16 %v2583, %v2579
    %v2752 = vpack.c.b16 %v2584, %v2580
    %v2753 = vpack.c.b16 %v2589, %v2585
    %v2754 = vpack.c.b16 %v2590, %v2586
    %v2755 = vpack.c.b16 %v2591, %v2587
    %v2756 = vpack.c.b16 %v2592, %v2588
    %v2757 = vpack.c.b16 %v2597, %v2593
    %v2758 = vpack.c.b16 %v2598, %v2594
    %v2759 = vpack.c.b16 %v2599, %v2595
    %v2760 = vpack.c.b16 %v2600, %v2596
    %v2761 = vpack.c.b16 %v2605, %v2601
    %v2762 = vpack.c.b16 %v2606, %v2602
    %v2763 = vpack.c.b16 %v2607, %v2603
    %v2764 = vpack.c.b16 %v2608, %v2604
    %v2765 = vpack.c.b16 %v2613, %v2609
    %v2766 = vpack.c.b16 %v2614, %v2610
    %v2767 = vpack.c.b16 %v2615, %v2611
    %v2768 = vpack.c.b16 %v2616, %v2612
    %v2769 = vpack.c.b16 %v2621, %v2617
    %v2770 = vpack.c.b16 %v2622, %v2618
    %v2771 = vpack.c.b16 %v2623, %v2619
    %v2772 = vpack.c.b16 %v2624, %v2620
    %v2773 = vpack.c.b16 %v2629, %v2625
    %v2774 = vpack.c.b16 %v2630, %v2626
    %v2775 = vpack.c.b16 %v2631, %v2627
    %v2776 = vpack.c.b16 %v2632, %v2628
    %v2777 = vpack.c.b16 %v2637, %v2633
    %v2778 = vpack.c.b16 %v2638, %v2634
    %v2779 = vpack.c.b16 %v2639, %v2635
    %v2780 = vpack.c.b16 %v2640, %v2636
    %v2781 = vpack.c.b16 %v2645, %v2641
    %v2782 = vpack.c.b16 %v2646, %v2642
    %v2783 = vpack.c.b16 %v2647, %v2643
    %v2784 = vpack.c.b16 %v2648, %v2644
    %v2785 = vpack.c.b16 %v2653, %v2649
    %v2786 = vpack.c.b16 %v2654, %v2650
    %v2787 = vpack.c.b16 %v2655, %v2651
    %v2788 = vpack.c.b16 %v2656, %v2652
    %v2789 = vpack.c.b16 %v2661, %v2657
    %v2790 = vpack.c.b16 %v2662, %v2658
    %v2791 = vpack.c.b16 %v2663, %v2659
    %v2792 = vpack.c.b16 %v2664, %v2660
    %2921 = vmatprep.subr.bf16.mxu0 %v2666
    %2922 = vmatpush1.bf16.msra.mxu0 %v2665
    %2923 = vmatprep.subr.bf16.mxu0 %v2670
    %2924 = vmatpush1.bf16.msra.mxu0 %v2669
    %2925 = vmatprep.subr.bf16.mxu0 %v2674
    %2926 = vmatpush1.bf16.msra.mxu0 %v2673
    %2927 = vmatprep.subr.bf16.mxu0 %v2678
    %2928 = vmatpush1.bf16.msra.mxu0 %v2677
    %2929 = vmatprep.subr.bf16.mxu0 %v2682
    %2930 = vmatpush1.bf16.msra.mxu0 %v2681
    %2931 = vmatprep.subr.bf16.mxu0 %v2686
    %2932 = vmatpush1.bf16.msra.mxu0 %v2685
    %2933 = vmatprep.subr.bf16.mxu0 %v2690
    %2934 = vmatpush1.bf16.msra.mxu0 %v2689
    %2935 = vmatprep.subr.bf16.mxu0 %v2694
    %2936 = vmatpush1.bf16.msra.mxu0 %v2693
    %2937 = vmatprep.subr.bf16.mxu0 %v2698
    %2938 = vmatpush1.bf16.msra.mxu0 %v2697
    %2939 = vmatprep.subr.bf16.mxu0 %v2702
    %2940 = vmatpush1.bf16.msra.mxu0 %v2701
    %2941 = vmatprep.subr.bf16.mxu0 %v2706
    %2942 = vmatpush1.bf16.msra.mxu0 %v2705
    %2943 = vmatprep.subr.bf16.mxu0 %v2710
    %2944 = vmatpush1.bf16.msra.mxu0 %v2709
    %2945 = vmatprep.subr.bf16.mxu0 %v2714
    %2946 = vmatpush1.bf16.msra.mxu0 %v2713
    %2947 = vmatprep.subr.bf16.mxu0 %v2718
    %2948 = vmatpush1.bf16.msra.mxu0 %v2717
    %2949 = vmatprep.subr.bf16.mxu0 %v2722
    %2950 = vmatpush1.bf16.msra.mxu0 %v2721
    %2951 = vmatprep.subr.bf16.mxu0 %v2726
    %2952 = vmatpush1.bf16.msra.mxu0 %v2725
    %2953 = vmatprep.mubr.bf16.mxu0 %v2278
    %2954 = vmatmul.mubr.bf16.gmra.mrb[0].mxu0 %v2277
    %v2955 = vpop.f32.mrb[0].mxu0
    %v2956 = vadd.f32 %v1975, %v2955
    %v2957 = vpop.f32.mrb[0].mxu0
    %v2958 = vadd.f32 %v1977, %v2957
    %v2959 = vpop.f32.mrb[0].mxu0
    %v2960 = vpop.f32.mrb[0].mxu0
    %2961 = vdwg.mxu0
    %2962 = vmatprep.subr.bf16.mxu0 %v2730
    %2963 = vmatpush1.bf16.msra.mxu0 %v2729
    %2964 = vmatprep.subr.bf16.mxu0 %v2734
    %2965 = vmatpush1.bf16.msra.mxu0 %v2733
    %2966 = vmatprep.subr.bf16.mxu0 %v2738
    %2967 = vmatpush1.bf16.msra.mxu0 %v2737
    %2968 = vmatprep.subr.bf16.mxu0 %v2742
    %2969 = vmatpush1.bf16.msra.mxu0 %v2741
    %2970 = vmatprep.subr.bf16.mxu0 %v2746
    %2971 = vmatpush1.bf16.msra.mxu0 %v2745
    %2972 = vmatprep.subr.bf16.mxu0 %v2750
    %2973 = vmatpush1.bf16.msra.mxu0 %v2749
    %2974 = vmatprep.subr.bf16.mxu0 %v2754
    %2975 = vmatpush1.bf16.msra.mxu0 %v2753
    %2976 = vmatprep.subr.bf16.mxu0 %v2758
    %2977 = vmatpush1.bf16.msra.mxu0 %v2757
    %2978 = vmatprep.subr.bf16.mxu0 %v2762
    %2979 = vmatpush1.bf16.msra.mxu0 %v2761
    %2980 = vmatprep.subr.bf16.mxu0 %v2766
    %2981 = vmatpush1.bf16.msra.mxu0 %v2765
    %2982 = vmatprep.subr.bf16.mxu0 %v2770
    %2983 = vmatpush1.bf16.msra.mxu0 %v2769
    %2984 = vmatprep.subr.bf16.mxu0 %v2774
    %2985 = vmatpush1.bf16.msra.mxu0 %v2773
    %2986 = vmatprep.subr.bf16.mxu0 %v2778
    %2987 = vmatpush1.bf16.msra.mxu0 %v2777
    %2988 = vmatprep.subr.bf16.mxu0 %v2782
    %2989 = vmatpush1.bf16.msra.mxu0 %v2781
    %2990 = vmatprep.subr.bf16.mxu0 %v2786
    %2991 = vmatpush1.bf16.msra.mxu0 %v2785
    %2992 = vmatprep.subr.bf16.mxu0 %v2790
    %2993 = vmatpush1.bf16.msra.mxu0 %v2789
    %2994 = vmatprep.mubr.bf16.mxu0 %v2280
    %2995 = vmatmul.mubr.bf16.gmra.mrb[0].mxu0 %v2279
    %v2996 = vpop.f32.mrb[0].mxu0
    %v2997 = vadd.f32 %v2956, %v2996
    %v2998 = vpop.f32.mrb[0].mxu0
    %v2999 = vadd.f32 %v2958, %v2998
    %v3000 = vpop.f32.mrb[0].mxu0
    %v3001 = vpop.f32.mrb[0].mxu0
    %3002 = vdwg.mxu0
    %3003 = vmatprep.subr.bf16.mxu0 %v2668
    %3004 = vmatpush1.bf16.msra.mxu0 %v2667
    %3005 = vmatprep.subr.bf16.mxu0 %v2672
    %3006 = vmatpush1.bf16.msra.mxu0 %v2671
    %3007 = vmatprep.subr.bf16.mxu0 %v2676
    %3008 = vmatpush1.bf16.msra.mxu0 %v2675
    %3009 = vmatprep.subr.bf16.mxu0 %v2680
    %3010 = vmatpush1.bf16.msra.mxu0 %v2679
    %3011 = vmatprep.subr.bf16.mxu0 %v2684
    %3012 = vmatpush1.bf16.msra.mxu0 %v2683
    %3013 = vmatprep.subr.bf16.mxu0 %v2688
    %3014 = vmatpush1.bf16.msra.mxu0 %v2687
    %3015 = vmatprep.subr.bf16.mxu0 %v2692
    %3016 = vmatpush1.bf16.msra.mxu0 %v2691
    %3017 = vmatprep.subr.bf16.mxu0 %v2696
    %3018 = vmatpush1.bf16.msra.mxu0 %v2695
    %3019 = vmatprep.subr.bf16.mxu0 %v2700
    %3020 = vmatpush1.bf16.msra.mxu0 %v2699
    %3021 = vmatprep.subr.bf16.mxu0 %v2704
    %3022 = vmatpush1.bf16.msra.mxu0 %v2703
    %3023 = vmatprep.subr.bf16.mxu0 %v2708
    %3024 = vmatpush1.bf16.msra.mxu0 %v2707
    %3025 = vmatprep.subr.bf16.mxu0 %v2712
    %3026 = vmatpush1.bf16.msra.mxu0 %v2711
    %3027 = vmatprep.subr.bf16.mxu0 %v2716
    %3028 = vmatpush1.bf16.msra.mxu0 %v2715
    %3029 = vmatprep.subr.bf16.mxu0 %v2720
    %3030 = vmatpush1.bf16.msra.mxu0 %v2719
    %3031 = vmatprep.subr.bf16.mxu0 %v2724
    %3032 = vmatpush1.bf16.msra.mxu0 %v2723
    %3033 = vmatprep.subr.bf16.mxu0 %v2728
    %3034 = vmatpush1.bf16.msra.mxu0 %v2727
    %3035 = vmatprep.mubr.bf16.mxu0 %v2278
    %3036 = vmatmul.mubr.bf16.gmra.mrb[0].mxu0 %v2277
    %v3037 = vpop.f32.mrb[0].mxu0
    %v3038 = vadd.f32 %v2117, %v3037
    %v3039 = vpop.f32.mrb[0].mxu0
    %v3040 = vadd.f32 %v2119, %v3039
    %v3041 = vpop.f32.mrb[0].mxu0
    %v3042 = vpop.f32.mrb[0].mxu0
    %3043 = vdwg.mxu0
    %3044 = vmatprep.subr.bf16.mxu0 %v2732
    %3045 = vmatpush1.bf16.msra.mxu0 %v2731
    %3046 = vmatprep.subr.bf16.mxu0 %v2736
    %3047 = vmatpush1.bf16.msra.mxu0 %v2735
    %3048 = vmatprep.subr.bf16.mxu0 %v2740
    %3049 = vmatpush1.bf16.msra.mxu0 %v2739
    %3050 = vmatprep.subr.bf16.mxu0 %v2744
    %3051 = vmatpush1.bf16.msra.mxu0 %v2743
    %3052 = vmatprep.subr.bf16.mxu0 %v2748
    %3053 = vmatpush1.bf16.msra.mxu0 %v2747
    %3054 = vmatprep.subr.bf16.mxu0 %v2752
    %3055 = vmatpush1.bf16.msra.mxu0 %v2751
    %3056 = vmatprep.subr.bf16.mxu0 %v2756
    %3057 = vmatpush1.bf16.msra.mxu0 %v2755
    %3058 = vmatprep.subr.bf16.mxu0 %v2760
    %3059 = vmatpush1.bf16.msra.mxu0 %v2759
    %3060 = vmatprep.subr.bf16.mxu0 %v2764
    %3061 = vmatpush1.bf16.msra.mxu0 %v2763
    %3062 = vmatprep.subr.bf16.mxu0 %v2768
    %3063 = vmatpush1.bf16.msra.mxu0 %v2767
    %3064 = vmatprep.subr.bf16.mxu0 %v2772
    %3065 = vmatpush1.bf16.msra.mxu0 %v2771
    %3066 = vmatprep.subr.bf16.mxu0 %v2776
    %3067 = vmatpush1.bf16.msra.mxu0 %v2775
    %3068 = vmatprep.subr.bf16.mxu0 %v2780
    %3069 = vmatpush1.bf16.msra.mxu0 %v2779
    %3070 = vmatprep.subr.bf16.mxu0 %v2784
    %3071 = vmatpush1.bf16.msra.mxu0 %v2783
    %3072 = vmatprep.subr.bf16.mxu0 %v2788
    %3073 = vmatpush1.bf16.msra.mxu0 %v2787
    %3074 = vmatprep.subr.bf16.mxu0 %v2792
    %3075 = vmatpush1.bf16.msra.mxu0 %v2791
    %3076 = vmatprep.mubr.bf16.mxu0 %v2280
    %3077 = vmatmul.mubr.bf16.gmra.mrb[0].mxu0 %v2279
    %v3078 = vpop.f32.mrb[0].mxu0
    %v3079 = vadd.f32 %v3038, %v3078
    %v3080 = vpop.f32.mrb[0].mxu0
    %v3081 = vadd.f32 %v3040, %v3080
    %v3082 = vpop.f32.mrb[0].mxu0
    %v3083 = vpop.f32.mrb[0].mxu0
    %3084 = vdwg.mxu0
    %v3085 = vpack.c.bf16 %v2997, %v2997
    %v3086 = vpack.c.bf16 %v2999, %v2999
    %v3087 = vpack.c.bf16 %v3079, %v3079
    %v3088 = vpack.c.bf16 %v3081, %v3081
    %3089 = vmatprep.subr.bf16.mxu0 %v2666
    %3090 = vmatpush1.bf16.msra.mxu0 %v2665
    %3091 = vmatprep.subr.bf16.mxu0 %v2670
    %3092 = vmatpush1.bf16.msra.mxu0 %v2669
    %3093 = vmatprep.subr.bf16.mxu0 %v2674
    %3094 = vmatpush1.bf16.msra.mxu0 %v2673
    %3095 = vmatprep.subr.bf16.mxu0 %v2678
    %3096 = vmatpush1.bf16.msra.mxu0 %v2677
    %3097 = vmatprep.subr.bf16.mxu0 %v2682
    %3098 = vmatpush1.bf16.msra.mxu0 %v2681
    %3099 = vmatprep.subr.bf16.mxu0 %v2686
    %3100 = vmatpush1.bf16.msra.mxu0 %v2685
    %3101 = vmatprep.subr.bf16.mxu0 %v2690
    %3102 = vmatpush1.bf16.msra.mxu0 %v2689
    %3103 = vmatprep.subr.bf16.mxu0 %v2694
    %3104 = vmatpush1.bf16.msra.mxu0 %v2693
    %3105 = vmatprep.subr.bf16.mxu0 %v2698
    %3106 = vmatpush1.bf16.msra.mxu0 %v2697
    %3107 = vmatprep.subr.bf16.mxu0 %v2702
    %3108 = vmatpush1.bf16.msra.mxu0 %v2701
    %3109 = vmatprep.subr.bf16.mxu0 %v2706
    %3110 = vmatpush1.bf16.msra.mxu0 %v2705
    %3111 = vmatprep.subr.bf16.mxu0 %v2710
    %3112 = vmatpush1.bf16.msra.mxu0 %v2709
    %3113 = vmatprep.subr.bf16.mxu0 %v2714
    %3114 = vmatpush1.bf16.msra.mxu0 %v2713
    %3115 = vmatprep.subr.bf16.mxu0 %v2718
    %3116 = vmatpush1.bf16.msra.mxu0 %v2717
    %3117 = vmatprep.subr.bf16.mxu0 %v2722
    %3118 = vmatpush1.bf16.msra.mxu0 %v2721
    %3119 = vmatprep.subr.bf16.mxu0 %v2726
    %3120 = vmatpush1.bf16.msra.mxu0 %v2725
    %3121 = vmatprep.mubr.bf16.mxu0 %v3086
    %3122 = vmatmul.mubr.bf16.gmra.mrb[0].mxu0 %v3085
    %v3123 = vpop.f32.mrb[0].mxu0
    %v3124 = vadd.f32 %v1981, %v3123
    %v3125 = vpop.f32.mrb[0].mxu0
    %v3126 = vadd.f32 %v1983, %v3125
    %v3127 = vpop.f32.mrb[0].mxu0
    %v3128 = vpop.f32.mrb[0].mxu0
    %3129 = vdwg.mxu0
    %3130 = vmatprep.subr.bf16.mxu0 %v2730
    %3131 = vmatpush1.bf16.msra.mxu0 %v2729
    %3132 = vmatprep.subr.bf16.mxu0 %v2734
    %3133 = vmatpush1.bf16.msra.mxu0 %v2733
    %3134 = vmatprep.subr.bf16.mxu0 %v2738
    %3135 = vmatpush1.bf16.msra.mxu0 %v2737
    %3136 = vmatprep.subr.bf16.mxu0 %v2742
    %3137 = vmatpush1.bf16.msra.mxu0 %v2741
    %3138 = vmatprep.subr.bf16.mxu0 %v2746
    %3139 = vmatpush1.bf16.msra.mxu0 %v2745
    %3140 = vmatprep.subr.bf16.mxu0 %v2750
    %3141 = vmatpush1.bf16.msra.mxu0 %v2749
    %3142 = vmatprep.subr.bf16.mxu0 %v2754
    %3143 = vmatpush1.bf16.msra.mxu0 %v2753
    %3144 = vmatprep.subr.bf16.mxu0 %v2758
    %3145 = vmatpush1.bf16.msra.mxu0 %v2757
    %3146 = vmatprep.subr.bf16.mxu0 %v2762
    %3147 = vmatpush1.bf16.msra.mxu0 %v2761
    %3148 = vmatprep.subr.bf16.mxu0 %v2766
    %3149 = vmatpush1.bf16.msra.mxu0 %v2765
    %3150 = vmatprep.subr.bf16.mxu0 %v2770
    %3151 = vmatpush1.bf16.msra.mxu0 %v2769
    %3152 = vmatprep.subr.bf16.mxu0 %v2774
    %3153 = vmatpush1.bf16.msra.mxu0 %v2773
    %3154 = vmatprep.subr.bf16.mxu0 %v2778
    %3155 = vmatpush1.bf16.msra.mxu0 %v2777
    %3156 = vmatprep.subr.bf16.mxu0 %v2782
    %3157 = vmatpush1.bf16.msra.mxu0 %v2781
    %3158 = vmatprep.subr.bf16.mxu0 %v2786
    %3159 = vmatpush1.bf16.msra.mxu0 %v2785
    %3160 = vmatprep.subr.bf16.mxu0 %v2790
    %3161 = vmatpush1.bf16.msra.mxu0 %v2789
    %3162 = vmatprep.mubr.bf16.mxu0 %v3088
    %3163 = vmatmul.mubr.bf16.gmra.mrb[0].mxu0 %v3087
    %v3164 = vpop.f32.mrb[0].mxu0
    %v3165 = vadd.f32 %v3124, %v3164
    %v3166 = vpop.f32.mrb[0].mxu0
    %v3167 = vadd.f32 %v3126, %v3166
    %v3168 = vpop.f32.mrb[0].mxu0
    %v3169 = vpop.f32.mrb[0].mxu0
    %3170 = vdwg.mxu0
    %3171 = vmatprep.subr.bf16.mxu0 %v2668
    %3172 = vmatpush1.bf16.msra.mxu0 %v2667
    %3173 = vmatprep.subr.bf16.mxu0 %v2672
    %3174 = vmatpush1.bf16.msra.mxu0 %v2671
    %3175 = vmatprep.subr.bf16.mxu0 %v2676
    %3176 = vmatpush1.bf16.msra.mxu0 %v2675
    %3177 = vmatprep.subr.bf16.mxu0 %v2680
    %3178 = vmatpush1.bf16.msra.mxu0 %v2679
    %3179 = vmatprep.subr.bf16.mxu0 %v2684
    %3180 = vmatpush1.bf16.msra.mxu0 %v2683
    %3181 = vmatprep.subr.bf16.mxu0 %v2688
    %3182 = vmatpush1.bf16.msra.mxu0 %v2687
    %3183 = vmatprep.subr.bf16.mxu0 %v2692
    %3184 = vmatpush1.bf16.msra.mxu0 %v2691
    %3185 = vmatprep.subr.bf16.mxu0 %v2696
    %3186 = vmatpush1.bf16.msra.mxu0 %v2695
    %3187 = vmatprep.subr.bf16.mxu0 %v2700
    %3188 = vmatpush1.bf16.msra.mxu0 %v2699
    %3189 = vmatprep.subr.bf16.mxu0 %v2704
    %3190 = vmatpush1.bf16.msra.mxu0 %v2703
    %3191 = vmatprep.subr.bf16.mxu0 %v2708
    %3192 = vmatpush1.bf16.msra.mxu0 %v2707
    %3193 = vmatprep.subr.bf16.mxu0 %v2712
    %3194 = vmatpush1.bf16.msra.mxu0 %v2711
    %3195 = vmatprep.subr.bf16.mxu0 %v2716
    %3196 = vmatpush1.bf16.msra.mxu0 %v2715
    %3197 = vmatprep.subr.bf16.mxu0 %v2720
    %3198 = vmatpush1.bf16.msra.mxu0 %v2719
    %3199 = vmatprep.subr.bf16.mxu0 %v2724
    %3200 = vmatpush1.bf16.msra.mxu0 %v2723
    %3201 = vmatprep.subr.bf16.mxu0 %v2728
    %3202 = vmatpush1.bf16.msra.mxu0 %v2727
    %3203 = vmatprep.mubr.bf16.mxu0 %v3086
    %3204 = vmatmul.mubr.bf16.gmra.mrb[0].mxu0 %v3085
    %v3205 = vpop.f32.mrb[0].mxu0
    %v3206 = vadd.f32 %v2123, %v3205
    %v3207 = vpop.f32.mrb[0].mxu0
    %v3208 = vadd.f32 %v2125, %v3207
    %v3209 = vpop.f32.mrb[0].mxu0
    %v3210 = vpop.f32.mrb[0].mxu0
    %3211 = vdwg.mxu0
    %3212 = vmatprep.subr.bf16.mxu0 %v2732
    %3213 = vmatpush1.bf16.msra.mxu0 %v2731
    %3214 = vmatprep.subr.bf16.mxu0 %v2736
    %3215 = vmatpush1.bf16.msra.mxu0 %v2735
    %3216 = vmatprep.subr.bf16.mxu0 %v2740
    %3217 = vmatpush1.bf16.msra.mxu0 %v2739
    %3218 = vmatprep.subr.bf16.mxu0 %v2744
    %3219 = vmatpush1.bf16.msra.mxu0 %v2743
    %3220 = vmatprep.subr.bf16.mxu0 %v2748
    %3221 = vmatpush1.bf16.msra.mxu0 %v2747
    %3222 = vmatprep.subr.bf16.mxu0 %v2752
    %3223 = vmatpush1.bf16.msra.mxu0 %v2751
    %3224 = vmatprep.subr.bf16.mxu0 %v2756
    %3225 = vmatpush1.bf16.msra.mxu0 %v2755
    %3226 = vmatprep.subr.bf16.mxu0 %v2760
    %3227 = vmatpush1.bf16.msra.mxu0 %v2759
    %3228 = vmatprep.subr.bf16.mxu0 %v2764
    %3229 = vmatpush1.bf16.msra.mxu0 %v2763
    %3230 = vmatprep.subr.bf16.mxu0 %v2768
    %3231 = vmatpush1.bf16.msra.mxu0 %v2767
    %3232 = vmatprep.subr.bf16.mxu0 %v2772
    %3233 = vmatpush1.bf16.msra.mxu0 %v2771
    %3234 = vmatprep.subr.bf16.mxu0 %v2776
    %3235 = vmatpush1.bf16.msra.mxu0 %v2775
    %3236 = vmatprep.subr.bf16.mxu0 %v2780
    %3237 = vmatpush1.bf16.msra.mxu0 %v2779
    %3238 = vmatprep.subr.bf16.mxu0 %v2784
    %3239 = vmatpush1.bf16.msra.mxu0 %v2783
    %3240 = vmatprep.subr.bf16.mxu0 %v2788
    %3241 = vmatpush1.bf16.msra.mxu0 %v2787
    %3242 = vmatprep.subr.bf16.mxu0 %v2792
    %3243 = vmatpush1.bf16.msra.mxu0 %v2791
    %3244 = vmatprep.mubr.bf16.mxu0 %v3088
    %3245 = vmatmul.mubr.bf16.gmra.mrb[0].mxu0 %v3087
    %v3246 = vpop.f32.mrb[0].mxu0
    %v3247 = vadd.f32 %v3206, %v3246
    %v3248 = vpop.f32.mrb[0].mxu0
    %v3249 = vadd.f32 %v3208, %v3248
    %v3250 = vpop.f32.mrb[0].mxu0
    %v3251 = vpop.f32.mrb[0].mxu0
    %3252 = vdwg.mxu0
    %v3253 = vpack.c.bf16 %v3165, %v3165
    %v3254 = vpack.c.bf16 %v3167, %v3167
    %v3255 = vpack.c.bf16 %v3247, %v3247
    %v3256 = vpack.c.bf16 %v3249, %v3249
    %3257 = vmatprep.subr.bf16.mxu0 %v2666
    %3258 = vmatpush1.bf16.msra.mxu0 %v2665
    %3259 = vmatprep.subr.bf16.mxu0 %v2670
    %3260 = vmatpush1.bf16.msra.mxu0 %v2669
    %3261 = vmatprep.subr.bf16.mxu0 %v2674
    %3262 = vmatpush1.bf16.msra.mxu0 %v2673
    %3263 = vmatprep.subr.bf16.mxu0 %v2678
    %3264 = vmatpush1.bf16.msra.mxu0 %v2677
    %3265 = vmatprep.subr.bf16.mxu0 %v2682
    %3266 = vmatpush1.bf16.msra.mxu0 %v2681
    %3267 = vmatprep.subr.bf16.mxu0 %v2686
    %3268 = vmatpush1.bf16.msra.mxu0 %v2685
    %3269 = vmatprep.subr.bf16.mxu0 %v2690
    %3270 = vmatpush1.bf16.msra.mxu0 %v2689
    %3271 = vmatprep.subr.bf16.mxu0 %v2694
    %3272 = vmatpush1.bf16.msra.mxu0 %v2693
    %3273 = vmatprep.subr.bf16.mxu0 %v2698
    %3274 = vmatpush1.bf16.msra.mxu0 %v2697
    %3275 = vmatprep.subr.bf16.mxu0 %v2702
    %3276 = vmatpush1.bf16.msra.mxu0 %v2701
    %3277 = vmatprep.subr.bf16.mxu0 %v2706
    %3278 = vmatpush1.bf16.msra.mxu0 %v2705
    %3279 = vmatprep.subr.bf16.mxu0 %v2710
    %3280 = vmatpush1.bf16.msra.mxu0 %v2709
    %3281 = vmatprep.subr.bf16.mxu0 %v2714
    %3282 = vmatpush1.bf16.msra.mxu0 %v2713
    %3283 = vmatprep.subr.bf16.mxu0 %v2718
    %3284 = vmatpush1.bf16.msra.mxu0 %v2717
    %3285 = vmatprep.subr.bf16.mxu0 %v2722
    %3286 = vmatpush1.bf16.msra.mxu0 %v2721
    %3287 = vmatprep.subr.bf16.mxu0 %v2726
    %3288 = vmatpush1.bf16.msra.mxu0 %v2725
    %3289 = vmatprep.mubr.bf16.mxu0 %v3254
    %3290 = vmatmul.mubr.bf16.gmra.mrb[0].mxu0 %v3253
    %v3291 = vpop.f32.mrb[0].mxu0
    %v3292 = vadd.f32 %v1985, %v3291
    %v3293 = vpop.f32.mrb[0].mxu0
    %v3294 = vadd.f32 %v1987, %v3293
    %v3295 = vpop.f32.mrb[0].mxu0
    %v3296 = vpop.f32.mrb[0].mxu0
    %3297 = vdwg.mxu0
    %3298 = vmatprep.subr.bf16.mxu0 %v2730
    %3299 = vmatpush1.bf16.msra.mxu0 %v2729
    %3300 = vmatprep.subr.bf16.mxu0 %v2734
    %3301 = vmatpush1.bf16.msra.mxu0 %v2733
    %3302 = vmatprep.subr.bf16.mxu0 %v2738
    %3303 = vmatpush1.bf16.msra.mxu0 %v2737
    %3304 = vmatprep.subr.bf16.mxu0 %v2742
    %3305 = vmatpush1.bf16.msra.mxu0 %v2741
    %3306 = vmatprep.subr.bf16.mxu0 %v2746
    %3307 = vmatpush1.bf16.msra.mxu0 %v2745
    %3308 = vmatprep.subr.bf16.mxu0 %v2750
    %3309 = vmatpush1.bf16.msra.mxu0 %v2749
    %3310 = vmatprep.subr.bf16.mxu0 %v2754
    %3311 = vmatpush1.bf16.msra.mxu0 %v2753
    %3312 = vmatprep.subr.bf16.mxu0 %v2758
    %3313 = vmatpush1.bf16.msra.mxu0 %v2757
    %3314 = vmatprep.subr.bf16.mxu0 %v2762
    %3315 = vmatpush1.bf16.msra.mxu0 %v2761
    %3316 = vmatprep.subr.bf16.mxu0 %v2766
    %3317 = vmatpush1.bf16.msra.mxu0 %v2765
    %3318 = vmatprep.subr.bf16.mxu0 %v2770
    %3319 = vmatpush1.bf16.msra.mxu0 %v2769
    %3320 = vmatprep.subr.bf16.mxu0 %v2774
    %3321 = vmatpush1.bf16.msra.mxu0 %v2773
    %3322 = vmatprep.subr.bf16.mxu0 %v2778
    %3323 = vmatpush1.bf16.msra.mxu0 %v2777
    %3324 = vmatprep.subr.bf16.mxu0 %v2782
    %3325 = vmatpush1.bf16.msra.mxu0 %v2781
    %3326 = vmatprep.subr.bf16.mxu0 %v2786
    %3327 = vmatpush1.bf16.msra.mxu0 %v2785
    %3328 = vmatprep.subr.bf16.mxu0 %v2790
    %3329 = vmatpush1.bf16.msra.mxu0 %v2789
    %3330 = vmatprep.mubr.bf16.mxu0 %v3256
    %3331 = vmatmul.mubr.bf16.gmra.mrb[0].mxu0 %v3255
    %v3332 = vpop.f32.mrb[0].mxu0
    %v3333 = vadd.f32 %v3292, %v3332
    %v3334 = vpop.f32.mrb[0].mxu0
    %v3335 = vadd.f32 %v3294, %v3334
    %v3336 = vpop.f32.mrb[0].mxu0
    %v3337 = vpop.f32.mrb[0].mxu0
    %3338 = vdwg.mxu0
    %3339 = vmatprep.subr.bf16.mxu0 %v2668
    %3340 = vmatpush1.bf16.msra.mxu0 %v2667
    %3341 = vmatprep.subr.bf16.mxu0 %v2672
    %3342 = vmatpush1.bf16.msra.mxu0 %v2671
    %3343 = vmatprep.subr.bf16.mxu0 %v2676
    %3344 = vmatpush1.bf16.msra.mxu0 %v2675
    %3345 = vmatprep.subr.bf16.mxu0 %v2680
    %3346 = vmatpush1.bf16.msra.mxu0 %v2679
    %3347 = vmatprep.subr.bf16.mxu0 %v2684
    %3348 = vmatpush1.bf16.msra.mxu0 %v2683
    %3349 = vmatprep.subr.bf16.mxu0 %v2688
    %3350 = vmatpush1.bf16.msra.mxu0 %v2687
    %3351 = vmatprep.subr.bf16.mxu0 %v2692
    %3352 = vmatpush1.bf16.msra.mxu0 %v2691
    %3353 = vmatprep.subr.bf16.mxu0 %v2696
    %3354 = vmatpush1.bf16.msra.mxu0 %v2695
    %3355 = vmatprep.subr.bf16.mxu0 %v2700
    %3356 = vmatpush1.bf16.msra.mxu0 %v2699
    %3357 = vmatprep.subr.bf16.mxu0 %v2704
    %3358 = vmatpush1.bf16.msra.mxu0 %v2703
    %3359 = vmatprep.subr.bf16.mxu0 %v2708
    %3360 = vmatpush1.bf16.msra.mxu0 %v2707
    %3361 = vmatprep.subr.bf16.mxu0 %v2712
    %3362 = vmatpush1.bf16.msra.mxu0 %v2711
    %3363 = vmatprep.subr.bf16.mxu0 %v2716
    %3364 = vmatpush1.bf16.msra.mxu0 %v2715
    %3365 = vmatprep.subr.bf16.mxu0 %v2720
    %3366 = vmatpush1.bf16.msra.mxu0 %v2719
    %3367 = vmatprep.subr.bf16.mxu0 %v2724
    %3368 = vmatpush1.bf16.msra.mxu0 %v2723
    %3369 = vmatprep.subr.bf16.mxu0 %v2728
    %3370 = vmatpush1.bf16.msra.mxu0 %v2727
    %3371 = vmatprep.mubr.bf16.mxu0 %v3254
    %3372 = vmatmul.mubr.bf16.gmra.mrb[0].mxu0 %v3253
    %v3373 = vpop.f32.mrb[0].mxu0
    %v3374 = vadd.f32 %v2127, %v3373
    %v3375 = vpop.f32.mrb[0].mxu0
    %v3376 = vadd.f32 %v2129, %v3375
    %v3377 = vpop.f32.mrb[0].mxu0
    %v3378 = vpop.f32.mrb[0].mxu0
    %3379 = vdwg.mxu0
    %3380 = vmatprep.subr.bf16.mxu0 %v2732
    %3381 = vmatpush1.bf16.msra.mxu0 %v2731
    %3382 = vmatprep.subr.bf16.mxu0 %v2736
    %3383 = vmatpush1.bf16.msra.mxu0 %v2735
    %3384 = vmatprep.subr.bf16.mxu0 %v2740
    %3385 = vmatpush1.bf16.msra.mxu0 %v2739
    %3386 = vmatprep.subr.bf16.mxu0 %v2744
    %3387 = vmatpush1.bf16.msra.mxu0 %v2743
    %3388 = vmatprep.subr.bf16.mxu0 %v2748
    %3389 = vmatpush1.bf16.msra.mxu0 %v2747
    %3390 = vmatprep.subr.bf16.mxu0 %v2752
    %3391 = vmatpush1.bf16.msra.mxu0 %v2751
    %3392 = vmatprep.subr.bf16.mxu0 %v2756
    %3393 = vmatpush1.bf16.msra.mxu0 %v2755
    %3394 = vmatprep.subr.bf16.mxu0 %v2760
    %3395 = vmatpush1.bf16.msra.mxu0 %v2759
    %3396 = vmatprep.subr.bf16.mxu0 %v2764
    %3397 = vmatpush1.bf16.msra.mxu0 %v2763
    %3398 = vmatprep.subr.bf16.mxu0 %v2768
    %3399 = vmatpush1.bf16.msra.mxu0 %v2767
    %3400 = vmatprep.subr.bf16.mxu0 %v2772
    %3401 = vmatpush1.bf16.msra.mxu0 %v2771
    %3402 = vmatprep.subr.bf16.mxu0 %v2776
    %3403 = vmatpush1.bf16.msra.mxu0 %v2775
    %3404 = vmatprep.subr.bf16.mxu0 %v2780
    %3405 = vmatpush1.bf16.msra.mxu0 %v2779
    %3406 = vmatprep.subr.bf16.mxu0 %v2784
    %3407 = vmatpush1.bf16.msra.mxu0 %v2783
    %3408 = vmatprep.subr.bf16.mxu0 %v2788
    %3409 = vmatpush1.bf16.msra.mxu0 %v2787
    %3410 = vmatprep.subr.bf16.mxu0 %v2792
    %3411 = vmatpush1.bf16.msra.mxu0 %v2791
    %3412 = vmatprep.mubr.bf16.mxu0 %v3256
    %3413 = vmatmul.mubr.bf16.gmra.mrb[0].mxu0 %v3255
    %v3414 = vpop.f32.mrb[0].mxu0
    %v3415 = vadd.f32 %v3374, %v3414
    %v3416 = vpop.f32.mrb[0].mxu0
    %v3417 = vadd.f32 %v3376, %v3416
    %v3418 = vpop.f32.mrb[0].mxu0
    %v3419 = vpop.f32.mrb[0].mxu0
    %3420 = vdwg.mxu0
    %v3421 = vpack.c.bf16 %v3333, %v3333
    %v3422 = vpack.c.bf16 %v3335, %v3335
    %v3423 = vpack.c.bf16 %v3415, %v3415
    %v3424 = vpack.c.bf16 %v3417, %v3417
    %3425 = vmatprep.subr.bf16.mxu0 %v2666
    %3426 = vmatpush1.bf16.msra.mxu0 %v2665
    %3427 = vmatprep.subr.bf16.mxu0 %v2670
    %3428 = vmatpush1.bf16.msra.mxu0 %v2669
    %3429 = vmatprep.subr.bf16.mxu0 %v2674
    %3430 = vmatpush1.bf16.msra.mxu0 %v2673
    %3431 = vmatprep.subr.bf16.mxu0 %v2678
    %3432 = vmatpush1.bf16.msra.mxu0 %v2677
    %3433 = vmatprep.subr.bf16.mxu0 %v2682
    %3434 = vmatpush1.bf16.msra.mxu0 %v2681
    %3435 = vmatprep.subr.bf16.mxu0 %v2686
    %3436 = vmatpush1.bf16.msra.mxu0 %v2685
    %3437 = vmatprep.subr.bf16.mxu0 %v2690
    %3438 = vmatpush1.bf16.msra.mxu0 %v2689
    %3439 = vmatprep.subr.bf16.mxu0 %v2694
    %3440 = vmatpush1.bf16.msra.mxu0 %v2693
    %3441 = vmatprep.subr.bf16.mxu0 %v2698
    %3442 = vmatpush1.bf16.msra.mxu0 %v2697
    %3443 = vmatprep.subr.bf16.mxu0 %v2702
    %3444 = vmatpush1.bf16.msra.mxu0 %v2701
    %3445 = vmatprep.subr.bf16.mxu0 %v2706
    %3446 = vmatpush1.bf16.msra.mxu0 %v2705
    %3447 = vmatprep.subr.bf16.mxu0 %v2710
    %3448 = vmatpush1.bf16.msra.mxu0 %v2709
    %3449 = vmatprep.subr.bf16.mxu0 %v2714
    %3450 = vmatpush1.bf16.msra.mxu0 %v2713
    %3451 = vmatprep.subr.bf16.mxu0 %v2718
    %3452 = vmatpush1.bf16.msra.mxu0 %v2717
    %3453 = vmatprep.subr.bf16.mxu0 %v2722
    %3454 = vmatpush1.bf16.msra.mxu0 %v2721
    %3455 = vmatprep.subr.bf16.mxu0 %v2726
    %3456 = vmatpush1.bf16.msra.mxu0 %v2725
    %3457 = vmatprep.mubr.bf16.mxu0 %v3422
    %3458 = vmatmul.mubr.bf16.gmra.mrb[0].mxu0 %v3421
    %v3459 = vpop.f32.mrb[0].mxu0
    %v3460 = vadd.f32 %v1991, %v3459
    %v3461 = vpop.f32.mrb[0].mxu0
    %v3462 = vadd.f32 %v1993, %v3461
    %v3463 = vpop.f32.mrb[0].mxu0
    %v3464 = vpop.f32.mrb[0].mxu0
    %3465 = vdwg.mxu0
    %3466 = vmatprep.subr.bf16.mxu0 %v2730
    %3467 = vmatpush1.bf16.msra.mxu0 %v2729
    %3468 = vmatprep.subr.bf16.mxu0 %v2734
    %3469 = vmatpush1.bf16.msra.mxu0 %v2733
    %3470 = vmatprep.subr.bf16.mxu0 %v2738
    %3471 = vmatpush1.bf16.msra.mxu0 %v2737
    %3472 = vmatprep.subr.bf16.mxu0 %v2742
    %3473 = vmatpush1.bf16.msra.mxu0 %v2741
    %3474 = vmatprep.subr.bf16.mxu0 %v2746
    %3475 = vmatpush1.bf16.msra.mxu0 %v2745
    %3476 = vmatprep.subr.bf16.mxu0 %v2750
    %3477 = vmatpush1.bf16.msra.mxu0 %v2749
    %3478 = vmatprep.subr.bf16.mxu0 %v2754
    %3479 = vmatpush1.bf16.msra.mxu0 %v2753
    %3480 = vmatprep.subr.bf16.mxu0 %v2758
    %3481 = vmatpush1.bf16.msra.mxu0 %v2757
    %3482 = vmatprep.subr.bf16.mxu0 %v2762
    %3483 = vmatpush1.bf16.msra.mxu0 %v2761
    %3484 = vmatprep.subr.bf16.mxu0 %v2766
    %3485 = vmatpush1.bf16.msra.mxu0 %v2765
    %3486 = vmatprep.subr.bf16.mxu0 %v2770
    %3487 = vmatpush1.bf16.msra.mxu0 %v2769
    %3488 = vmatprep.subr.bf16.mxu0 %v2774
    %3489 = vmatpush1.bf16.msra.mxu0 %v2773
    %3490 = vmatprep.subr.bf16.mxu0 %v2778
    %3491 = vmatpush1.bf16.msra.mxu0 %v2777
    %3492 = vmatprep.subr.bf16.mxu0 %v2782
    %3493 = vmatpush1.bf16.msra.mxu0 %v2781
    %3494 = vmatprep.subr.bf16.mxu0 %v2786
    %3495 = vmatpush1.bf16.msra.mxu0 %v2785
    %3496 = vmatprep.subr.bf16.mxu0 %v2790
    %3497 = vmatpush1.bf16.msra.mxu0 %v2789
    %3498 = vmatprep.mubr.bf16.mxu0 %v3424
    %3499 = vmatmul.mubr.bf16.gmra.mrb[0].mxu0 %v3423
    %v3500 = vpop.f32.mrb[0].mxu0
    %v3501 = vadd.f32 %v3460, %v3500
    %v3502 = vpop.f32.mrb[0].mxu0
    %v3503 = vadd.f32 %v3462, %v3502
    %v3504 = vpop.f32.mrb[0].mxu0
    %v3505 = vpop.f32.mrb[0].mxu0
    %3506 = vdwg.mxu0
    %3507 = vmatprep.subr.bf16.mxu0 %v2668
    %3508 = vmatpush1.bf16.msra.mxu0 %v2667
    %3509 = vmatprep.subr.bf16.mxu0 %v2672
    %3510 = vmatpush1.bf16.msra.mxu0 %v2671
    %3511 = vmatprep.subr.bf16.mxu0 %v2676
    %3512 = vmatpush1.bf16.msra.mxu0 %v2675
    %3513 = vmatprep.subr.bf16.mxu0 %v2680
    %3514 = vmatpush1.bf16.msra.mxu0 %v2679
    %3515 = vmatprep.subr.bf16.mxu0 %v2684
    %3516 = vmatpush1.bf16.msra.mxu0 %v2683
    %3517 = vmatprep.subr.bf16.mxu0 %v2688
    %3518 = vmatpush1.bf16.msra.mxu0 %v2687
    %3519 = vmatprep.subr.bf16.mxu0 %v2692
    %3520 = vmatpush1.bf16.msra.mxu0 %v2691
    %3521 = vmatprep.subr.bf16.mxu0 %v2696
    %3522 = vmatpush1.bf16.msra.mxu0 %v2695
    %3523 = vmatprep.subr.bf16.mxu0 %v2700
    %3524 = vmatpush1.bf16.msra.mxu0 %v2699
    %3525 = vmatprep.subr.bf16.mxu0 %v2704
    %3526 = vmatpush1.bf16.msra.mxu0 %v2703
    %3527 = vmatprep.subr.bf16.mxu0 %v2708
    %3528 = vmatpush1.bf16.msra.mxu0 %v2707
    %3529 = vmatprep.subr.bf16.mxu0 %v2712
    %3530 = vmatpush1.bf16.msra.mxu0 %v2711
    %3531 = vmatprep.subr.bf16.mxu0 %v2716
    %3532 = vmatpush1.bf16.msra.mxu0 %v2715
    %3533 = vmatprep.subr.bf16.mxu0 %v2720
    %3534 = vmatpush1.bf16.msra.mxu0 %v2719
    %3535 = vmatprep.subr.bf16.mxu0 %v2724
    %3536 = vmatpush1.bf16.msra.mxu0 %v2723
    %3537 = vmatprep.subr.bf16.mxu0 %v2728
    %3538 = vmatpush1.bf16.msra.mxu0 %v2727
    %3539 = vmatprep.mubr.bf16.mxu0 %v3422
    %3540 = vmatmul.mubr.bf16.gmra.mrb[0].mxu0 %v3421
    %v3541 = vpop.f32.mrb[0].mxu0
    %v3542 = vadd.f32 %v2133, %v3541
    %v3543 = vpop.f32.mrb[0].mxu0
    %v3544 = vadd.f32 %v2135, %v3543
    %v3545 = vpop.f32.mrb[0].mxu0
    %v3546 = vpop.f32.mrb[0].mxu0
    %3547 = vdwg.mxu0
    %3548 = vmatprep.subr.bf16.mxu0 %v2732
    %3549 = vmatpush1.bf16.msra.mxu0 %v2731
    %3550 = vmatprep.subr.bf16.mxu0 %v2736
    %3551 = vmatpush1.bf16.msra.mxu0 %v2735
    %3552 = vmatprep.subr.bf16.mxu0 %v2740
    %3553 = vmatpush1.bf16.msra.mxu0 %v2739
    %3554 = vmatprep.subr.bf16.mxu0 %v2744
    %3555 = vmatpush1.bf16.msra.mxu0 %v2743
    %3556 = vmatprep.subr.bf16.mxu0 %v2748
    %3557 = vmatpush1.bf16.msra.mxu0 %v2747
    %3558 = vmatprep.subr.bf16.mxu0 %v2752
    %3559 = vmatpush1.bf16.msra.mxu0 %v2751
    %3560 = vmatprep.subr.bf16.mxu0 %v2756
    %3561 = vmatpush1.bf16.msra.mxu0 %v2755
    %3562 = vmatprep.subr.bf16.mxu0 %v2760
    %3563 = vmatpush1.bf16.msra.mxu0 %v2759
    %3564 = vmatprep.subr.bf16.mxu0 %v2764
    %3565 = vmatpush1.bf16.msra.mxu0 %v2763
    %3566 = vmatprep.subr.bf16.mxu0 %v2768
    %3567 = vmatpush1.bf16.msra.mxu0 %v2767
    %3568 = vmatprep.subr.bf16.mxu0 %v2772
    %3569 = vmatpush1.bf16.msra.mxu0 %v2771
    %3570 = vmatprep.subr.bf16.mxu0 %v2776
    %3571 = vmatpush1.bf16.msra.mxu0 %v2775
    %3572 = vmatprep.subr.bf16.mxu0 %v2780
    %3573 = vmatpush1.bf16.msra.mxu0 %v2779
    %3574 = vmatprep.subr.bf16.mxu0 %v2784
    %3575 = vmatpush1.bf16.msra.mxu0 %v2783
    %3576 = vmatprep.subr.bf16.mxu0 %v2788
    %3577 = vmatpush1.bf16.msra.mxu0 %v2787
    %3578 = vmatprep.subr.bf16.mxu0 %v2792
    %3579 = vmatpush1.bf16.msra.mxu0 %v2791
    %3580 = vmatprep.mubr.bf16.mxu0 %v3424
    %3581 = vmatmul.mubr.bf16.gmra.mrb[0].mxu0 %v3423
    %v3582 = vpop.f32.mrb[0].mxu0
    %v3583 = vadd.f32 %v3542, %v3582
    %v3584 = vpop.f32.mrb[0].mxu0
    %v3585 = vadd.f32 %v3544, %v3584
    %v3586 = vpop.f32.mrb[0].mxu0
    %v3587 = vpop.f32.mrb[0].mxu0
    %3588 = vdwg.mxu0
    %v3589 = vpack.c.bf16 %v3501, %v3501
    %v3590 = vpack.c.bf16 %v3503, %v3503
    %v3591 = vpack.c.bf16 %v3583, %v3583
    %v3592 = vpack.c.bf16 %v3585, %v3585
    %3593 = vmatprep.subr.bf16.mxu0 %v2666
    %3594 = vmatpush1.bf16.msra.mxu0 %v2665
    %3595 = vmatprep.subr.bf16.mxu0 %v2670
    %3596 = vmatpush1.bf16.msra.mxu0 %v2669
    %3597 = vmatprep.subr.bf16.mxu0 %v2674
    %3598 = vmatpush1.bf16.msra.mxu0 %v2673
    %3599 = vmatprep.subr.bf16.mxu0 %v2678
    %3600 = vmatpush1.bf16.msra.mxu0 %v2677
    %3601 = vmatprep.subr.bf16.mxu0 %v2682
    %3602 = vmatpush1.bf16.msra.mxu0 %v2681
    %3603 = vmatprep.subr.bf16.mxu0 %v2686
    %3604 = vmatpush1.bf16.msra.mxu0 %v2685
    %3605 = vmatprep.subr.bf16.mxu0 %v2690
    %3606 = vmatpush1.bf16.msra.mxu0 %v2689
    %3607 = vmatprep.subr.bf16.mxu0 %v2694
    %3608 = vmatpush1.bf16.msra.mxu0 %v2693
    %3609 = vmatprep.subr.bf16.mxu0 %v2698
    %3610 = vmatpush1.bf16.msra.mxu0 %v2697
    %3611 = vmatprep.subr.bf16.mxu0 %v2702
    %3612 = vmatpush1.bf16.msra.mxu0 %v2701
    %3613 = vmatprep.subr.bf16.mxu0 %v2706
    %3614 = vmatpush1.bf16.msra.mxu0 %v2705
    %3615 = vmatprep.subr.bf16.mxu0 %v2710
    %3616 = vmatpush1.bf16.msra.mxu0 %v2709
    %3617 = vmatprep.subr.bf16.mxu0 %v2714
    %3618 = vmatpush1.bf16.msra.mxu0 %v2713
    %3619 = vmatprep.subr.bf16.mxu0 %v2718
    %3620 = vmatpush1.bf16.msra.mxu0 %v2717
    %3621 = vmatprep.subr.bf16.mxu0 %v2722
    %3622 = vmatpush1.bf16.msra.mxu0 %v2721
    %3623 = vmatprep.subr.bf16.mxu0 %v2726
    %3624 = vmatpush1.bf16.msra.mxu0 %v2725
    %3625 = vmatprep.mubr.bf16.mxu0 %v3590
    %3626 = vmatmul.mubr.bf16.gmra.mrb[0].mxu0 %v3589
    %v3627 = vpop.f32.mrb[0].mxu0
    %v3628 = vadd.f32 %v1995, %v3627
    %v3629 = vpop.f32.mrb[0].mxu0
    %v3630 = vadd.f32 %v1997, %v3629
    %v3631 = vpop.f32.mrb[0].mxu0
    %v3632 = vpop.f32.mrb[0].mxu0
    %3633 = vdwg.mxu0
    %3634 = vmatprep.subr.bf16.mxu0 %v2730
    %3635 = vmatpush1.bf16.msra.mxu0 %v2729
    %3636 = vmatprep.subr.bf16.mxu0 %v2734
    %3637 = vmatpush1.bf16.msra.mxu0 %v2733
    %3638 = vmatprep.subr.bf16.mxu0 %v2738
    %3639 = vmatpush1.bf16.msra.mxu0 %v2737
    %3640 = vmatprep.subr.bf16.mxu0 %v2742
    %3641 = vmatpush1.bf16.msra.mxu0 %v2741
    %3642 = vmatprep.subr.bf16.mxu0 %v2746
    %3643 = vmatpush1.bf16.msra.mxu0 %v2745
    %3644 = vmatprep.subr.bf16.mxu0 %v2750
    %3645 = vmatpush1.bf16.msra.mxu0 %v2749
    %3646 = vmatprep.subr.bf16.mxu0 %v2754
    %3647 = vmatpush1.bf16.msra.mxu0 %v2753
    %3648 = vmatprep.subr.bf16.mxu0 %v2758
    %3649 = vmatpush1.bf16.msra.mxu0 %v2757
    %3650 = vmatprep.subr.bf16.mxu0 %v2762
    %3651 = vmatpush1.bf16.msra.mxu0 %v2761
    %3652 = vmatprep.subr.bf16.mxu0 %v2766
    %3653 = vmatpush1.bf16.msra.mxu0 %v2765
    %3654 = vmatprep.subr.bf16.mxu0 %v2770
    %3655 = vmatpush1.bf16.msra.mxu0 %v2769
    %3656 = vmatprep.subr.bf16.mxu0 %v2774
    %3657 = vmatpush1.bf16.msra.mxu0 %v2773
    %3658 = vmatprep.subr.bf16.mxu0 %v2778
    %3659 = vmatpush1.bf16.msra.mxu0 %v2777
    %3660 = vmatprep.subr.bf16.mxu0 %v2782
    %3661 = vmatpush1.bf16.msra.mxu0 %v2781
    %3662 = vmatprep.subr.bf16.mxu0 %v2786
    %3663 = vmatpush1.bf16.msra.mxu0 %v2785
    %3664 = vmatprep.subr.bf16.mxu0 %v2790
    %3665 = vmatpush1.bf16.msra.mxu0 %v2789
    %3666 = vmatprep.mubr.bf16.mxu0 %v3592
    %3667 = vmatmul.mubr.bf16.gmra.mrb[0].mxu0 %v3591
    %v3668 = vpop.f32.mrb[0].mxu0
    %v3669 = vadd.f32 %v3628, %v3668
    %v3670 = vpop.f32.mrb[0].mxu0
    %v3671 = vadd.f32 %v3630, %v3670
    %v3672 = vpop.f32.mrb[0].mxu0
    %v3673 = vpop.f32.mrb[0].mxu0
    %3674 = vdwg.mxu0
    %3675 = vmatprep.subr.bf16.mxu0 %v2668
    %3676 = vmatpush1.bf16.msra.mxu0 %v2667
    %3677 = vmatprep.subr.bf16.mxu0 %v2672
    %3678 = vmatpush1.bf16.msra.mxu0 %v2671
    %3679 = vmatprep.subr.bf16.mxu0 %v2676
    %3680 = vmatpush1.bf16.msra.mxu0 %v2675
    %3681 = vmatprep.subr.bf16.mxu0 %v2680
    %3682 = vmatpush1.bf16.msra.mxu0 %v2679
    %3683 = vmatprep.subr.bf16.mxu0 %v2684
    %3684 = vmatpush1.bf16.msra.mxu0 %v2683
    %3685 = vmatprep.subr.bf16.mxu0 %v2688
    %3686 = vmatpush1.bf16.msra.mxu0 %v2687
    %3687 = vmatprep.subr.bf16.mxu0 %v2692
    %3688 = vmatpush1.bf16.msra.mxu0 %v2691
    %3689 = vmatprep.subr.bf16.mxu0 %v2696
    %3690 = vmatpush1.bf16.msra.mxu0 %v2695
    %3691 = vmatprep.subr.bf16.mxu0 %v2700
    %3692 = vmatpush1.bf16.msra.mxu0 %v2699
    %3693 = vmatprep.subr.bf16.mxu0 %v2704
    %3694 = vmatpush1.bf16.msra.mxu0 %v2703
    %3695 = vmatprep.subr.bf16.mxu0 %v2708
    %3696 = vmatpush1.bf16.msra.mxu0 %v2707
    %3697 = vmatprep.subr.bf16.mxu0 %v2712
    %3698 = vmatpush1.bf16.msra.mxu0 %v2711
    %3699 = vmatprep.subr.bf16.mxu0 %v2716
    %3700 = vmatpush1.bf16.msra.mxu0 %v2715
    %3701 = vmatprep.subr.bf16.mxu0 %v2720
    %3702 = vmatpush1.bf16.msra.mxu0 %v2719
    %3703 = vmatprep.subr.bf16.mxu0 %v2724
    %3704 = vmatpush1.bf16.msra.mxu0 %v2723
    %3705 = vmatprep.subr.bf16.mxu0 %v2728
    %3706 = vmatpush1.bf16.msra.mxu0 %v2727
    %3707 = vmatprep.mubr.bf16.mxu0 %v3590
    %3708 = vmatmul.mubr.bf16.gmra.mrb[0].mxu0 %v3589
    %v3709 = vpop.f32.mrb[0].mxu0
    %v3710 = vadd.f32 %v2137, %v3709
    %v3711 = vpop.f32.mrb[0].mxu0
    %v3712 = vadd.f32 %v2139, %v3711
    %v3713 = vpop.f32.mrb[0].mxu0
    %v3714 = vpop.f32.mrb[0].mxu0
    %3715 = vdwg.mxu0
    %3716 = vmatprep.subr.bf16.mxu0 %v2732
    %3717 = vmatpush1.bf16.msra.mxu0 %v2731
    %3718 = vmatprep.subr.bf16.mxu0 %v2736
    %3719 = vmatpush1.bf16.msra.mxu0 %v2735
    %3720 = vmatprep.subr.bf16.mxu0 %v2740
    %3721 = vmatpush1.bf16.msra.mxu0 %v2739
    %3722 = vmatprep.subr.bf16.mxu0 %v2744
    %3723 = vmatpush1.bf16.msra.mxu0 %v2743
    %3724 = vmatprep.subr.bf16.mxu0 %v2748
    %3725 = vmatpush1.bf16.msra.mxu0 %v2747
    %3726 = vmatprep.subr.bf16.mxu0 %v2752
    %3727 = vmatpush1.bf16.msra.mxu0 %v2751
    %3728 = vmatprep.subr.bf16.mxu0 %v2756
    %3729 = vmatpush1.bf16.msra.mxu0 %v2755
    %3730 = vmatprep.subr.bf16.mxu0 %v2760
    %3731 = vmatpush1.bf16.msra.mxu0 %v2759
    %3732 = vmatprep.subr.bf16.mxu0 %v2764
    %3733 = vmatpush1.bf16.msra.mxu0 %v2763
    %3734 = vmatprep.subr.bf16.mxu0 %v2768
    %3735 = vmatpush1.bf16.msra.mxu0 %v2767
    %3736 = vmatprep.subr.bf16.mxu0 %v2772
    %3737 = vmatpush1.bf16.msra.mxu0 %v2771
    %3738 = vmatprep.subr.bf16.mxu0 %v2776
    %3739 = vmatpush1.bf16.msra.mxu0 %v2775
    %3740 = vmatprep.subr.bf16.mxu0 %v2780
    %3741 = vmatpush1.bf16.msra.mxu0 %v2779
    %3742 = vmatprep.subr.bf16.mxu0 %v2784
    %3743 = vmatpush1.bf16.msra.mxu0 %v2783
    %3744 = vmatprep.subr.bf16.mxu0 %v2788
    %3745 = vmatpush1.bf16.msra.mxu0 %v2787
    %3746 = vmatprep.subr.bf16.mxu0 %v2792
    %3747 = vmatpush1.bf16.msra.mxu0 %v2791
    %3748 = vmatprep.mubr.bf16.mxu0 %v3592
    %3749 = vmatmul.mubr.bf16.gmra.mrb[0].mxu0 %v3591
    %v3750 = vpop.f32.mrb[0].mxu0
    %v3751 = vadd.f32 %v3710, %v3750
    %v3752 = vpop.f32.mrb[0].mxu0
    %v3753 = vadd.f32 %v3712, %v3752
    %v3754 = vpop.f32.mrb[0].mxu0
    %v3755 = vpop.f32.mrb[0].mxu0
    %3756 = vdwg.mxu0
    %v3757 = vpack.c.bf16 %v3669, %v3669
    %v3758 = vpack.c.bf16 %v3671, %v3671
    %v3759 = vpack.c.bf16 %v3751, %v3751
    %v3760 = vpack.c.bf16 %v3753, %v3753
    %3761 = vmatprep.subr.bf16.mxu0 %v2666
    %3762 = vmatpush1.bf16.msra.mxu0 %v2665
    %3763 = vmatprep.subr.bf16.mxu0 %v2670
    %3764 = vmatpush1.bf16.msra.mxu0 %v2669
    %3765 = vmatprep.subr.bf16.mxu0 %v2674
    %3766 = vmatpush1.bf16.msra.mxu0 %v2673
    %3767 = vmatprep.subr.bf16.mxu0 %v2678
    %3768 = vmatpush1.bf16.msra.mxu0 %v2677
    %3769 = vmatprep.subr.bf16.mxu0 %v2682
    %3770 = vmatpush1.bf16.msra.mxu0 %v2681
    %3771 = vmatprep.subr.bf16.mxu0 %v2686
    %3772 = vmatpush1.bf16.msra.mxu0 %v2685
    %3773 = vmatprep.subr.bf16.mxu0 %v2690
    %3774 = vmatpush1.bf16.msra.mxu0 %v2689
    %3775 = vmatprep.subr.bf16.mxu0 %v2694
    %3776 = vmatpush1.bf16.msra.mxu0 %v2693
    %3777 = vmatprep.subr.bf16.mxu0 %v2698
    %3778 = vmatpush1.bf16.msra.mxu0 %v2697
    %3779 = vmatprep.subr.bf16.mxu0 %v2702
    %3780 = vmatpush1.bf16.msra.mxu0 %v2701
    %3781 = vmatprep.subr.bf16.mxu0 %v2706
    %3782 = vmatpush1.bf16.msra.mxu0 %v2705
    %3783 = vmatprep.subr.bf16.mxu0 %v2710
    %3784 = vmatpush1.bf16.msra.mxu0 %v2709
    %3785 = vmatprep.subr.bf16.mxu0 %v2714
    %3786 = vmatpush1.bf16.msra.mxu0 %v2713
    %3787 = vmatprep.subr.bf16.mxu0 %v2718
    %3788 = vmatpush1.bf16.msra.mxu0 %v2717
    %3789 = vmatprep.subr.bf16.mxu0 %v2722
    %3790 = vmatpush1.bf16.msra.mxu0 %v2721
    %3791 = vmatprep.subr.bf16.mxu0 %v2726
    %3792 = vmatpush1.bf16.msra.mxu0 %v2725
    %3793 = vmatprep.mubr.bf16.mxu0 %v3758
    %3794 = vmatmul.mubr.bf16.gmra.mrb[0].mxu0 %v3757
    %v3795 = vpop.f32.mrb[0].mxu0
    %v3796 = vadd.f32 %v2001, %v3795
    %v3797 = vpop.f32.mrb[0].mxu0
    %v3798 = vadd.f32 %v2003, %v3797
    %v3799 = vpop.f32.mrb[0].mxu0
    %v3800 = vpop.f32.mrb[0].mxu0
    %3801 = vdwg.mxu0
    %3802 = vmatprep.subr.bf16.mxu0 %v2730
    %3803 = vmatpush1.bf16.msra.mxu0 %v2729
    %3804 = vmatprep.subr.bf16.mxu0 %v2734
    %3805 = vmatpush1.bf16.msra.mxu0 %v2733
    %3806 = vmatprep.subr.bf16.mxu0 %v2738
    %3807 = vmatpush1.bf16.msra.mxu0 %v2737
    %3808 = vmatprep.subr.bf16.mxu0 %v2742
    %3809 = vmatpush1.bf16.msra.mxu0 %v2741
    %3810 = vmatprep.subr.bf16.mxu0 %v2746
    %3811 = vmatpush1.bf16.msra.mxu0 %v2745
    %3812 = vmatprep.subr.bf16.mxu0 %v2750
    %3813 = vmatpush1.bf16.msra.mxu0 %v2749
    %3814 = vmatprep.subr.bf16.mxu0 %v2754
    %3815 = vmatpush1.bf16.msra.mxu0 %v2753
    %3816 = vmatprep.subr.bf16.mxu0 %v2758
    %3817 = vmatpush1.bf16.msra.mxu0 %v2757
    %3818 = vmatprep.subr.bf16.mxu0 %v2762
    %3819 = vmatpush1.bf16.msra.mxu0 %v2761
    %3820 = vmatprep.subr.bf16.mxu0 %v2766
    %3821 = vmatpush1.bf16.msra.mxu0 %v2765
    %3822 = vmatprep.subr.bf16.mxu0 %v2770
    %3823 = vmatpush1.bf16.msra.mxu0 %v2769
    %3824 = vmatprep.subr.bf16.mxu0 %v2774
    %3825 = vmatpush1.bf16.msra.mxu0 %v2773
    %3826 = vmatprep.subr.bf16.mxu0 %v2778
    %3827 = vmatpush1.bf16.msra.mxu0 %v2777
    %3828 = vmatprep.subr.bf16.mxu0 %v2782
    %3829 = vmatpush1.bf16.msra.mxu0 %v2781
    %3830 = vmatprep.subr.bf16.mxu0 %v2786
    %3831 = vmatpush1.bf16.msra.mxu0 %v2785
    %3832 = vmatprep.subr.bf16.mxu0 %v2790
    %3833 = vmatpush1.bf16.msra.mxu0 %v2789
    %3834 = vmatprep.mubr.bf16.mxu0 %v3760
    %3835 = vmatmul.mubr.bf16.gmra.mrb[0].mxu0 %v3759
    %v3836 = vpop.f32.mrb[0].mxu0
    %v3837 = vadd.f32 %v3796, %v3836
    %v3838 = vpop.f32.mrb[0].mxu0
    %v3839 = vadd.f32 %v3798, %v3838
    %v3840 = vpop.f32.mrb[0].mxu0
    %v3841 = vpop.f32.mrb[0].mxu0
    %3842 = vdwg.mxu0
    %3843 = vmatprep.subr.bf16.mxu0 %v2668
    %3844 = vmatpush1.bf16.msra.mxu0 %v2667
    %3845 = vmatprep.subr.bf16.mxu0 %v2672
    %3846 = vmatpush1.bf16.msra.mxu0 %v2671
    %3847 = vmatprep.subr.bf16.mxu0 %v2676
    %3848 = vmatpush1.bf16.msra.mxu0 %v2675
    %3849 = vmatprep.subr.bf16.mxu0 %v2680
    %3850 = vmatpush1.bf16.msra.mxu0 %v2679
    %3851 = vmatprep.subr.bf16.mxu0 %v2684
    %3852 = vmatpush1.bf16.msra.mxu0 %v2683
    %3853 = vmatprep.subr.bf16.mxu0 %v2688
    %3854 = vmatpush1.bf16.msra.mxu0 %v2687
    %3855 = vmatprep.subr.bf16.mxu0 %v2692
    %3856 = vmatpush1.bf16.msra.mxu0 %v2691
    %3857 = vmatprep.subr.bf16.mxu0 %v2696
    %3858 = vmatpush1.bf16.msra.mxu0 %v2695
    %3859 = vmatprep.subr.bf16.mxu0 %v2700
    %3860 = vmatpush1.bf16.msra.mxu0 %v2699
    %3861 = vmatprep.subr.bf16.mxu0 %v2704
    %3862 = vmatpush1.bf16.msra.mxu0 %v2703
    %3863 = vmatprep.subr.bf16.mxu0 %v2708
    %3864 = vmatpush1.bf16.msra.mxu0 %v2707
    %3865 = vmatprep.subr.bf16.mxu0 %v2712
    %3866 = vmatpush1.bf16.msra.mxu0 %v2711
    %3867 = vmatprep.subr.bf16.mxu0 %v2716
    %3868 = vmatpush1.bf16.msra.mxu0 %v2715
    %3869 = vmatprep.subr.bf16.mxu0 %v2720
    %3870 = vmatpush1.bf16.msra.mxu0 %v2719
    %3871 = vmatprep.subr.bf16.mxu0 %v2724
    %3872 = vmatpush1.bf16.msra.mxu0 %v2723
    %3873 = vmatprep.subr.bf16.mxu0 %v2728
    %3874 = vmatpush1.bf16.msra.mxu0 %v2727
    %3875 = vmatprep.mubr.bf16.mxu0 %v3758
    %3876 = vmatmul.mubr.bf16.gmra.mrb[0].mxu0 %v3757
    %v3877 = vpop.f32.mrb[0].mxu0
    %v3878 = vadd.f32 %v2143, %v3877
    %v3879 = vpop.f32.mrb[0].mxu0
    %v3880 = vadd.f32 %v2145, %v3879
    %v3881 = vpop.f32.mrb[0].mxu0
    %v3882 = vpop.f32.mrb[0].mxu0
    %3883 = vdwg.mxu0
    %3884 = vmatprep.subr.bf16.mxu0 %v2732
    %3885 = vmatpush1.bf16.msra.mxu0 %v2731
    %3886 = vmatprep.subr.bf16.mxu0 %v2736
    %3887 = vmatpush1.bf16.msra.mxu0 %v2735
    %3888 = vmatprep.subr.bf16.mxu0 %v2740
    %3889 = vmatpush1.bf16.msra.mxu0 %v2739
    %3890 = vmatprep.subr.bf16.mxu0 %v2744
    %3891 = vmatpush1.bf16.msra.mxu0 %v2743
    %3892 = vmatprep.subr.bf16.mxu0 %v2748
    %3893 = vmatpush1.bf16.msra.mxu0 %v2747
    %3894 = vmatprep.subr.bf16.mxu0 %v2752
    %3895 = vmatpush1.bf16.msra.mxu0 %v2751
    %3896 = vmatprep.subr.bf16.mxu0 %v2756
    %3897 = vmatpush1.bf16.msra.mxu0 %v2755
    %3898 = vmatprep.subr.bf16.mxu0 %v2760
    %3899 = vmatpush1.bf16.msra.mxu0 %v2759
    %3900 = vmatprep.subr.bf16.mxu0 %v2764
    %3901 = vmatpush1.bf16.msra.mxu0 %v2763
    %3902 = vmatprep.subr.bf16.mxu0 %v2768
    %3903 = vmatpush1.bf16.msra.mxu0 %v2767
    %3904 = vmatprep.subr.bf16.mxu0 %v2772
    %3905 = vmatpush1.bf16.msra.mxu0 %v2771
    %3906 = vmatprep.subr.bf16.mxu0 %v2776
    %3907 = vmatpush1.bf16.msra.mxu0 %v2775
    %3908 = vmatprep.subr.bf16.mxu0 %v2780
    %3909 = vmatpush1.bf16.msra.mxu0 %v2779
    %3910 = vmatprep.subr.bf16.mxu0 %v2784
    %3911 = vmatpush1.bf16.msra.mxu0 %v2783
    %3912 = vmatprep.subr.bf16.mxu0 %v2788
    %3913 = vmatpush1.bf16.msra.mxu0 %v2787
    %3914 = vmatprep.subr.bf16.mxu0 %v2792
    %3915 = vmatpush1.bf16.msra.mxu0 %v2791
    %3916 = vmatprep.mubr.bf16.mxu0 %v3760
    %3917 = vmatmul.mubr.bf16.gmra.mrb[0].mxu0 %v3759
    %v3918 = vpop.f32.mrb[0].mxu0
    %v3919 = vadd.f32 %v3878, %v3918
    %v3920 = vpop.f32.mrb[0].mxu0
    %v3921 = vadd.f32 %v3880, %v3920
    %v3922 = vpop.f32.mrb[0].mxu0
    %v3923 = vpop.f32.mrb[0].mxu0
    %3924 = vdwg.mxu0
    %v3925 = vpack.c.bf16 %v3837, %v3837
    %v3926 = vpack.c.bf16 %v3839, %v3839
    %v3927 = vpack.c.bf16 %v3919, %v3919
    %v3928 = vpack.c.bf16 %v3921, %v3921
    %v3929 = vld [vmem:[#allocation6] sm:$0xff]
    %v3930 = vld [vmem:[#allocation6 + $0x8] sm:$0xff]
    %v3931 = vld [vmem:[#allocation6 + $0x10] sm:$0xff]
    %v3932 = vld [vmem:[#allocation6 + $0x18] sm:$0xff]
    %v3933 = vld [vmem:[#allocation6 + $0x20] sm:$0xff]
    %v3934 = vld [vmem:[#allocation6 + $0x28] sm:$0xff]
    %v3935 = vld [vmem:[#allocation6 + $0x30] sm:$0xff]
    %v3936 = vld [vmem:[#allocation6 + $0x38] sm:$0xff]
    %v3937 = vld [vmem:[#allocation6 + $0x40] sm:$0xff]
    %v3938 = vld [vmem:[#allocation6 + $0x48] sm:$0xff]
    %v3939 = vld [vmem:[#allocation6 + $0x50] sm:$0xff]
    %v3940 = vld [vmem:[#allocation6 + $0x58] sm:$0xff]
    %v3941 = vld [vmem:[#allocation6 + $0x60] sm:$0xff]
    %v3942 = vld [vmem:[#allocation6 + $0x68] sm:$0xff]
    %v3943 = vld [vmem:[#allocation6 + $0x70] sm:$0xff]
    %v3944 = vld [vmem:[#allocation6 + $0x78] sm:$0xff]
    %v3945 = vld [vmem:[#allocation6 + $0x80] sm:$0xff]
    %v3946 = vld [vmem:[#allocation6 + $0x88] sm:$0xff]
    %v3947 = vld [vmem:[#allocation6 + $0x90] sm:$0xff]
    %v3948 = vld [vmem:[#allocation6 + $0x98] sm:$0xff]
    %v3949 = vld [vmem:[#allocation6 + $0xa0] sm:$0xff]
    %v3950 = vld [vmem:[#allocation6 + $0xa8] sm:$0xff]
    %v3951 = vld [vmem:[#allocation6 + $0xb0] sm:$0xff]
    %v3952 = vld [vmem:[#allocation6 + $0xb8] sm:$0xff]
    %v3953 = vld [vmem:[#allocation6 + $0xc0] sm:$0xff]
    %v3954 = vld [vmem:[#allocation6 + $0xc8] sm:$0xff]
    %v3955 = vld [vmem:[#allocation6 + $0xd0] sm:$0xff]
    %v3956 = vld [vmem:[#allocation6 + $0xd8] sm:$0xff]
    %v3957 = vld [vmem:[#allocation6 + $0xe0] sm:$0xff]
    %v3958 = vld [vmem:[#allocation6 + $0xe8] sm:$0xff]
    %v3959 = vld [vmem:[#allocation6 + $0xf0] sm:$0xff]
    %v3960 = vld [vmem:[#allocation6 + $0xf8] sm:$0xff]
    %v3961 = vld [vmem:[#allocation6 + $0x100] sm:$0xff]
    %v3962 = vld [vmem:[#allocation6 + $0x108] sm:$0xff]
    %v3963 = vld [vmem:[#allocation6 + $0x110] sm:$0xff]
    %v3964 = vld [vmem:[#allocation6 + $0x118] sm:$0xff]
    %v3965 = vld [vmem:[#allocation6 + $0x120] sm:$0xff]
    %v3966 = vld [vmem:[#allocation6 + $0x128] sm:$0xff]
    %v3967 = vld [vmem:[#allocation6 + $0x130] sm:$0xff]
    %v3968 = vld [vmem:[#allocation6 + $0x138] sm:$0xff]
    %v3969 = vld [vmem:[#allocation6 + $0x140] sm:$0xff]
    %v3970 = vld [vmem:[#allocation6 + $0x148] sm:$0xff]
    %v3971 = vld [vmem:[#allocation6 + $0x150] sm:$0xff]
    %v3972 = vld [vmem:[#allocation6 + $0x158] sm:$0xff]
    %v3973 = vld [vmem:[#allocation6 + $0x160] sm:$0xff]
    %v3974 = vld [vmem:[#allocation6 + $0x168] sm:$0xff]
    %v3975 = vld [vmem:[#allocation6 + $0x170] sm:$0xff]
    %v3976 = vld [vmem:[#allocation6 + $0x178] sm:$0xff]
    %v3977 = vld [vmem:[#allocation6 + $0x180] sm:$0xff]
    %v3978 = vld [vmem:[#allocation6 + $0x188] sm:$0xff]
    %v3979 = vld [vmem:[#allocation6 + $0x190] sm:$0xff]
    %v3980 = vld [vmem:[#allocation6 + $0x198] sm:$0xff]
    %v3981 = vld [vmem:[#allocation6 + $0x1a0] sm:$0xff]
    %v3982 = vld [vmem:[#allocation6 + $0x1a8] sm:$0xff]
    %v3983 = vld [vmem:[#allocation6 + $0x1b0] sm:$0xff]
    %v3984 = vld [vmem:[#allocation6 + $0x1b8] sm:$0xff]
    %v3985 = vld [vmem:[#allocation6 + $0x1c0] sm:$0xff]
    %v3986 = vld [vmem:[#allocation6 + $0x1c8] sm:$0xff]
    %v3987 = vld [vmem:[#allocation6 + $0x1d0] sm:$0xff]
    %v3988 = vld [vmem:[#allocation6 + $0x1d8] sm:$0xff]
    %v3989 = vld [vmem:[#allocation6 + $0x1e0] sm:$0xff]
    %v3990 = vld [vmem:[#allocation6 + $0x1e8] sm:$0xff]
    %v3991 = vld [vmem:[#allocation6 + $0x1f0] sm:$0xff]
    %v3992 = vld [vmem:[#allocation6 + $0x1f8] sm:$0xff]
    %v3993 = vld [vmem:[#allocation6 + $0x200] sm:$0xff]
    %v3994 = vld [vmem:[#allocation6 + $0x208] sm:$0xff]
    %v3995 = vld [vmem:[#allocation6 + $0x210] sm:$0xff]
    %v3996 = vld [vmem:[#allocation6 + $0x218] sm:$0xff]
    %v3997 = vld [vmem:[#allocation6 + $0x220] sm:$0xff]
    %v3998 = vld [vmem:[#allocation6 + $0x228] sm:$0xff]
    %v3999 = vld [vmem:[#allocation6 + $0x230] sm:$0xff]
    %v4000 = vld [vmem:[#allocation6 + $0x238] sm:$0xff]
    %v4001 = vld [vmem:[#allocation6 + $0x240] sm:$0xff]
    %v4002 = vld [vmem:[#allocation6 + $0x248] sm:$0xff]
    %v4003 = vld [vmem:[#allocation6 + $0x250] sm:$0xff]
    %v4004 = vld [vmem:[#allocation6 + $0x258] sm:$0xff]
    %v4005 = vld [vmem:[#allocation6 + $0x260] sm:$0xff]
    %v4006 = vld [vmem:[#allocation6 + $0x268] sm:$0xff]
    %v4007 = vld [vmem:[#allocation6 + $0x270] sm:$0xff]
    %v4008 = vld [vmem:[#allocation6 + $0x278] sm:$0xff]
    %v4009 = vld [vmem:[#allocation6 + $0x280] sm:$0xff]
    %v4010 = vld [vmem:[#allocation6 + $0x288] sm:$0xff]
    %v4011 = vld [vmem:[#allocation6 + $0x290] sm:$0xff]
    %v4012 = vld [vmem:[#allocation6 + $0x298] sm:$0xff]
    %v4013 = vld [vmem:[#allocation6 + $0x2a0] sm:$0xff]
    %v4014 = vld [vmem:[#allocation6 + $0x2a8] sm:$0xff]
    %v4015 = vld [vmem:[#allocation6 + $0x2b0] sm:$0xff]
    %v4016 = vld [vmem:[#allocation6 + $0x2b8] sm:$0xff]
    %v4017 = vld [vmem:[#allocation6 + $0x2c0] sm:$0xff]
    %v4018 = vld [vmem:[#allocation6 + $0x2c8] sm:$0xff]
    %v4019 = vld [vmem:[#allocation6 + $0x2d0] sm:$0xff]
    %v4020 = vld [vmem:[#allocation6 + $0x2d8] sm:$0xff]
    %v4021 = vld [vmem:[#allocation6 + $0x2e0] sm:$0xff]
    %v4022 = vld [vmem:[#allocation6 + $0x2e8] sm:$0xff]
    %v4023 = vld [vmem:[#allocation6 + $0x2f0] sm:$0xff]
    %v4024 = vld [vmem:[#allocation6 + $0x2f8] sm:$0xff]
    %v4025 = vld [vmem:[#allocation6 + $0x300] sm:$0xff]
    %v4026 = vld [vmem:[#allocation6 + $0x308] sm:$0xff]
    %v4027 = vld [vmem:[#allocation6 + $0x310] sm:$0xff]
    %v4028 = vld [vmem:[#allocation6 + $0x318] sm:$0xff]
    %v4029 = vld [vmem:[#allocation6 + $0x320] sm:$0xff]
    %v4030 = vld [vmem:[#allocation6 + $0x328] sm:$0xff]
    %v4031 = vld [vmem:[#allocation6 + $0x330] sm:$0xff]
    %v4032 = vld [vmem:[#allocation6 + $0x338] sm:$0xff]
    %v4033 = vld [vmem:[#allocation6 + $0x340] sm:$0xff]
    %v4034 = vld [vmem:[#allocation6 + $0x348] sm:$0xff]
    %v4035 = vld [vmem:[#allocation6 + $0x350] sm:$0xff]
    %v4036 = vld [vmem:[#allocation6 + $0x358] sm:$0xff]
    %v4037 = vld [vmem:[#allocation6 + $0x360] sm:$0xff]
    %v4038 = vld [vmem:[#allocation6 + $0x368] sm:$0xff]
    %v4039 = vld [vmem:[#allocation6 + $0x370] sm:$0xff]
    %v4040 = vld [vmem:[#allocation6 + $0x378] sm:$0xff]
    %v4041 = vld [vmem:[#allocation6 + $0x380] sm:$0xff]
    %v4042 = vld [vmem:[#allocation6 + $0x388] sm:$0xff]
    %v4043 = vld [vmem:[#allocation6 + $0x390] sm:$0xff]
    %v4044 = vld [vmem:[#allocation6 + $0x398] sm:$0xff]
    %v4045 = vld [vmem:[#allocation6 + $0x3a0] sm:$0xff]
    %v4046 = vld [vmem:[#allocation6 + $0x3a8] sm:$0xff]
    %v4047 = vld [vmem:[#allocation6 + $0x3b0] sm:$0xff]
    %v4048 = vld [vmem:[#allocation6 + $0x3b8] sm:$0xff]
    %v4049 = vld [vmem:[#allocation6 + $0x3c0] sm:$0xff]
    %v4050 = vld [vmem:[#allocation6 + $0x3c8] sm:$0xff]
    %v4051 = vld [vmem:[#allocation6 + $0x3d0] sm:$0xff]
    %v4052 = vld [vmem:[#allocation6 + $0x3d8] sm:$0xff]
    %v4053 = vld [vmem:[#allocation6 + $0x3e0] sm:$0xff]
    %v4054 = vld [vmem:[#allocation6 + $0x3e8] sm:$0xff]
    %v4055 = vld [vmem:[#allocation6 + $0x3f0] sm:$0xff]
    %v4056 = vld [vmem:[#allocation6 + $0x3f8] sm:$0xff]
    %v4185 = vunpack.c.l.b16 %v3929
    %v4186 = vunpack.c.h.b16 %v3929
    %v4187 = vunpack.c.l.b16 %v3930
    %v4188 = vunpack.c.h.b16 %v3930
    %v4189 = vunpack.c.l.b16 %v3931
    %v4190 = vunpack.c.h.b16 %v3931
    %v4191 = vunpack.c.l.b16 %v3932
    %v4192 = vunpack.c.h.b16 %v3932
    %v4193 = vunpack.c.l.b16 %v3933
    %v4194 = vunpack.c.h.b16 %v3933
    %v4195 = vunpack.c.l.b16 %v3934
    %v4196 = vunpack.c.h.b16 %v3934
    %v4197 = vunpack.c.l.b16 %v3935
    %v4198 = vunpack.c.h.b16 %v3935
    %v4199 = vunpack.c.l.b16 %v3936
    %v4200 = vunpack.c.h.b16 %v3936
    %v4201 = vunpack.c.l.b16 %v3937
    %v4202 = vunpack.c.h.b16 %v3937
    %v4203 = vunpack.c.l.b16 %v3938
    %v4204 = vunpack.c.h.b16 %v3938
    %v4205 = vunpack.c.l.b16 %v3939
    %v4206 = vunpack.c.h.b16 %v3939
    %v4207 = vunpack.c.l.b16 %v3940
    %v4208 = vunpack.c.h.b16 %v3940
    %v4209 = vunpack.c.l.b16 %v3941
    %v4210 = vunpack.c.h.b16 %v3941
    %v4211 = vunpack.c.l.b16 %v3942
    %v4212 = vunpack.c.h.b16 %v3942
    %v4213 = vunpack.c.l.b16 %v3943
    %v4214 = vunpack.c.h.b16 %v3943
    %v4215 = vunpack.c.l.b16 %v3944
    %v4216 = vunpack.c.h.b16 %v3944
    %v4217 = vunpack.c.l.b16 %v3945
    %v4218 = vunpack.c.h.b16 %v3945
    %v4219 = vunpack.c.l.b16 %v3946
    %v4220 = vunpack.c.h.b16 %v3946
    %v4221 = vunpack.c.l.b16 %v3947
    %v4222 = vunpack.c.h.b16 %v3947
    %v4223 = vunpack.c.l.b16 %v3948
    %v4224 = vunpack.c.h.b16 %v3948
    %v4225 = vunpack.c.l.b16 %v3949
    %v4226 = vunpack.c.h.b16 %v3949
    %v4227 = vunpack.c.l.b16 %v3950
    %v4228 = vunpack.c.h.b16 %v3950
    %v4229 = vunpack.c.l.b16 %v3951
    %v4230 = vunpack.c.h.b16 %v3951
    %v4231 = vunpack.c.l.b16 %v3952
    %v4232 = vunpack.c.h.b16 %v3952
    %v4233 = vunpack.c.l.b16 %v3953
    %v4234 = vunpack.c.h.b16 %v3953
    %v4235 = vunpack.c.l.b16 %v3954
    %v4236 = vunpack.c.h.b16 %v3954
    %v4237 = vunpack.c.l.b16 %v3955
    %v4238 = vunpack.c.h.b16 %v3955
    %v4239 = vunpack.c.l.b16 %v3956
    %v4240 = vunpack.c.h.b16 %v3956
    %v4241 = vunpack.c.l.b16 %v3957
    %v4242 = vunpack.c.h.b16 %v3957
    %v4243 = vunpack.c.l.b16 %v3958
    %v4244 = vunpack.c.h.b16 %v3958
    %v4245 = vunpack.c.l.b16 %v3959
    %v4246 = vunpack.c.h.b16 %v3959
    %v4247 = vunpack.c.l.b16 %v3960
    %v4248 = vunpack.c.h.b16 %v3960
    %v4249 = vunpack.c.l.b16 %v3961
    %v4250 = vunpack.c.h.b16 %v3961
    %v4251 = vunpack.c.l.b16 %v3962
    %v4252 = vunpack.c.h.b16 %v3962
    %v4253 = vunpack.c.l.b16 %v3963
    %v4254 = vunpack.c.h.b16 %v3963
    %v4255 = vunpack.c.l.b16 %v3964
    %v4256 = vunpack.c.h.b16 %v3964
    %v4257 = vunpack.c.l.b16 %v3965
    %v4258 = vunpack.c.h.b16 %v3965
    %v4259 = vunpack.c.l.b16 %v3966
    %v4260 = vunpack.c.h.b16 %v3966
    %v4261 = vunpack.c.l.b16 %v3967
    %v4262 = vunpack.c.h.b16 %v3967
    %v4263 = vunpack.c.l.b16 %v3968
    %v4264 = vunpack.c.h.b16 %v3968
    %v4265 = vunpack.c.l.b16 %v3969
    %v4266 = vunpack.c.h.b16 %v3969
    %v4267 = vunpack.c.l.b16 %v3970
    %v4268 = vunpack.c.h.b16 %v3970
    %v4269 = vunpack.c.l.b16 %v3971
    %v4270 = vunpack.c.h.b16 %v3971
    %v4271 = vunpack.c.l.b16 %v3972
    %v4272 = vunpack.c.h.b16 %v3972
    %v4273 = vunpack.c.l.b16 %v3973
    %v4274 = vunpack.c.h.b16 %v3973
    %v4275 = vunpack.c.l.b16 %v3974
    %v4276 = vunpack.c.h.b16 %v3974
    %v4277 = vunpack.c.l.b16 %v3975
    %v4278 = vunpack.c.h.b16 %v3975
    %v4279 = vunpack.c.l.b16 %v3976
    %v4280 = vunpack.c.h.b16 %v3976
    %v4281 = vunpack.c.l.b16 %v3977
    %v4282 = vunpack.c.h.b16 %v3977
    %v4283 = vunpack.c.l.b16 %v3978
    %v4284 = vunpack.c.h.b16 %v3978
    %v4285 = vunpack.c.l.b16 %v3979
    %v4286 = vunpack.c.h.b16 %v3979
    %v4287 = vunpack.c.l.b16 %v3980
    %v4288 = vunpack.c.h.b16 %v3980
    %v4289 = vunpack.c.l.b16 %v3981
    %v4290 = vunpack.c.h.b16 %v3981
    %v4291 = vunpack.c.l.b16 %v3982
    %v4292 = vunpack.c.h.b16 %v3982
    %v4293 = vunpack.c.l.b16 %v3983
    %v4294 = vunpack.c.h.b16 %v3983
    %v4295 = vunpack.c.l.b16 %v3984
    %v4296 = vunpack.c.h.b16 %v3984
    %v4297 = vunpack.c.l.b16 %v3985
    %v4298 = vunpack.c.h.b16 %v3985
    %v4299 = vunpack.c.l.b16 %v3986
    %v4300 = vunpack.c.h.b16 %v3986
    %v4301 = vunpack.c.l.b16 %v3987
    %v4302 = vunpack.c.h.b16 %v3987
    %v4303 = vunpack.c.l.b16 %v3988
    %v4304 = vunpack.c.h.b16 %v3988
    %v4305 = vunpack.c.l.b16 %v3989
    %v4306 = vunpack.c.h.b16 %v3989
    %v4307 = vunpack.c.l.b16 %v3990
    %v4308 = vunpack.c.h.b16 %v3990
    %v4309 = vunpack.c.l.b16 %v3991
    %v4310 = vunpack.c.h.b16 %v3991
    %v4311 = vunpack.c.l.b16 %v3992
    %v4312 = vunpack.c.h.b16 %v3992
    %v4313 = vunpack.c.l.b16 %v3993
    %v4314 = vunpack.c.h.b16 %v3993
    %v4315 = vunpack.c.l.b16 %v3994
    %v4316 = vunpack.c.h.b16 %v3994
    %v4317 = vunpack.c.l.b16 %v3995
    %v4318 = vunpack.c.h.b16 %v3995
    %v4319 = vunpack.c.l.b16 %v3996
    %v4320 = vunpack.c.h.b16 %v3996
    %v4321 = vunpack.c.l.b16 %v3997
    %v4322 = vunpack.c.h.b16 %v3997
    %v4323 = vunpack.c.l.b16 %v3998
    %v4324 = vunpack.c.h.b16 %v3998
    %v4325 = vunpack.c.l.b16 %v3999
    %v4326 = vunpack.c.h.b16 %v3999
    %v4327 = vunpack.c.l.b16 %v4000
    %v4328 = vunpack.c.h.b16 %v4000
    %v4329 = vunpack.c.l.b16 %v4001
    %v4330 = vunpack.c.h.b16 %v4001
    %v4331 = vunpack.c.l.b16 %v4002
    %v4332 = vunpack.c.h.b16 %v4002
    %v4333 = vunpack.c.l.b16 %v4003
    %v4334 = vunpack.c.h.b16 %v4003
    %v4335 = vunpack.c.l.b16 %v4004
    %v4336 = vunpack.c.h.b16 %v4004
    %v4337 = vunpack.c.l.b16 %v4005
    %v4338 = vunpack.c.h.b16 %v4005
    %v4339 = vunpack.c.l.b16 %v4006
    %v4340 = vunpack.c.h.b16 %v4006
    %v4341 = vunpack.c.l.b16 %v4007
    %v4342 = vunpack.c.h.b16 %v4007
    %v4343 = vunpack.c.l.b16 %v4008
    %v4344 = vunpack.c.h.b16 %v4008
    %v4345 = vunpack.c.l.b16 %v4009
    %v4346 = vunpack.c.h.b16 %v4009
    %v4347 = vunpack.c.l.b16 %v4010
    %v4348 = vunpack.c.h.b16 %v4010
    %v4349 = vunpack.c.l.b16 %v4011
    %v4350 = vunpack.c.h.b16 %v4011
    %v4351 = vunpack.c.l.b16 %v4012
    %v4352 = vunpack.c.h.b16 %v4012
    %v4353 = vunpack.c.l.b16 %v4013
    %v4354 = vunpack.c.h.b16 %v4013
    %v4355 = vunpack.c.l.b16 %v4014
    %v4356 = vunpack.c.h.b16 %v4014
    %v4357 = vunpack.c.l.b16 %v4015
    %v4358 = vunpack.c.h.b16 %v4015
    %v4359 = vunpack.c.l.b16 %v4016
    %v4360 = vunpack.c.h.b16 %v4016
    %v4361 = vunpack.c.l.b16 %v4017
    %v4362 = vunpack.c.h.b16 %v4017
    %v4363 = vunpack.c.l.b16 %v4018
    %v4364 = vunpack.c.h.b16 %v4018
    %v4365 = vunpack.c.l.b16 %v4019
    %v4366 = vunpack.c.h.b16 %v4019
    %v4367 = vunpack.c.l.b16 %v4020
    %v4368 = vunpack.c.h.b16 %v4020
    %v4369 = vunpack.c.l.b16 %v4021
    %v4370 = vunpack.c.h.b16 %v4021
    %v4371 = vunpack.c.l.b16 %v4022
    %v4372 = vunpack.c.h.b16 %v4022
    %v4373 = vunpack.c.l.b16 %v4023
    %v4374 = vunpack.c.h.b16 %v4023
    %v4375 = vunpack.c.l.b16 %v4024
    %v4376 = vunpack.c.h.b16 %v4024
    %v4377 = vunpack.c.l.b16 %v4025
    %v4378 = vunpack.c.h.b16 %v4025
    %v4379 = vunpack.c.l.b16 %v4026
    %v4380 = vunpack.c.h.b16 %v4026
    %v4381 = vunpack.c.l.b16 %v4027
    %v4382 = vunpack.c.h.b16 %v4027
    %v4383 = vunpack.c.l.b16 %v4028
    %v4384 = vunpack.c.h.b16 %v4028
    %v4385 = vunpack.c.l.b16 %v4029
    %v4386 = vunpack.c.h.b16 %v4029
    %v4387 = vunpack.c.l.b16 %v4030
    %v4388 = vunpack.c.h.b16 %v4030
    %v4389 = vunpack.c.l.b16 %v4031
    %v4390 = vunpack.c.h.b16 %v4031
    %v4391 = vunpack.c.l.b16 %v4032
    %v4392 = vunpack.c.h.b16 %v4032
    %v4393 = vunpack.c.l.b16 %v4033
    %v4394 = vunpack.c.h.b16 %v4033
    %v4395 = vunpack.c.l.b16 %v4034
    %v4396 = vunpack.c.h.b16 %v4034
    %v4397 = vunpack.c.l.b16 %v4035
    %v4398 = vunpack.c.h.b16 %v4035
    %v4399 = vunpack.c.l.b16 %v4036
    %v4400 = vunpack.c.h.b16 %v4036
    %v4401 = vunpack.c.l.b16 %v4037
    %v4402 = vunpack.c.h.b16 %v4037
    %v4403 = vunpack.c.l.b16 %v4038
    %v4404 = vunpack.c.h.b16 %v4038
    %v4405 = vunpack.c.l.b16 %v4039
    %v4406 = vunpack.c.h.b16 %v4039
    %v4407 = vunpack.c.l.b16 %v4040
    %v4408 = vunpack.c.h.b16 %v4040
    %v4409 = vunpack.c.l.b16 %v4041
    %v4410 = vunpack.c.h.b16 %v4041
    %v4411 = vunpack.c.l.b16 %v4042
    %v4412 = vunpack.c.h.b16 %v4042
    %v4413 = vunpack.c.l.b16 %v4043
    %v4414 = vunpack.c.h.b16 %v4043
    %v4415 = vunpack.c.l.b16 %v4044
    %v4416 = vunpack.c.h.b16 %v4044
    %v4417 = vunpack.c.l.b16 %v4045
    %v4418 = vunpack.c.h.b16 %v4045
    %v4419 = vunpack.c.l.b16 %v4046
    %v4420 = vunpack.c.h.b16 %v4046
    %v4421 = vunpack.c.l.b16 %v4047
    %v4422 = vunpack.c.h.b16 %v4047
    %v4423 = vunpack.c.l.b16 %v4048
    %v4424 = vunpack.c.h.b16 %v4048
    %v4425 = vunpack.c.l.b16 %v4049
    %v4426 = vunpack.c.h.b16 %v4049
    %v4427 = vunpack.c.l.b16 %v4050
    %v4428 = vunpack.c.h.b16 %v4050
    %v4429 = vunpack.c.l.b16 %v4051
    %v4430 = vunpack.c.h.b16 %v4051
    %v4431 = vunpack.c.l.b16 %v4052
    %v4432 = vunpack.c.h.b16 %v4052
    %v4433 = vunpack.c.l.b16 %v4053
    %v4434 = vunpack.c.h.b16 %v4053
    %v4435 = vunpack.c.l.b16 %v4054
    %v4436 = vunpack.c.h.b16 %v4054
    %v4437 = vunpack.c.l.b16 %v4055
    %v4438 = vunpack.c.h.b16 %v4055
    %v4439 = vunpack.c.l.b16 %v4056
    %v4440 = vunpack.c.h.b16 %v4056
    %v4441 = vpack.c.b16 %v4189, %v4185
    %v4442 = vpack.c.b16 %v4190, %v4186
    %v4443 = vpack.c.b16 %v4191, %v4187
    %v4444 = vpack.c.b16 %v4192, %v4188
    %v4445 = vpack.c.b16 %v4197, %v4193
    %v4446 = vpack.c.b16 %v4198, %v4194
    %v4447 = vpack.c.b16 %v4199, %v4195
    %v4448 = vpack.c.b16 %v4200, %v4196
    %v4449 = vpack.c.b16 %v4205, %v4201
    %v4450 = vpack.c.b16 %v4206, %v4202
    %v4451 = vpack.c.b16 %v4207, %v4203
    %v4452 = vpack.c.b16 %v4208, %v4204
    %v4453 = vpack.c.b16 %v4213, %v4209
    %v4454 = vpack.c.b16 %v4214, %v4210
    %v4455 = vpack.c.b16 %v4215, %v4211
    %v4456 = vpack.c.b16 %v4216, %v4212
    %v4457 = vpack.c.b16 %v4221, %v4217
    %v4458 = vpack.c.b16 %v4222, %v4218
    %v4459 = vpack.c.b16 %v4223, %v4219
    %v4460 = vpack.c.b16 %v4224, %v4220
    %v4461 = vpack.c.b16 %v4229, %v4225
    %v4462 = vpack.c.b16 %v4230, %v4226
    %v4463 = vpack.c.b16 %v4231, %v4227
    %v4464 = vpack.c.b16 %v4232, %v4228
    %v4465 = vpack.c.b16 %v4237, %v4233
    %v4466 = vpack.c.b16 %v4238, %v4234
    %v4467 = vpack.c.b16 %v4239, %v4235
    %v4468 = vpack.c.b16 %v4240, %v4236
    %v4469 = vpack.c.b16 %v4245, %v4241
    %v4470 = vpack.c.b16 %v4246, %v4242
    %v4471 = vpack.c.b16 %v4247, %v4243
    %v4472 = vpack.c.b16 %v4248, %v4244
    %v4473 = vpack.c.b16 %v4253, %v4249
    %v4474 = vpack.c.b16 %v4254, %v4250
    %v4475 = vpack.c.b16 %v4255, %v4251
    %v4476 = vpack.c.b16 %v4256, %v4252
    %v4477 = vpack.c.b16 %v4261, %v4257
    %v4478 = vpack.c.b16 %v4262, %v4258
    %v4479 = vpack.c.b16 %v4263, %v4259
    %v4480 = vpack.c.b16 %v4264, %v4260
    %v4481 = vpack.c.b16 %v4269, %v4265
    %v4482 = vpack.c.b16 %v4270, %v4266
    %v4483 = vpack.c.b16 %v4271, %v4267
    %v4484 = vpack.c.b16 %v4272, %v4268
    %v4485 = vpack.c.b16 %v4277, %v4273
    %v4486 = vpack.c.b16 %v4278, %v4274
    %v4487 = vpack.c.b16 %v4279, %v4275
    %v4488 = vpack.c.b16 %v4280, %v4276
    %v4489 = vpack.c.b16 %v4285, %v4281
    %v4490 = vpack.c.b16 %v4286, %v4282
    %v4491 = vpack.c.b16 %v4287, %v4283
    %v4492 = vpack.c.b16 %v4288, %v4284
    %v4493 = vpack.c.b16 %v4293, %v4289
    %v4494 = vpack.c.b16 %v4294, %v4290
    %v4495 = vpack.c.b16 %v4295, %v4291
    %v4496 = vpack.c.b16 %v4296, %v4292
    %v4497 = vpack.c.b16 %v4301, %v4297
    %v4498 = vpack.c.b16 %v4302, %v4298
    %v4499 = vpack.c.b16 %v4303, %v4299
    %v4500 = vpack.c.b16 %v4304, %v4300
    %v4501 = vpack.c.b16 %v4309, %v4305
    %v4502 = vpack.c.b16 %v4310, %v4306
    %v4503 = vpack.c.b16 %v4311, %v4307
    %v4504 = vpack.c.b16 %v4312, %v4308
    %v4505 = vpack.c.b16 %v4317, %v4313
    %v4506 = vpack.c.b16 %v4318, %v4314
    %v4507 = vpack.c.b16 %v4319, %v4315
    %v4508 = vpack.c.b16 %v4320, %v4316
    %v4509 = vpack.c.b16 %v4325, %v4321
    %v4510 = vpack.c.b16 %v4326, %v4322
    %v4511 = vpack.c.b16 %v4327, %v4323
    %v4512 = vpack.c.b16 %v4328, %v4324
    %v4513 = vpack.c.b16 %v4333, %v4329
    %v4514 = vpack.c.b16 %v4334, %v4330
    %v4515 = vpack.c.b16 %v4335, %v4331
    %v4516 = vpack.c.b16 %v4336, %v4332
    %v4517 = vpack.c.b16 %v4341, %v4337
    %v4518 = vpack.c.b16 %v4342, %v4338
    %v4519 = vpack.c.b16 %v4343, %v4339
    %v4520 = vpack.c.b16 %v4344, %v4340
    %v4521 = vpack.c.b16 %v4349, %v4345
    %v4522 = vpack.c.b16 %v4350, %v4346
    %v4523 = vpack.c.b16 %v4351, %v4347
    %v4524 = vpack.c.b16 %v4352, %v4348
    %v4525 = vpack.c.b16 %v4357, %v4353
    %v4526 = vpack.c.b16 %v4358, %v4354
    %v4527 = vpack.c.b16 %v4359, %v4355
    %v4528 = vpack.c.b16 %v4360, %v4356
    %v4529 = vpack.c.b16 %v4365, %v4361
    %v4530 = vpack.c.b16 %v4366, %v4362
    %v4531 = vpack.c.b16 %v4367, %v4363
    %v4532 = vpack.c.b16 %v4368, %v4364
    %v4533 = vpack.c.b16 %v4373, %v4369
    %v4534 = vpack.c.b16 %v4374, %v4370
    %v4535 = vpack.c.b16 %v4375, %v4371
    %v4536 = vpack.c.b16 %v4376, %v4372
    %v4537 = vpack.c.b16 %v4381, %v4377
    %v4538 = vpack.c.b16 %v4382, %v4378
    %v4539 = vpack.c.b16 %v4383, %v4379
    %v4540 = vpack.c.b16 %v4384, %v4380
    %v4541 = vpack.c.b16 %v4389, %v4385
    %v4542 = vpack.c.b16 %v4390, %v4386
    %v4543 = vpack.c.b16 %v4391, %v4387
    %v4544 = vpack.c.b16 %v4392, %v4388
    %v4545 = vpack.c.b16 %v4397, %v4393
    %v4546 = vpack.c.b16 %v4398, %v4394
    %v4547 = vpack.c.b16 %v4399, %v4395
    %v4548 = vpack.c.b16 %v4400, %v4396
    %v4549 = vpack.c.b16 %v4405, %v4401
    %v4550 = vpack.c.b16 %v4406, %v4402
    %v4551 = vpack.c.b16 %v4407, %v4403
    %v4552 = vpack.c.b16 %v4408, %v4404
    %v4553 = vpack.c.b16 %v4413, %v4409
    %v4554 = vpack.c.b16 %v4414, %v4410
    %v4555 = vpack.c.b16 %v4415, %v4411
    %v4556 = vpack.c.b16 %v4416, %v4412
    %v4557 = vpack.c.b16 %v4421, %v4417
    %v4558 = vpack.c.b16 %v4422, %v4418
    %v4559 = vpack.c.b16 %v4423, %v4419
    %v4560 = vpack.c.b16 %v4424, %v4420
    %v4561 = vpack.c.b16 %v4429, %v4425
    %v4562 = vpack.c.b16 %v4430, %v4426
    %v4563 = vpack.c.b16 %v4431, %v4427
    %v4564 = vpack.c.b16 %v4432, %v4428
    %v4565 = vpack.c.b16 %v4437, %v4433
    %v4566 = vpack.c.b16 %v4438, %v4434
    %v4567 = vpack.c.b16 %v4439, %v4435
    %v4568 = vpack.c.b16 %v4440, %v4436
    %4697 = vmatprep.subr.bf16.mxu0 %v4442
    %4698 = vmatpush1.bf16.msra.mxu0 %v4441
    %4699 = vmatprep.subr.bf16.mxu0 %v4446
    %4700 = vmatpush1.bf16.msra.mxu0 %v4445
    %4701 = vmatprep.subr.bf16.mxu0 %v4450
    %4702 = vmatpush1.bf16.msra.mxu0 %v4449
    %4703 = vmatprep.subr.bf16.mxu0 %v4454
    %4704 = vmatpush1.bf16.msra.mxu0 %v4453
    %4705 = vmatprep.subr.bf16.mxu0 %v4458
    %4706 = vmatpush1.bf16.msra.mxu0 %v4457
    %4707 = vmatprep.subr.bf16.mxu0 %v4462
    %4708 = vmatpush1.bf16.msra.mxu0 %v4461
    %4709 = vmatprep.subr.bf16.mxu0 %v4466
    %4710 = vmatpush1.bf16.msra.mxu0 %v4465
    %4711 = vmatprep.subr.bf16.mxu0 %v4470
    %4712 = vmatpush1.bf16.msra.mxu0 %v4469
    %4713 = vmatprep.subr.bf16.mxu0 %v4474
    %4714 = vmatpush1.bf16.msra.mxu0 %v4473
    %4715 = vmatprep.subr.bf16.mxu0 %v4478
    %4716 = vmatpush1.bf16.msra.mxu0 %v4477
    %4717 = vmatprep.subr.bf16.mxu0 %v4482
    %4718 = vmatpush1.bf16.msra.mxu0 %v4481
    %4719 = vmatprep.subr.bf16.mxu0 %v4486
    %4720 = vmatpush1.bf16.msra.mxu0 %v4485
    %4721 = vmatprep.subr.bf16.mxu0 %v4490
    %4722 = vmatpush1.bf16.msra.mxu0 %v4489
    %4723 = vmatprep.subr.bf16.mxu0 %v4494
    %4724 = vmatpush1.bf16.msra.mxu0 %v4493
    %4725 = vmatprep.subr.bf16.mxu0 %v4498
    %4726 = vmatpush1.bf16.msra.mxu0 %v4497
    %4727 = vmatprep.subr.bf16.mxu0 %v4502
    %4728 = vmatpush1.bf16.msra.mxu0 %v4501
    %4729 = vmatprep.mubr.bf16.mxu0 %v3926
    %4730 = vmatmul.mubr.bf16.gmra.mrb[0].mxu0 %v3925
    %v4731 = vpop.f32.mrb[0].mxu0
    %v4732 = vadd.f32 %v935, %v4731
    %v4733 = vpop.f32.mrb[0].mxu0
    %v4734 = vadd.f32 %v937, %v4733
    %v4735 = vpop.f32.mrb[0].mxu0
    %v4736 = vpop.f32.mrb[0].mxu0
    %4737 = vdwg.mxu0
    %4738 = vmatprep.subr.bf16.mxu0 %v4506
    %4739 = vmatpush1.bf16.msra.mxu0 %v4505
    %4740 = vmatprep.subr.bf16.mxu0 %v4510
    %4741 = vmatpush1.bf16.msra.mxu0 %v4509
    %4742 = vmatprep.subr.bf16.mxu0 %v4514
    %4743 = vmatpush1.bf16.msra.mxu0 %v4513
    %4744 = vmatprep.subr.bf16.mxu0 %v4518
    %4745 = vmatpush1.bf16.msra.mxu0 %v4517
    %4746 = vmatprep.subr.bf16.mxu0 %v4522
    %4747 = vmatpush1.bf16.msra.mxu0 %v4521
    %4748 = vmatprep.subr.bf16.mxu0 %v4526
    %4749 = vmatpush1.bf16.msra.mxu0 %v4525
    %4750 = vmatprep.subr.bf16.mxu0 %v4530
    %4751 = vmatpush1.bf16.msra.mxu0 %v4529
    %4752 = vmatprep.subr.bf16.mxu0 %v4534
    %4753 = vmatpush1.bf16.msra.mxu0 %v4533
    %4754 = vmatprep.subr.bf16.mxu0 %v4538
    %4755 = vmatpush1.bf16.msra.mxu0 %v4537
    %4756 = vmatprep.subr.bf16.mxu0 %v4542
    %4757 = vmatpush1.bf16.msra.mxu0 %v4541
    %4758 = vmatprep.subr.bf16.mxu0 %v4546
    %4759 = vmatpush1.bf16.msra.mxu0 %v4545
    %4760 = vmatprep.subr.bf16.mxu0 %v4550
    %4761 = vmatpush1.bf16.msra.mxu0 %v4549
    %4762 = vmatprep.subr.bf16.mxu0 %v4554
    %4763 = vmatpush1.bf16.msra.mxu0 %v4553
    %4764 = vmatprep.subr.bf16.mxu0 %v4558
    %4765 = vmatpush1.bf16.msra.mxu0 %v4557
    %4766 = vmatprep.subr.bf16.mxu0 %v4562
    %4767 = vmatpush1.bf16.msra.mxu0 %v4561
    %4768 = vmatprep.subr.bf16.mxu0 %v4566
    %4769 = vmatpush1.bf16.msra.mxu0 %v4565
    %4770 = vmatprep.mubr.bf16.mxu0 %v3928
    %4771 = vmatmul.mubr.bf16.gmra.mrb[0].mxu0 %v3927
    %v4772 = vpop.f32.mrb[0].mxu0
    %v4773 = vadd.f32 %v4732, %v4772
    %v4774 = vpop.f32.mrb[0].mxu0
    %v4775 = vadd.f32 %v4734, %v4774
    %v4776 = vpop.f32.mrb[0].mxu0
    %v4777 = vpop.f32.mrb[0].mxu0
    %4778 = vdwg.mxu0
    %4779 = vmatprep.subr.bf16.mxu0 %v4444
    %4780 = vmatpush1.bf16.msra.mxu0 %v4443
    %4781 = vmatprep.subr.bf16.mxu0 %v4448
    %4782 = vmatpush1.bf16.msra.mxu0 %v4447
    %4783 = vmatprep.subr.bf16.mxu0 %v4452
    %4784 = vmatpush1.bf16.msra.mxu0 %v4451
    %4785 = vmatprep.subr.bf16.mxu0 %v4456
    %4786 = vmatpush1.bf16.msra.mxu0 %v4455
    %4787 = vmatprep.subr.bf16.mxu0 %v4460
    %4788 = vmatpush1.bf16.msra.mxu0 %v4459
    %4789 = vmatprep.subr.bf16.mxu0 %v4464
    %4790 = vmatpush1.bf16.msra.mxu0 %v4463
    %4791 = vmatprep.subr.bf16.mxu0 %v4468
    %4792 = vmatpush1.bf16.msra.mxu0 %v4467
    %4793 = vmatprep.subr.bf16.mxu0 %v4472
    %4794 = vmatpush1.bf16.msra.mxu0 %v4471
    %4795 = vmatprep.subr.bf16.mxu0 %v4476
    %4796 = vmatpush1.bf16.msra.mxu0 %v4475
    %4797 = vmatprep.subr.bf16.mxu0 %v4480
    %4798 = vmatpush1.bf16.msra.mxu0 %v4479
    %4799 = vmatprep.subr.bf16.mxu0 %v4484
    %4800 = vmatpush1.bf16.msra.mxu0 %v4483
    %4801 = vmatprep.subr.bf16.mxu0 %v4488
    %4802 = vmatpush1.bf16.msra.mxu0 %v4487
    %4803 = vmatprep.subr.bf16.mxu0 %v4492
    %4804 = vmatpush1.bf16.msra.mxu0 %v4491
    %4805 = vmatprep.subr.bf16.mxu0 %v4496
    %4806 = vmatpush1.bf16.msra.mxu0 %v4495
    %4807 = vmatprep.subr.bf16.mxu0 %v4500
    %4808 = vmatpush1.bf16.msra.mxu0 %v4499
    %4809 = vmatprep.subr.bf16.mxu0 %v4504
    %4810 = vmatpush1.bf16.msra.mxu0 %v4503
    %4811 = vmatprep.mubr.bf16.mxu0 %v3926
    %4812 = vmatmul.mubr.bf16.gmra.mrb[0].mxu0 %v3925
    %v4813 = vpop.f32.mrb[0].mxu0
    %v4814 = vadd.f32 %v1017, %v4813
    %v4815 = vpop.f32.mrb[0].mxu0
    %v4816 = vadd.f32 %v1019, %v4815
    %v4817 = vpop.f32.mrb[0].mxu0
    %v4818 = vpop.f32.mrb[0].mxu0
    %4819 = vdwg.mxu0
    %4820 = vmatprep.subr.bf16.mxu0 %v4508
    %4821 = vmatpush1.bf16.msra.mxu0 %v4507
    %4822 = vmatprep.subr.bf16.mxu0 %v4512
    %4823 = vmatpush1.bf16.msra.mxu0 %v4511
    %4824 = vmatprep.subr.bf16.mxu0 %v4516
    %4825 = vmatpush1.bf16.msra.mxu0 %v4515
    %4826 = vmatprep.subr.bf16.mxu0 %v4520
    %4827 = vmatpush1.bf16.msra.mxu0 %v4519
    %4828 = vmatprep.subr.bf16.mxu0 %v4524
    %4829 = vmatpush1.bf16.msra.mxu0 %v4523
    %4830 = vmatprep.subr.bf16.mxu0 %v4528
    %4831 = vmatpush1.bf16.msra.mxu0 %v4527
    %4832 = vmatprep.subr.bf16.mxu0 %v4532
    %4833 = vmatpush1.bf16.msra.mxu0 %v4531
    %4834 = vmatprep.subr.bf16.mxu0 %v4536
    %4835 = vmatpush1.bf16.msra.mxu0 %v4535
    %4836 = vmatprep.subr.bf16.mxu0 %v4540
    %4837 = vmatpush1.bf16.msra.mxu0 %v4539
    %4838 = vmatprep.subr.bf16.mxu0 %v4544
    %4839 = vmatpush1.bf16.msra.mxu0 %v4543
    %4840 = vmatprep.subr.bf16.mxu0 %v4548
    %4841 = vmatpush1.bf16.msra.mxu0 %v4547
    %4842 = vmatprep.subr.bf16.mxu0 %v4552
    %4843 = vmatpush1.bf16.msra.mxu0 %v4551
    %4844 = vmatprep.subr.bf16.mxu0 %v4556
    %4845 = vmatpush1.bf16.msra.mxu0 %v4555
    %4846 = vmatprep.subr.bf16.mxu0 %v4560
    %4847 = vmatpush1.bf16.msra.mxu0 %v4559
    %4848 = vmatprep.subr.bf16.mxu0 %v4564
    %4849 = vmatpush1.bf16.msra.mxu0 %v4563
    %4850 = vmatprep.subr.bf16.mxu0 %v4568
    %4851 = vmatpush1.bf16.msra.mxu0 %v4567
    %4852 = vmatprep.mubr.bf16.mxu0 %v3928
    %4853 = vmatmul.mubr.bf16.gmra.mrb[0].mxu0 %v3927
    %v4854 = vpop.f32.mrb[0].mxu0
    %v4855 = vadd.f32 %v4814, %v4854
    %v4856 = vpop.f32.mrb[0].mxu0
    %v4857 = vadd.f32 %v4816, %v4856
    %v4858 = vpop.f32.mrb[0].mxu0
    %v4859 = vpop.f32.mrb[0].mxu0
    %4860 = vdwg.mxu0
    %v4861 = vmul.f32 %v4773, %v4773
    %v4862 = vmul.f32 %v4775, %v4775
    %v4863 = vmul.f32 %v4855, %v4855
    %v4864 = vmul.f32 %v4857, %v4857
    %v4865 = vadd.f32 %v4861, %v4863
    %v4866 = vadd.f32 %v4862, %v4864
    %4867 = vst [vmem:[%s5] sm:$0xff] %v4865
    %4868 = vst [vmem:[%s5 + $0x8] sm:$0xff] %v4866
    // Predicated region
    $region34: #{diffractive_rnn_forward.1} parent=1 // pred_check
      _
    $region35: #{diffractive_rnn_forward.1} parent=1 // pred_check_branch
      %4870 = sbr.rel (0) target = $region37
    $region36: #{diffractive_rnn_forward.1} parent=1 // pred_region
      _
    $region37: #{diffractive_rnn_forward.1} parent=1 // pred_fallthru
      _
    // Predicated region
    $region38: #{diffractive_rnn_forward.1} parent=1 // pred_check
      _
    $region39: #{diffractive_rnn_forward.1} parent=1 // pred_check_branch
      %4872 = sbr.rel (0) target = $region41
    $region40: #{diffractive_rnn_forward.1} parent=1 // pred_region
      _
    $region41: #{diffractive_rnn_forward.1} parent=1 // pred_fallthru
      _
    %4873 = vsyncpa [#allocation3], 1
    %4874 = vsyncpa [#allocation5], 1

</llo_original>
